<compile_context>
chip_gen: v6e
topology: v6e:2x2x1
jax: 0.10.0
libtpu: 0.0.40
codegen_flags: <defaults>
</compile_context>

<pallas_src>
import functools

import jax
import jax.numpy as jnp
from jax.experimental import pallas as pl
from jax.experimental.pallas import tpu as pltpu

EPS = 1e-5                       # nn.BatchNorm2d default eps
LANE = 128                       # lane-dense channel padding
VMEM_LIMIT = 64 * 1024 * 1024    # explicit scoped-VMEM budget (tiles here need far less; <= v7x physical)


# ---------------------------------------------------------------------------
# Pallas kernels
# ---------------------------------------------------------------------------
def _mm_stats_kernel(x_ref, w_ref, s_ref, b_ref, y_ref, st_ref, *, pre_act):
    """y = act(x) @ w and per-tile column (sum, sum_of_squares) partials.

    act(x) = relu(x * scale + bias)  (folded BN of the previous layer) when
    pre_act=True, identity otherwise.  bf16 MXU matmul, f32 accumulation.
    """
    x = x_ref[...]
    if pre_act:
        x = jnp.maximum(x * s_ref[...] + b_ref[...], 0.0)
    y = jnp.dot(x.astype(jnp.bfloat16), w_ref[...].astype(jnp.bfloat16),
                preferred_element_type=jnp.float32)
    y_ref[...] = y
    ps = jnp.sum(y, axis=0, keepdims=True)
    pq = jnp.sum(y * y, axis=0, keepdims=True)
    st_ref[...] = jnp.concatenate([ps, pq], axis=0).reshape(st_ref.shape)


def _conv3x3_stats_kernel(ya_ref, yb_ref, ma_ref, mb_ref, mo_ref, w_ref,
                          s_ref, b_ref, y_ref, st_ref, *, tm, cin, offsets):
    """3x3 conv over flattened padded rows as 9 shifted accumulating matmuls.

    Inputs are raw (pre-BN) conv1 rows, spatially zero-padded and flattened;
    folded BN1 + ReLU + a row-validity mask are applied in-kernel, so h1 never
    round-trips through HBM.  The halo needed by the shifted slices comes from
    streaming block i and block i+1 of the same array.  Per-tile BN2 stat
    partials are accumulated with an output-validity mask.
    """
    y = jnp.concatenate([ya_ref[...], yb_ref[...]], axis=0)      # [2*tm, cin]
    m = jnp.concatenate([ma_ref[...], mb_ref[...]], axis=0)      # [2*tm, 1]
    h = jnp.maximum(y * s_ref[...] + b_ref[...], 0.0) * m        # h1 rows (masked)
    acc = jnp.zeros((tm, w_ref.shape[1]), jnp.float32)
    for t, off in enumerate(offsets):                            # 9 static taps
        lhs = h[off:off + tm, :].astype(jnp.bfloat16)
        rhs = w_ref[t * cin:(t + 1) * cin, :].astype(jnp.bfloat16)
        acc = acc + jnp.dot(lhs, rhs, preferred_element_type=jnp.float32)
    y_ref[...] = acc
    mo = mo_ref[...]                                             # [tm, 1] valid-output mask
    ps = jnp.sum(acc * mo, axis=0, keepdims=True)
    pq = jnp.sum(acc * acc * mo, axis=0, keepdims=True)
    st_ref[...] = jnp.concatenate([ps, pq], axis=0).reshape(st_ref.shape)


def _bn_add_relu_kernel(y_ref, id_ref, s_ref, b_ref, o_ref):
    """out = relu(y * scale3 + bias3 + identity)."""
    o_ref[...] = jnp.maximum(y_ref[...] * s_ref[...] + b_ref[...] + id_ref[...], 0.0)


# ---------------------------------------------------------------------------
# pallas_call wrappers
# ---------------------------------------------------------------------------
def _compiler_params():
    return pltpu.CompilerParams(dimension_semantics=("parallel",),
                                vmem_limit_bytes=VMEM_LIMIT)


def _pick_tm(m):
    # Prefer large tiles but at least 2 grid steps (exercises pipelining).
    for t in (1024, 512, 256, 128, 64, 32, 16, 8):
        if m % t == 0 and m // t >= 2:
            return t
    for t in (1024, 512, 256, 128, 64, 32, 16, 8):
        if m % t == 0:
            return t
    return m  # TODO(synk): mask ragged row tails instead of a single big block.


def matmul_stats(x, w, scale_in, bias_in, *, pre_act):
    m, k = x.shape
    c = w.shape[1]
    tm = _pick_tm(m)
    g = m // tm
    kern = functools.partial(_mm_stats_kernel, pre_act=pre_act)
    return pl.pallas_call(
        kern,
        grid=(g,),
        in_specs=[
            pl.BlockSpec((tm, k), lambda i: (i, 0)),
            pl.BlockSpec((k, c), lambda i: (0, 0)),
            pl.BlockSpec((1, k), lambda i: (0, 0)),
            pl.BlockSpec((1, k), lambda i: (0, 0)),
        ],
        out_specs=[
            pl.BlockSpec((tm, c), lambda i: (i, 0)),
            pl.BlockSpec((1, 2, c), lambda i: (i, 0, 0)),
        ],
        out_shape=[
            jax.ShapeDtypeStruct((m, c), jnp.float32),
            jax.ShapeDtypeStruct((g, 2, c), jnp.float32),
        ],
        compiler_params=_compiler_params(),
    )(x, w, scale_in, bias_in)


def conv3x3_stats(y_rows, mask_in, mask_out, w2_flat, scale1, bias1, *, tm, offsets):
    rows_out = mask_out.shape[0]
    g = rows_out // tm
    cin = y_rows.shape[1]
    cout = w2_flat.shape[1]
    kern = functools.partial(_conv3x3_stats_kernel, tm=tm, cin=cin,
                             offsets=tuple(offsets))
    return pl.pallas_call(
        kern,
        grid=(g,),
        in_specs=[
            pl.BlockSpec((tm, cin), lambda i: (i, 0)),       # rows [i*tm, (i+1)*tm)
            pl.BlockSpec((tm, cin), lambda i: (i + 1, 0)),   # halo: next block
            pl.BlockSpec((tm, 1), lambda i: (i, 0)),
            pl.BlockSpec((tm, 1), lambda i: (i + 1, 0)),
            pl.BlockSpec((tm, 1), lambda i: (i, 0)),
            pl.BlockSpec((9 * cin, cout), lambda i: (0, 0)),
            pl.BlockSpec((1, cin), lambda i: (0, 0)),
            pl.BlockSpec((1, cin), lambda i: (0, 0)),
        ],
        out_specs=[
            pl.BlockSpec((tm, cout), lambda i: (i, 0)),
            pl.BlockSpec((1, 2, cout), lambda i: (i, 0, 0)),
        ],
        out_shape=[
            jax.ShapeDtypeStruct((rows_out, cout), jnp.float32),
            jax.ShapeDtypeStruct((g, 2, cout), jnp.float32),
        ],
        compiler_params=_compiler_params(),
    )(y_rows, y_rows, mask_in, mask_in, mask_out, w2_flat, scale1, bias1)


def bn_add_relu(y, identity, scale, bias):
    m, c = y.shape
    tm = _pick_tm(m)
    g = m // tm
    return pl.pallas_call(
        _bn_add_relu_kernel,
        grid=(g,),
        in_specs=[
            pl.BlockSpec((tm, c), lambda i: (i, 0)),
            pl.BlockSpec((tm, c), lambda i: (i, 0)),
            pl.BlockSpec((1, c), lambda i: (0, 0)),
            pl.BlockSpec((1, c), lambda i: (0, 0)),
        ],
        out_specs=pl.BlockSpec((tm, c), lambda i: (i, 0)),
        out_shape=jax.ShapeDtypeStruct((m, c), jnp.float32),
        compiler_params=_compiler_params(),
    )(y, identity, scale, bias)


# ---------------------------------------------------------------------------
# JAX glue: parameters, padding helpers, BN folding, full forward
# ---------------------------------------------------------------------------
def init_bottleneck_params(key, inplanes, planes, groups=1, width_per_group=64):
    """Deterministic synthetic parameters with the shapes implied by __init__."""
    inflate = groups * width_per_group // 64
    cmid = planes * inflate
    cout = planes * 4  # expansion = 4
    k1, k2, k3 = jax.random.split(key, 3)
    return {
        # PyTorch conv weight layout: [out_c, in_c, kh, kw], bias=False
        "w1": 0.1 * jax.random.normal(k1, (cmid, inplanes, 1, 1), jnp.float32),
        "w2": 0.1 * jax.random.normal(k2, (cmid, cmid // groups, 3, 3), jnp.float32),
        "w3": 0.1 * jax.random.normal(k3, (cout, cmid, 1, 1), jnp.float32),
        # BatchNorm2d default init: weight=1, bias=0
        "g1": jnp.ones((cmid,), jnp.float32), "b1": jnp.zeros((cmid,), jnp.float32),
        "g2": jnp.ones((cmid,), jnp.float32), "b2": jnp.zeros((cmid,), jnp.float32),
        "g3": jnp.ones((cout,), jnp.float32), "b3": jnp.zeros((cout,), jnp.float32),
    }


def _round_up(x, m):
    return ((x + m - 1) // m) * m


def _pad_axis(a, axis, size):
    pads = [(0, 0)] * a.ndim
    pads[axis] = (0, size - a.shape[axis])
    return jnp.pad(a, pads)


def _pad2(a, rows, cols):
    return jnp.pad(a, ((0, rows - a.shape[0]), (0, cols - a.shape[1])))


def _fold_bn(stats, count, gamma_p, beta_p):
    """Fold batch stats + affine into a single per-channel (scale, bias)."""
    s = jnp.sum(stats[:, 0, :], axis=0)
    ss = jnp.sum(stats[:, 1, :], axis=0)
    mean = s / count
    var = jnp.maximum(ss / count - mean * mean, 0.0)   # biased batch var (train mode)
    scale = gamma_p * jax.lax.rsqrt(var + EPS)
    bias = beta_p - mean * scale
    return scale.reshape(1, -1), bias.reshape(1, -1)


def bottleneck_forward(x_nchw, params, stride=1, dilation=1, groups=1):
    # TODO(synk): grouped 3x3 conv (groups>1) and the optional downsample branch are
    #             not implemented (module defaults: groups=1, downsample=None).
    assert groups == 1
    n, cin, h, w = x_nchw.shape
    cmid = params["w1"].shape[0]
    cout = params["w3"].shape[0]
    d, s = dilation, stride
    assert s == 1 and cin == cout, \
        "identity residual requires stride==1 and inplanes==planes*expansion (downsample=None)"

    cin_p = _round_up(cin, LANE)
    cmid_p = _round_up(cmid, LANE)
    cout_p = _round_up(cout, LANE)

    # ---- layout: NCHW -> NHWC -> rows = N*H*W, channels zero-padded to 128 ----
    x_nhwc = jnp.transpose(x_nchw, (0, 2, 3, 1)).astype(jnp.float32)
    m1 = n * h * w
    x_flat = _pad_axis(x_nhwc.reshape(m1, cin), 1, cin_p)

    # ---- padded weights / BN params (zero padding keeps padded channels at 0) ----
    w1_p = _pad2(params["w1"][:, :, 0, 0].T, cin_p, cmid_p)          # [cin_p,  cmid_p]
    w3_p = _pad2(params["w3"][:, :, 0, 0].T, cmid_p, cout_p)         # [cmid_p, cout_p]
    w2_taps = [_pad2(params["w2"][:, :, kh, kw].T, cmid_p, cmid_p)
               for kh in range(3) for kw in range(3)]
    w2_p = jnp.concatenate(w2_taps, axis=0)                          # [9*cmid_p, cmid_p]
    g1 = _pad_axis(params["g1"], 0, cmid_p); b1 = _pad_axis(params["b1"], 0, cmid_p)
    g2 = _pad_axis(params["g2"], 0, cmid_p); b2 = _pad_axis(params["b2"], 0, cmid_p)
    g3 = _pad_axis(params["g3"], 0, cout_p); b3 = _pad_axis(params["b3"], 0, cout_p)

    ones_in = jnp.ones((1, cin_p), jnp.float32)
    zeros_in = jnp.zeros((1, cin_p), jnp.float32)

    # ---- conv1 (1x1) + BN1 partial stats (Pallas, M-tiled) ----
    y1, st1 = matmul_stats(x_flat, w1_p, ones_in, zeros_in, pre_act=False)
    scale1, bias1 = _fold_bn(st1, m1, g1, b1)

    # ---- conv2 (3x3, pad=d, dilation=d) as 9 shifted matmuls over flattened rows ----
    hp, wp = h + 2 * d, w + 2 * d
    n_padded_rows = n * hp * wp
    max_off = 2 * d * wp + 2 * d
    tm2 = 256
    while tm2 < max_off:
        tm2 *= 2
    g2n = -(-n_padded_rows // tm2)          # ceil
    rows_out = g2n * tm2
    rows_in = rows_out + tm2                # block i+1 must exist for the halo

    # spatially zero-pad the *pre-BN* conv1 output; BN1+ReLU applied in-kernel
    y1_pad = jnp.pad(y1.reshape(n, h, w, cmid_p), ((0, 0), (d, d), (d, d), (0, 0)))
    y1_rows = _pad_axis(y1_pad.reshape(n_padded_rows, cmid_p), 0, rows_in)

    r = jnp.arange(rows_in)
    a_i = (r % (hp * wp)) // wp
    b_i = r % wp
    mask_in = ((r < n_padded_rows) & (a_i >= d) & (a_i < d + h)
               & (b_i >= d) & (b_i < d + w)).astype(jnp.float32).reshape(-1, 1)

    q = jnp.arange(rows_out)
    a_o = (q % (hp * wp)) // wp
    b_o = q % wp
    mask_out = ((q < n_padded_rows) & (a_o < h) & (b_o < w)
                & (a_o % s == 0) & (b_o % s == 0)).astype(jnp.float32).reshape(-1, 1)

    offsets = [kh * d * wp + kw * d for kh in range(3) for kw in range(3)]
    y2_raw, st2 = conv3x3_stats(y1_rows, mask_in, mask_out, w2_p, scale1, bias1,
                                tm=tm2, offsets=offsets)

    ho = (h - 1) // s + 1
    wo = (w - 1) // s + 1
    m2 = n * ho * wo
    # keep only the valid (and stride-subsampled) output positions
    # TODO(synk): for stride>1 the dense stride-1 conv is computed then subsampled.
    y2 = (y2_raw[:n_padded_rows].reshape(n, hp, wp, cmid_p)[:, :h:s, :w:s, :]
          .reshape(m2, cmid_p))
    scale2, bias2 = _fold_bn(st2, m2, g2, b2)

    # ---- conv3 (1x1) with in-kernel BN2+ReLU, plus BN3 partial stats ----
    y3, st3 = matmul_stats(y2, w3_p, scale2, bias2, pre_act=True)
    scale3, bias3 = _fold_bn(st3, m2, g3, b3)

    # ---- BN3 + residual add + ReLU (Pallas, M-tiled) ----
    identity = _pad_axis(x_nhwc.reshape(m1, cin), 1, cout_p)
    out = bn_add_relu(y3, identity, scale3, bias3)

    out = out[:, :cout].reshape(n, ho, wo, cout)
    return jnp.transpose(out, (0, 3, 1, 2))                     # back to NCHW


# ---------------------------------------------------------------------------
# Pure-JAX reference (lax.conv path, bf16 matmul inputs to mirror the kernels)
# ---------------------------------------------------------------------------
def _ref_forward(x_nchw, params, stride=1, dilation=1):
    x = jnp.transpose(x_nchw, (0, 2, 3, 1)).astype(jnp.float32)
    dn = ("NHWC", "HWIO", "NHWC")

    def conv(hh, ww, strides, padding, rhs_dil=(1, 1)):
        return jax.lax.conv_general_dilated(
            hh.astype(jnp.bfloat16), ww.astype(jnp.bfloat16), strides, padding,
            rhs_dilation=rhs_dil, dimension_numbers=dn,
            preferred_element_type=jnp.float32)

    def bn(y, g, b):
        mean = jnp.mean(y, axis=(0, 1, 2), keepdims=True)
        var = jnp.var(y, axis=(0, 1, 2), keepdims=True)
        return (y - mean) * jax.lax.rsqrt(var + EPS) * g.reshape(1, 1, 1, -1) \
            + b.reshape(1, 1, 1, -1)

    w1 = jnp.transpose(params["w1"], (2, 3, 1, 0))
    w2 = jnp.transpose(params["w2"], (2, 3, 1, 0))
    w3 = jnp.transpose(params["w3"], (2, 3, 1, 0))
    y = conv(x, w1, (1, 1), "VALID")
    y = jax.nn.relu(bn(y, params["g1"], params["b1"]))
    y = conv(y, w2, (stride, stride), [(dilation, dilation)] * 2, (dilation, dilation))
    y = jax.nn.relu(bn(y, params["g2"], params["b2"]))
    y = conv(y, w3, (1, 1), "VALID")
    y = jax.nn.relu(bn(y, params["g3"], params["b3"]) + x)
    return jnp.transpose(y, (0, 3, 1, 2))


if __name__ == "__main__":
    key = jax.random.PRNGKey(0)
    # inplanes == planes * expansion so the identity residual add is valid (downsample=None).
    inplanes, planes = 32, 8
    n, h, w = 2, 16, 16
    kx, kp = jax.random.split(key)
    x = jax.random.normal(kx, (n, inplanes, h, w), dtype=jnp.float32)
    params = init_bottleneck_params(kp, inplanes, planes)

    fwd = jax.jit(bottleneck_forward, static_argnames=("stride", "dilation", "groups"))
    out = jax.block_until_ready(fwd(x, params, stride=1, dilation=1))
    assert out.shape == (n, planes * 4, h, w), out.shape

    ref = jax.block_until_ready(_ref_forward(x, params, stride=1, dilation=1))
    err = float(jnp.max(jnp.abs(out - ref)))
    if err > 2e-2:
        raise AssertionError(f"mismatch vs reference: max abs err {err}")
    print("KERNEL_OK")
</pallas_src>

<mosaic_0001>
module attributes {stable_mosaic.version = 11 : i64} {
  func.func @_mm_stats_kernel(%arg0: i32, %arg1: memref<256x128xf32, #tpu.memory_space<vmem>>, %arg2: memref<128x128xf32, #tpu.memory_space<vmem>>, %arg3: memref<1x128xf32, #tpu.memory_space<vmem>>, %arg4: memref<1x128xf32, #tpu.memory_space<vmem>>, %arg5: memref<256x128xf32, #tpu.memory_space<vmem>>, %arg6: memref<1x2x128xf32, #tpu.memory_space<vmem>>) attributes {dimension_semantics = [#tpu.dimension_semantics<parallel>], iteration_bounds = array<i64: 2>, scalar_prefetch = 0 : i64, scratch_operands = 0 : i64, tpu.core_type = #tpu.core_type<tc>, window_params = [{transform_indices = @transform_0, window_bounds = array<i64: 256, 128>}, {pipeline_mode = #tpu.pipeline_mode<synchronous>, transform_indices = @transform_1, window_bounds = array<i64: 128, 128>}, {pipeline_mode = #tpu.pipeline_mode<synchronous>, transform_indices = @transform_2, window_bounds = array<i64: 1, 128>}, {pipeline_mode = #tpu.pipeline_mode<synchronous>, transform_indices = @transform_3, window_bounds = array<i64: 1, 128>}, {transform_indices = @transform_4, window_bounds = array<i64: 256, 128>}, {transform_indices = @transform_5, window_bounds = array<i64: 1, 2, 128>}]} {
    %c0 = arith.constant 0 : index
    %c0_0 = arith.constant 0 : index
    %0 = vector.load %arg1[%c0, %c0_0] : memref<256x128xf32, #tpu.memory_space<vmem>>, vector<256x128xf32>
    %1 = arith.truncf %0 : vector<256x128xf32> to vector<256x128xbf16>
    %c0_1 = arith.constant 0 : index
    %c0_2 = arith.constant 0 : index
    %2 = vector.load %arg2[%c0_1, %c0_2] : memref<128x128xf32, #tpu.memory_space<vmem>>, vector<128x128xf32>
    %3 = arith.truncf %2 : vector<128x128xf32> to vector<128x128xbf16>
    %cst = arith.constant dense<0.000000e+00> : vector<256x128xf32>
    %4 = tpu.matmul %1, %3, %cst {dimension_numbers = #tpu.dot_dimension_numbers<[1], [0], [0], [1], [0, 0, 1, 1], [], []>} : vector<256x128xbf16>, vector<128x128xbf16>, vector<256x128xf32> -> vector<256x128xf32>
    %c0_3 = arith.constant 0 : index
    %c0_4 = arith.constant 0 : index
    %5 = vector.load %arg5[%c0_3, %c0_4] : memref<256x128xf32, #tpu.memory_space<vmem>>, vector<256x128xf32>
    tpu.vector_store %arg5[%c0_3, %c0_4], %4 {strides = array<i32>} : memref<256x128xf32, #tpu.memory_space<vmem>>, vector<256x128xf32>,
    %cst_5 = arith.constant dense<0.000000e+00> : vector<128xf32>
    %6 = vector.multi_reduction <add>, %4, %cst_5 [0] : vector<256x128xf32> to vector<128xf32>
    %7 = vector.shape_cast %6 : vector<128xf32> to vector<1x128xf32>
    %8 = arith.mulf %4, %4 : vector<256x128xf32>
    %cst_6 = arith.constant dense<0.000000e+00> : vector<128xf32>
    %9 = vector.multi_reduction <add>, %8, %cst_6 [0] : vector<256x128xf32> to vector<128xf32>
    %10 = vector.shape_cast %9 : vector<128xf32> to vector<1x128xf32>
    %11 = tpu.concatenate %7, %10 in 0 : vector<1x128xf32>, vector<1x128xf32> -> vector<2x128xf32>
    %12 = vector.shape_cast %11 : vector<2x128xf32> to vector<1x2x128xf32>
    %c0_7 = arith.constant 0 : index
    %c0_8 = arith.constant 0 : index
    %c0_9 = arith.constant 0 : index
    %13 = vector.load %arg6[%c0_7, %c0_8, %c0_9] : memref<1x2x128xf32, #tpu.memory_space<vmem>>, vector<1x2x128xf32>
    tpu.vector_store %arg6[%c0_7, %c0_8, %c0_9], %12 {strides = array<i32>} : memref<1x2x128xf32, #tpu.memory_space<vmem>>, vector<1x2x128xf32>,
    return
  }
  func.func @transform_0(%arg0: i32) -> (i32, i32) {
    %c0_i32 = arith.constant 0 : i32
    %c0_i32_0 = arith.constant 0 : i32
    return %arg0, %c0_i32 : i32, i32
  }
  func.func @transform_1(%arg0: i32) -> (i32, i32) {
    %c0_i32 = arith.constant 0 : i32
    %c0_i32_0 = arith.constant 0 : i32
    %c0_i32_1 = arith.constant 0 : i32
    return %c0_i32, %c0_i32_0 : i32, i32
  }
  func.func @transform_2(%arg0: i32) -> (i32, i32) {
    %c0_i32 = arith.constant 0 : i32
    %c0_i32_0 = arith.constant 0 : i32
    %c0_i32_1 = arith.constant 0 : i32
    return %c0_i32, %c0_i32_0 : i32, i32
  }
  func.func @transform_3(%arg0: i32) -> (i32, i32) {
    %c0_i32 = arith.constant 0 : i32
    %c0_i32_0 = arith.constant 0 : i32
    %c0_i32_1 = arith.constant 0 : i32
    return %c0_i32, %c0_i32_0 : i32, i32
  }
  func.func @transform_4(%arg0: i32) -> (i32, i32) {
    %c0_i32 = arith.constant 0 : i32
    %c0_i32_0 = arith.constant 0 : i32
    return %arg0, %c0_i32 : i32, i32
  }
  func.func @transform_5(%arg0: i32) -> (i32, i32, i32) {
    %c0_i32 = arith.constant 0 : i32
    %c0_i32_0 = arith.constant 0 : i32
    %c0_i32_1 = arith.constant 0 : i32
    return %arg0, %c0_i32, %c0_i32_0 : i32, i32, i32
  }
}

module attributes {stable_mosaic.version = 11 : i64} {
  func.func @_conv3x3_stats_kernel(%arg0: i32, %arg1: memref<256x128xf32, #tpu.memory_space<vmem>>, %arg2: memref<256x128xf32, #tpu.memory_space<vmem>>, %arg3: memref<256x1xf32, #tpu.memory_space<vmem>>, %arg4: memref<256x1xf32, #tpu.memory_space<vmem>>, %arg5: memref<256x1xf32, #tpu.memory_space<vmem>>, %arg6: memref<1152x128xf32, #tpu.memory_space<vmem>>, %arg7: memref<1x128xf32, #tpu.memory_space<vmem>>, %arg8: memref<1x128xf32, #tpu.memory_space<vmem>>, %arg9: memref<256x128xf32, #tpu.memory_space<vmem>>, %arg10: memref<1x2x128xf32, #tpu.memory_space<vmem>>) attributes {dimension_semantics = [#tpu.dimension_semantics<parallel>], iteration_bounds = array<i64: 3>, scalar_prefetch = 0 : i64, scratch_operands = 0 : i64, tpu.core_type = #tpu.core_type<tc>, window_params = [{transform_indices = @transform_0, window_bounds = array<i64: 256, 128>}, {transform_indices = @transform_1, window_bounds = array<i64: 256, 128>}, {transform_indices = @transform_2, window_bounds = array<i64: 256, 1>}, {transform_indices = @transform_3, window_bounds = array<i64: 256, 1>}, {transform_indices = @transform_4, window_bounds = array<i64: 256, 1>}, {pipeline_mode = #tpu.pipeline_mode<synchronous>, transform_indices = @transform_5, window_bounds = array<i64: 1152, 128>}, {pipeline_mode = #tpu.pipeline_mode<synchronous>, transform_indices = @transform_6, window_bounds = array<i64: 1, 128>}, {pipeline_mode = #tpu.pipeline_mode<synchronous>, transform_indices = @transform_7, window_bounds = array<i64: 1, 128>}, {transform_indices = @transform_8, window_bounds = array<i64: 256, 128>}, {transform_indices = @transform_9, window_bounds = array<i64: 1, 2, 128>}]} {
    %c0 = arith.constant 0 : index
    %c0_0 = arith.constant 0 : index
    %0 = vector.load %arg1[%c0, %c0_0] : memref<256x128xf32, #tpu.memory_space<vmem>>, vector<256x128xf32>
    %c0_1 = arith.constant 0 : index
    %c0_2 = arith.constant 0 : index
    %1 = vector.load %arg2[%c0_1, %c0_2] : memref<256x128xf32, #tpu.memory_space<vmem>>, vector<256x128xf32>
    %2 = tpu.concatenate %0, %1 in 0 : vector<256x128xf32>, vector<256x128xf32> -> vector<512x128xf32>
    %c0_3 = arith.constant 0 : index
    %c0_4 = arith.constant 0 : index
    %3 = vector.load %arg3[%c0_3, %c0_4] : memref<256x1xf32, #tpu.memory_space<vmem>>, vector<256x1xf32>
    %c0_5 = arith.constant 0 : index
    %c0_6 = arith.constant 0 : index
    %4 = vector.load %arg4[%c0_5, %c0_6] : memref<256x1xf32, #tpu.memory_space<vmem>>, vector<256x1xf32>
    %5 = tpu.concatenate %3, %4 in 0 : vector<256x1xf32>, vector<256x1xf32> -> vector<512x1xf32>
    %c0_7 = arith.constant 0 : index
    %c0_8 = arith.constant 0 : index
    %6 = vector.load %arg7[%c0_7, %c0_8] : memref<1x128xf32, #tpu.memory_space<vmem>>, vector<1x128xf32>
    %7 = vector.broadcast %6 : vector<1x128xf32> to vector<512x128xf32>
    %8 = arith.mulf %2, %7 : vector<512x128xf32>
    %c0_9 = arith.constant 0 : index
    %c0_10 = arith.constant 0 : index
    %9 = vector.load %arg8[%c0_9, %c0_10] : memref<1x128xf32, #tpu.memory_space<vmem>>, vector<1x128xf32>
    %10 = vector.broadcast %9 : vector<1x128xf32> to vector<512x128xf32>
    %11 = arith.addf %8, %10 : vector<512x128xf32>
    %cst = arith.constant 0.000000e+00 : f32
    %12 = vector.broadcast %cst : f32 to vector<512x128xf32>
    %13 = arith.maximumf %11, %12 : vector<512x128xf32>
    %14 = vector.broadcast %5 : vector<512x1xf32> to vector<512x128xf32>
    %15 = arith.mulf %13, %14 : vector<512x128xf32>
    %cst_11 = arith.constant 0.000000e+00 : f32
    %16 = vector.broadcast %cst_11 : f32 to vector<256x128xf32>
    %17 = vector.extract_strided_slice %15 {offsets = [0, 0], sizes = [256, 128], strides = [1, 1]} : vector<512x128xf32> to vector<256x128xf32>
    %18 = arith.truncf %17 : vector<256x128xf32> to vector<256x128xbf16>
    %c0_12 = arith.constant 0 : index
    %c0_13 = arith.constant 0 : index
    %19 = vector.load %arg6[%c0_12, %c0_13] : memref<1152x128xf32, #tpu.memory_space<vmem>>, vector<128x128xf32>
    %20 = arith.truncf %19 : vector<128x128xf32> to vector<128x128xbf16>
    %cst_14 = arith.constant dense<0.000000e+00> : vector<256x128xf32>
    %21 = tpu.matmul %18, %20, %cst_14 {dimension_numbers = #tpu.dot_dimension_numbers<[1], [0], [0], [1], [0, 0, 1, 1], [], []>} : vector<256x128xbf16>, vector<128x128xbf16>, vector<256x128xf32> -> vector<256x128xf32>
    %22 = arith.addf %16, %21 : vector<256x128xf32>
    %23 = vector.extract_strided_slice %15 {offsets = [1, 0], sizes = [256, 128], strides = [1, 1]} : vector<512x128xf32> to vector<256x128xf32>
    %24 = arith.truncf %23 : vector<256x128xf32> to vector<256x128xbf16>
    %c128 = arith.constant 128 : index
    %c0_15 = arith.constant 0 : index
    %25 = vector.load %arg6[%c128, %c0_15] : memref<1152x128xf32, #tpu.memory_space<vmem>>, vector<128x128xf32>
    %26 = arith.truncf %25 : vector<128x128xf32> to vector<128x128xbf16>
    %cst_16 = arith.constant dense<0.000000e+00> : vector<256x128xf32>
    %27 = tpu.matmul %24, %26, %cst_16 {dimension_numbers = #tpu.dot_dimension_numbers<[1], [0], [0], [1], [0, 0, 1, 1], [], []>} : vector<256x128xbf16>, vector<128x128xbf16>, vector<256x128xf32> -> vector<256x128xf32>
    %28 = arith.addf %22, %27 : vector<256x128xf32>
    %29 = vector.extract_strided_slice %15 {offsets = [2, 0], sizes = [256, 128], strides = [1, 1]} : vector<512x128xf32> to vector<256x128xf32>
    %30 = arith.truncf %29 : vector<256x128xf32> to vector<256x128xbf16>
    %c256 = arith.constant 256 : index
    %c0_17 = arith.constant 0 : index
    %31 = vector.load %arg6[%c256, %c0_17] : memref<1152x128xf32, #tpu.memory_space<vmem>>, vector<128x128xf32>
    %32 = arith.truncf %31 : vector<128x128xf32> to vector<128x128xbf16>
    %cst_18 = arith.constant dense<0.000000e+00> : vector<256x128xf32>
    %33 = tpu.matmul %30, %32, %cst_18 {dimension_numbers = #tpu.dot_dimension_numbers<[1], [0], [0], [1], [0, 0, 1, 1], [], []>} : vector<256x128xbf16>, vector<128x128xbf16>, vector<256x128xf32> -> vector<256x128xf32>
    %34 = arith.addf %28, %33 : vector<256x128xf32>
    %35 = vector.extract_strided_slice %15 {offsets = [18, 0], sizes = [256, 128], strides = [1, 1]} : vector<512x128xf32> to vector<256x128xf32>
    %36 = arith.truncf %35 : vector<256x128xf32> to vector<256x128xbf16>
    %c384 = arith.constant 384 : index
    %c0_19 = arith.constant 0 : index
    %37 = vector.load %arg6[%c384, %c0_19] : memref<1152x128xf32, #tpu.memory_space<vmem>>, vector<128x128xf32>
    %38 = arith.truncf %37 : vector<128x128xf32> to vector<128x128xbf16>
    %cst_20 = arith.constant dense<0.000000e+00> : vector<256x128xf32>
    %39 = tpu.matmul %36, %38, %cst_20 {dimension_numbers = #tpu.dot_dimension_numbers<[1], [0], [0], [1], [0, 0, 1, 1], [], []>} : vector<256x128xbf16>, vector<128x128xbf16>, vector<256x128xf32> -> vector<256x128xf32>
    %40 = arith.addf %34, %39 : vector<256x128xf32>
    %41 = vector.extract_strided_slice %15 {offsets = [19, 0], sizes = [256, 128], strides = [1, 1]} : vector<512x128xf32> to vector<256x128xf32>
    %42 = arith.truncf %41 : vector<256x128xf32> to vector<256x128xbf16>
    %c512 = arith.constant 512 : index
    %c0_21 = arith.constant 0 : index
    %43 = vector.load %arg6[%c512, %c0_21] : memref<1152x128xf32, #tpu.memory_space<vmem>>, vector<128x128xf32>
    %44 = arith.truncf %43 : vector<128x128xf32> to vector<128x128xbf16>
    %cst_22 = arith.constant dense<0.000000e+00> : vector<256x128xf32>
    %45 = tpu.matmul %42, %44, %cst_22 {dimension_numbers = #tpu.dot_dimension_numbers<[1], [0], [0], [1], [0, 0, 1, 1], [], []>} : vector<256x128xbf16>, vector<128x128xbf16>, vector<256x128xf32> -> vector<256x128xf32>
    %46 = arith.addf %40, %45 : vector<256x128xf32>
    %47 = vector.extract_strided_slice %15 {offsets = [20, 0], sizes = [256, 128], strides = [1, 1]} : vector<512x128xf32> to vector<256x128xf32>
    %48 = arith.truncf %47 : vector<256x128xf32> to vector<256x128xbf16>
    %c640 = arith.constant 640 : index
    %c0_23 = arith.constant 0 : index
    %49 = vector.load %arg6[%c640, %c0_23] : memref<1152x128xf32, #tpu.memory_space<vmem>>, vector<128x128xf32>
    %50 = arith.truncf %49 : vector<128x128xf32> to vector<128x128xbf16>
    %cst_24 = arith.constant dense<0.000000e+00> : vector<256x128xf32>
    %51 = tpu.matmul %48, %50, %cst_24 {dimension_numbers = #tpu.dot_dimension_numbers<[1], [0], [0], [1], [0, 0, 1, 1], [], []>} : vector<256x128xbf16>, vector<128x128xbf16>, vector<256x128xf32> -> vector<256x128xf32>
    %52 = arith.addf %46, %51 : vector<256x128xf32>
    %53 = vector.extract_strided_slice %15 {offsets = [36, 0], sizes = [256, 128], strides = [1, 1]} : vector<512x128xf32> to vector<256x128xf32>
    %54 = arith.truncf %53 : vector<256x128xf32> to vector<256x128xbf16>
    %c768 = arith.constant 768 : index
    %c0_25 = arith.constant 0 : index
    %55 = vector.load %arg6[%c768, %c0_25] : memref<1152x128xf32, #tpu.memory_space<vmem>>, vector<128x128xf32>
    %56 = arith.truncf %55 : vector<128x128xf32> to vector<128x128xbf16>
    %cst_26 = arith.constant dense<0.000000e+00> : vector<256x128xf32>
    %57 = tpu.matmul %54, %56, %cst_26 {dimension_numbers = #tpu.dot_dimension_numbers<[1], [0], [0], [1], [0, 0, 1, 1], [], []>} : vector<256x128xbf16>, vector<128x128xbf16>, vector<256x128xf32> -> vector<256x128xf32>
    %58 = arith.addf %52, %57 : vector<256x128xf32>
    %59 = vector.extract_strided_slice %15 {offsets = [37, 0], sizes = [256, 128], strides = [1, 1]} : vector<512x128xf32> to vector<256x128xf32>
    %60 = arith.truncf %59 : vector<256x128xf32> to vector<256x128xbf16>
    %c896 = arith.constant 896 : index
    %c0_27 = arith.constant 0 : index
    %61 = vector.load %arg6[%c896, %c0_27] : memref<1152x128xf32, #tpu.memory_space<vmem>>, vector<128x128xf32>
    %62 = arith.truncf %61 : vector<128x128xf32> to vector<128x128xbf16>
    %cst_28 = arith.constant dense<0.000000e+00> : vector<256x128xf32>
    %63 = tpu.matmul %60, %62, %cst_28 {dimension_numbers = #tpu.dot_dimension_numbers<[1], [0], [0], [1], [0, 0, 1, 1], [], []>} : vector<256x128xbf16>, vector<128x128xbf16>, vector<256x128xf32> -> vector<256x128xf32>
    %64 = arith.addf %58, %63 : vector<256x128xf32>
    %65 = vector.extract_strided_slice %15 {offsets = [38, 0], sizes = [256, 128], strides = [1, 1]} : vector<512x128xf32> to vector<256x128xf32>
    %66 = arith.truncf %65 : vector<256x128xf32> to vector<256x128xbf16>
    %c1024 = arith.constant 1024 : index
    %c0_29 = arith.constant 0 : index
    %67 = vector.load %arg6[%c1024, %c0_29] : memref<1152x128xf32, #tpu.memory_space<vmem>>, vector<128x128xf32>
    %68 = arith.truncf %67 : vector<128x128xf32> to vector<128x128xbf16>
    %cst_30 = arith.constant dense<0.000000e+00> : vector<256x128xf32>
    %69 = tpu.matmul %66, %68, %cst_30 {dimension_numbers = #tpu.dot_dimension_numbers<[1], [0], [0], [1], [0, 0, 1, 1], [], []>} : vector<256x128xbf16>, vector<128x128xbf16>, vector<256x128xf32> -> vector<256x128xf32>
    %70 = arith.addf %64, %69 : vector<256x128xf32>
    %c0_31 = arith.constant 0 : index
    %c0_32 = arith.constant 0 : index
    %71 = vector.load %arg9[%c0_31, %c0_32] : memref<256x128xf32, #tpu.memory_space<vmem>>, vector<256x128xf32>
    tpu.vector_store %arg9[%c0_31, %c0_32], %70 {strides = array<i32>} : memref<256x128xf32, #tpu.memory_space<vmem>>, vector<256x128xf32>,
    %c0_33 = arith.constant 0 : index
    %c0_34 = arith.constant 0 : index
    %72 = vector.load %arg5[%c0_33, %c0_34] : memref<256x1xf32, #tpu.memory_space<vmem>>, vector<256x1xf32>
    %73 = vector.broadcast %72 : vector<256x1xf32> to vector<256x128xf32>
    %74 = arith.mulf %70, %73 : vector<256x128xf32>
    %cst_35 = arith.constant dense<0.000000e+00> : vector<128xf32>
    %75 = vector.multi_reduction <add>, %74, %cst_35 [0] : vector<256x128xf32> to vector<128xf32>
    %76 = vector.shape_cast %75 : vector<128xf32> to vector<1x128xf32>
    %77 = arith.mulf %70, %70 : vector<256x128xf32>
    %78 = vector.broadcast %72 : vector<256x1xf32> to vector<256x128xf32>
    %79 = arith.mulf %77, %78 : vector<256x128xf32>
    %cst_36 = arith.constant dense<0.000000e+00> : vector<128xf32>
    %80 = vector.multi_reduction <add>, %79, %cst_36 [0] : vector<256x128xf32> to vector<128xf32>
    %81 = vector.shape_cast %80 : vector<128xf32> to vector<1x128xf32>
    %82 = tpu.concatenate %76, %81 in 0 : vector<1x128xf32>, vector<1x128xf32> -> vector<2x128xf32>
    %83 = vector.shape_cast %82 : vector<2x128xf32> to vector<1x2x128xf32>
    %c0_37 = arith.constant 0 : index
    %c0_38 = arith.constant 0 : index
    %c0_39 = arith.constant 0 : index
    %84 = vector.load %arg10[%c0_37, %c0_38, %c0_39] : memref<1x2x128xf32, #tpu.memory_space<vmem>>, vector<1x2x128xf32>
    tpu.vector_store %arg10[%c0_37, %c0_38, %c0_39], %83 {strides = array<i32>} : memref<1x2x128xf32, #tpu.memory_space<vmem>>, vector<1x2x128xf32>,
    return
  }
  func.func @transform_0(%arg0: i32) -> (i32, i32) {
    %c0_i32 = arith.constant 0 : i32
    %c0_i32_0 = arith.constant 0 : i32
    return %arg0, %c0_i32 : i32, i32
  }
  func.func @transform_1(%arg0: i32) -> (i32, i32) {
    %c1_i32 = arith.constant 1 : i32
    %0 = arith.addi %arg0, %c1_i32 : i32
    %c0_i32 = arith.constant 0 : i32
    %c0_i32_0 = arith.constant 0 : i32
    return %0, %c0_i32 : i32, i32
  }
  func.func @transform_2(%arg0: i32) -> (i32, i32) {
    %c0_i32 = arith.constant 0 : i32
    %c0_i32_0 = arith.constant 0 : i32
    return %arg0, %c0_i32 : i32, i32
  }
  func.func @transform_3(%arg0: i32) -> (i32, i32) {
    %c1_i32 = arith.constant 1 : i32
    %0 = arith.addi %arg0, %c1_i32 : i32
    %c0_i32 = arith.constant 0 : i32
    %c0_i32_0 = arith.constant 0 : i32
    return %0, %c0_i32 : i32, i32
  }
  func.func @transform_4(%arg0: i32) -> (i32, i32) {
    %c0_i32 = arith.constant 0 : i32
    %c0_i32_0 = arith.constant 0 : i32
    return %arg0, %c0_i32 : i32, i32
  }
  func.func @transform_5(%arg0: i32) -> (i32, i32) {
    %c0_i32 = arith.constant 0 : i32
    %c0_i32_0 = arith.constant 0 : i32
    %c0_i32_1 = arith.constant 0 : i32
    return %c0_i32, %c0_i32_0 : i32, i32
  }
  func.func @transform_6(%arg0: i32) -> (i32, i32) {
    %c0_i32 = arith.constant 0 : i32
    %c0_i32_0 = arith.constant 0 : i32
    %c0_i32_1 = arith.constant 0 : i32
    return %c0_i32, %c0_i32_0 : i32, i32
  }
  func.func @transform_7(%arg0: i32) -> (i32, i32) {
    %c0_i32 = arith.constant 0 : i32
    %c0_i32_0 = arith.constant 0 : i32
    %c0_i32_1 = arith.constant 0 : i32
    return %c0_i32, %c0_i32_0 : i32, i32
  }
  func.func @transform_8(%arg0: i32) -> (i32, i32) {
    %c0_i32 = arith.constant 0 : i32
    %c0_i32_0 = arith.constant 0 : i32
    return %arg0, %c0_i32 : i32, i32
  }
  func.func @transform_9(%arg0: i32) -> (i32, i32, i32) {
    %c0_i32 = arith.constant 0 : i32
    %c0_i32_0 = arith.constant 0 : i32
    %c0_i32_1 = arith.constant 0 : i32
    return %arg0, %c0_i32, %c0_i32_0 : i32, i32, i32
  }
}

module attributes {stable_mosaic.version = 11 : i64} {
  func.func @_mm_stats_kernel(%arg0: i32, %arg1: memref<256x128xf32, #tpu.memory_space<vmem>>, %arg2: memref<128x128xf32, #tpu.memory_space<vmem>>, %arg3: memref<1x128xf32, #tpu.memory_space<vmem>>, %arg4: memref<1x128xf32, #tpu.memory_space<vmem>>, %arg5: memref<256x128xf32, #tpu.memory_space<vmem>>, %arg6: memref<1x2x128xf32, #tpu.memory_space<vmem>>) attributes {dimension_semantics = [#tpu.dimension_semantics<parallel>], iteration_bounds = array<i64: 2>, scalar_prefetch = 0 : i64, scratch_operands = 0 : i64, tpu.core_type = #tpu.core_type<tc>, window_params = [{transform_indices = @transform_0, window_bounds = array<i64: 256, 128>}, {pipeline_mode = #tpu.pipeline_mode<synchronous>, transform_indices = @transform_1, window_bounds = array<i64: 128, 128>}, {pipeline_mode = #tpu.pipeline_mode<synchronous>, transform_indices = @transform_2, window_bounds = array<i64: 1, 128>}, {pipeline_mode = #tpu.pipeline_mode<synchronous>, transform_indices = @transform_3, window_bounds = array<i64: 1, 128>}, {transform_indices = @transform_4, window_bounds = array<i64: 256, 128>}, {transform_indices = @transform_5, window_bounds = array<i64: 1, 2, 128>}]} {
    %c0 = arith.constant 0 : index
    %c0_0 = arith.constant 0 : index
    %0 = vector.load %arg1[%c0, %c0_0] : memref<256x128xf32, #tpu.memory_space<vmem>>, vector<256x128xf32>
    %c0_1 = arith.constant 0 : index
    %c0_2 = arith.constant 0 : index
    %1 = vector.load %arg3[%c0_1, %c0_2] : memref<1x128xf32, #tpu.memory_space<vmem>>, vector<1x128xf32>
    %2 = vector.broadcast %1 : vector<1x128xf32> to vector<256x128xf32>
    %3 = arith.mulf %0, %2 : vector<256x128xf32>
    %c0_3 = arith.constant 0 : index
    %c0_4 = arith.constant 0 : index
    %4 = vector.load %arg4[%c0_3, %c0_4] : memref<1x128xf32, #tpu.memory_space<vmem>>, vector<1x128xf32>
    %5 = vector.broadcast %4 : vector<1x128xf32> to vector<256x128xf32>
    %6 = arith.addf %3, %5 : vector<256x128xf32>
    %cst = arith.constant 0.000000e+00 : f32
    %7 = vector.broadcast %cst : f32 to vector<256x128xf32>
    %8 = arith.maximumf %6, %7 : vector<256x128xf32>
    %9 = arith.truncf %8 : vector<256x128xf32> to vector<256x128xbf16>
    %c0_5 = arith.constant 0 : index
    %c0_6 = arith.constant 0 : index
    %10 = vector.load %arg2[%c0_5, %c0_6] : memref<128x128xf32, #tpu.memory_space<vmem>>, vector<128x128xf32>
    %11 = arith.truncf %10 : vector<128x128xf32> to vector<128x128xbf16>
    %cst_7 = arith.constant dense<0.000000e+00> : vector<256x128xf32>
    %12 = tpu.matmul %9, %11, %cst_7 {dimension_numbers = #tpu.dot_dimension_numbers<[1], [0], [0], [1], [0, 0, 1, 1], [], []>} : vector<256x128xbf16>, vector<128x128xbf16>, vector<256x128xf32> -> vector<256x128xf32>
    %c0_8 = arith.constant 0 : index
    %c0_9 = arith.constant 0 : index
    %13 = vector.load %arg5[%c0_8, %c0_9] : memref<256x128xf32, #tpu.memory_space<vmem>>, vector<256x128xf32>
    tpu.vector_store %arg5[%c0_8, %c0_9], %12 {strides = array<i32>} : memref<256x128xf32, #tpu.memory_space<vmem>>, vector<256x128xf32>,
    %cst_10 = arith.constant dense<0.000000e+00> : vector<128xf32>
    %14 = vector.multi_reduction <add>, %12, %cst_10 [0] : vector<256x128xf32> to vector<128xf32>
    %15 = vector.shape_cast %14 : vector<128xf32> to vector<1x128xf32>
    %16 = arith.mulf %12, %12 : vector<256x128xf32>
    %cst_11 = arith.constant dense<0.000000e+00> : vector<128xf32>
    %17 = vector.multi_reduction <add>, %16, %cst_11 [0] : vector<256x128xf32> to vector<128xf32>
    %18 = vector.shape_cast %17 : vector<128xf32> to vector<1x128xf32>
    %19 = tpu.concatenate %15, %18 in 0 : vector<1x128xf32>, vector<1x128xf32> -> vector<2x128xf32>
    %20 = vector.shape_cast %19 : vector<2x128xf32> to vector<1x2x128xf32>
    %c0_12 = arith.constant 0 : index
    %c0_13 = arith.constant 0 : index
    %c0_14 = arith.constant 0 : index
    %21 = vector.load %arg6[%c0_12, %c0_13, %c0_14] : memref<1x2x128xf32, #tpu.memory_space<vmem>>, vector<1x2x128xf32>
    tpu.vector_store %arg6[%c0_12, %c0_13, %c0_14], %20 {strides = array<i32>} : memref<1x2x128xf32, #tpu.memory_space<vmem>>, vector<1x2x128xf32>,
    return
  }
  func.func @transform_0(%arg0: i32) -> (i32, i32) {
    %c0_i32 = arith.constant 0 : i32
    %c0_i32_0 = arith.constant 0 : i32
    return %arg0, %c0_i32 : i32, i32
  }
  func.func @transform_1(%arg0: i32) -> (i32, i32) {
    %c0_i32 = arith.constant 0 : i32
    %c0_i32_0 = arith.constant 0 : i32
    %c0_i32_1 = arith.constant 0 : i32
    return %c0_i32, %c0_i32_0 : i32, i32
  }
  func.func @transform_2(%arg0: i32) -> (i32, i32) {
    %c0_i32 = arith.constant 0 : i32
    %c0_i32_0 = arith.constant 0 : i32
    %c0_i32_1 = arith.constant 0 : i32
    return %c0_i32, %c0_i32_0 : i32, i32
  }
  func.func @transform_3(%arg0: i32) -> (i32, i32) {
    %c0_i32 = arith.constant 0 : i32
    %c0_i32_0 = arith.constant 0 : i32
    %c0_i32_1 = arith.constant 0 : i32
    return %c0_i32, %c0_i32_0 : i32, i32
  }
  func.func @transform_4(%arg0: i32) -> (i32, i32) {
    %c0_i32 = arith.constant 0 : i32
    %c0_i32_0 = arith.constant 0 : i32
    return %arg0, %c0_i32 : i32, i32
  }
  func.func @transform_5(%arg0: i32) -> (i32, i32, i32) {
    %c0_i32 = arith.constant 0 : i32
    %c0_i32_0 = arith.constant 0 : i32
    %c0_i32_1 = arith.constant 0 : i32
    return %arg0, %c0_i32, %c0_i32_0 : i32, i32, i32
  }
}

module attributes {stable_mosaic.version = 11 : i64} {
  func.func @_bn_add_relu_kernel(%arg0: i32, %arg1: memref<256x128xf32, #tpu.memory_space<vmem>>, %arg2: memref<256x128xf32, #tpu.memory_space<vmem>>, %arg3: memref<1x128xf32, #tpu.memory_space<vmem>>, %arg4: memref<1x128xf32, #tpu.memory_space<vmem>>, %arg5: memref<256x128xf32, #tpu.memory_space<vmem>>) attributes {dimension_semantics = [#tpu.dimension_semantics<parallel>], iteration_bounds = array<i64: 2>, scalar_prefetch = 0 : i64, scratch_operands = 0 : i64, tpu.core_type = #tpu.core_type<tc>, window_params = [{transform_indices = @transform_0, window_bounds = array<i64: 256, 128>}, {transform_indices = @transform_1, window_bounds = array<i64: 256, 128>}, {pipeline_mode = #tpu.pipeline_mode<synchronous>, transform_indices = @transform_2, window_bounds = array<i64: 1, 128>}, {pipeline_mode = #tpu.pipeline_mode<synchronous>, transform_indices = @transform_3, window_bounds = array<i64: 1, 128>}, {transform_indices = @transform_4, window_bounds = array<i64: 256, 128>}]} {
    %c0 = arith.constant 0 : index
    %c0_0 = arith.constant 0 : index
    %0 = vector.load %arg1[%c0, %c0_0] : memref<256x128xf32, #tpu.memory_space<vmem>>, vector<256x128xf32>
    %c0_1 = arith.constant 0 : index
    %c0_2 = arith.constant 0 : index
    %1 = vector.load %arg3[%c0_1, %c0_2] : memref<1x128xf32, #tpu.memory_space<vmem>>, vector<1x128xf32>
    %2 = vector.broadcast %1 : vector<1x128xf32> to vector<256x128xf32>
    %3 = arith.mulf %0, %2 : vector<256x128xf32>
    %c0_3 = arith.constant 0 : index
    %c0_4 = arith.constant 0 : index
    %4 = vector.load %arg4[%c0_3, %c0_4] : memref<1x128xf32, #tpu.memory_space<vmem>>, vector<1x128xf32>
    %5 = vector.broadcast %4 : vector<1x128xf32> to vector<256x128xf32>
    %6 = arith.addf %3, %5 : vector<256x128xf32>
    %c0_5 = arith.constant 0 : index
    %c0_6 = arith.constant 0 : index
    %7 = vector.load %arg2[%c0_5, %c0_6] : memref<256x128xf32, #tpu.memory_space<vmem>>, vector<256x128xf32>
    %8 = arith.addf %6, %7 : vector<256x128xf32>
    %cst = arith.constant 0.000000e+00 : f32
    %9 = vector.broadcast %cst : f32 to vector<256x128xf32>
    %10 = arith.maximumf %8, %9 : vector<256x128xf32>
    %c0_7 = arith.constant 0 : index
    %c0_8 = arith.constant 0 : index
    %11 = vector.load %arg5[%c0_7, %c0_8] : memref<256x128xf32, #tpu.memory_space<vmem>>, vector<256x128xf32>
    tpu.vector_store %arg5[%c0_7, %c0_8], %10 {strides = array<i32>} : memref<256x128xf32, #tpu.memory_space<vmem>>, vector<256x128xf32>,
    return
  }
  func.func @transform_0(%arg0: i32) -> (i32, i32) {
    %c0_i32 = arith.constant 0 : i32
    %c0_i32_0 = arith.constant 0 : i32
    return %arg0, %c0_i32 : i32, i32
  }
  func.func @transform_1(%arg0: i32) -> (i32, i32) {
    %c0_i32 = arith.constant 0 : i32
    %c0_i32_0 = arith.constant 0 : i32
    return %arg0, %c0_i32 : i32, i32
  }
  func.func @transform_2(%arg0: i32) -> (i32, i32) {
    %c0_i32 = arith.constant 0 : i32
    %c0_i32_0 = arith.constant 0 : i32
    %c0_i32_1 = arith.constant 0 : i32
    return %c0_i32, %c0_i32_0 : i32, i32
  }
  func.func @transform_3(%arg0: i32) -> (i32, i32) {
    %c0_i32 = arith.constant 0 : i32
    %c0_i32_0 = arith.constant 0 : i32
    %c0_i32_1 = arith.constant 0 : i32
    return %c0_i32, %c0_i32_0 : i32, i32
  }
  func.func @transform_4(%arg0: i32) -> (i32, i32) {
    %c0_i32 = arith.constant 0 : i32
    %c0_i32_0 = arith.constant 0 : i32
    return %arg0, %c0_i32 : i32, i32
  }
}

</mosaic_0001>

<llo_original>
// kernel: bottleneck_forward.4
$region0: #{bottleneck_forward.4}
  #allocation0 [shape = 'u32[]', space=smem, size = 0x4, offset = 0x4, fixed_abs, tag = 'smem constant byte address 0x4 - core index']
  #allocation1 [shape = 'u32[144,128]{1,0:T(1,128)}', space=vmem, size = 0x12000, scoped, tag = 'internal scratch']
  %s0 = inlined_call_operand.vmem [shape: f32[512,128], index: 0, kind: input, shape index: {}]
  %s1 = inlined_call_operand.vmem [shape: f32[128,128], index: 1, kind: input, shape index: {}]
  %s2 = inlined_call_operand.vmem [shape: f32[1,128], index: 2, kind: input, shape index: {}]
  %s3 = inlined_call_operand.vmem [shape: f32[1,128], index: 3, kind: input, shape index: {}]
  %s4 = inlined_call_operand.vmem [shape: f32[512,128], index: 4, kind: output, shape index: {0}]
  %s5 = inlined_call_operand.vmem [shape: f32[2,2,128], index: 5, kind: output, shape index: {1}]
  %6 = xla_tuple %s4, %s5
  %s7 = sld [smem:[#allocation0]]
  $region57: #{bottleneck_forward.4} parent=0
    _
  %s9 = ssub.s32 1, %s7
  %s10 = scalar_select 0, %s9, %s7
  loop: start=0, step=1, limit=4
  $region2: #{bottleneck_forward.4} parent=0 // loop_pre_header
    _
  $region3: #{bottleneck_forward.4} parent=0 // loop_header
    %s12 = sphi 0, %s16
    %p13 = scmp.ge.s32.totalorder %s12, 4
    %s22 = sphi 0, %s24
    %s25 = sphi 0, %s22
    %s26 = sphi 0, %s25
    %s42 = sphi 0, %s26
    %s46 = sphi 0, %s46
    %s48 = sphi 0, %s46
    %s49 = sphi 0, %s48
    %s63 = sphi 0, %s49
    %s67 = sphi 0, %s67
    %s69 = sphi 0, %s67
    %s70 = sphi 0, %s69
    %s84 = sphi 0, %s70
    %s88 = sphi 0, %s88
    %s90 = sphi 0, %s88
    %s91 = sphi 0, %s90
    %s105 = sphi 0, %s91
    %s111 = sphi 0, %s113
    %s114 = sphi 0, %s111
    %s115 = sphi 0, %s114
    %s131 = sphi 0, %s115
    %s137 = sphi 0, %s139
    %s140 = sphi 0, %s137
    %s141 = sphi 0, %s140
    %s157 = sphi 0, %s141
  $region4: #{bottleneck_forward.4} parent=0 // loop_header_branch
    %15 = sbr.rel (%p13) target = $region8
  $region5: #{bottleneck_forward.4} parent=0 // loop_body
    %s17 = ssub.s32 %s12, 1
    %s18 = ssub.s32 %s12, 2
    %s19 = sadd.s32 %s12, 1
    %s20 = ssub.s32 %s12, %s19
    %p21 = scmp.eq.s32.totalorder %s20, 0
    %s23 = sadd.s32 %s22, 1
    %s24 = scalar_select %p21, %s22, %s23
    %p27 = pneg %p21
    %p28 = scmp.eq.s32.totalorder %s12, 1
    %p29 = por %p27, %p28
    %p30 = scmp.ne.s32.totalorder %s22, %s25
    %p31 = scmp.eq.s32.totalorder %s12, 0
    %p32 = por %p30, %p31
    %p33 = scmp.ne.s32.totalorder %s22, %s25
    %p34 = scmp.eq.s32.totalorder %s17, 1
    %p35 = por %p33, %p34
    %p36 = scmp.ne.s32.totalorder %s25, %s26
    %p37 = scmp.eq.s32.totalorder %s17, 0
    %p38 = por %p36, %p37
    %p39 = scmp.ne.s32.totalorder %s25, %s26
    %p40 = scmp.eq.s32.totalorder %s18, 1
    %p41 = por %p39, %p40
    %p43 = scmp.ne.s32.totalorder %s26, %s42
    %p44 = scmp.eq.s32.totalorder %s18, 0
    %p45 = por %p43, %p44
    %s47 = sadd.s32 %s46, 1
    %p50 = scmp.eq.s32.totalorder %s12, 1
    %p51 = scmp.ne.s32.totalorder %s46, %s48
    %p52 = scmp.eq.s32.totalorder %s12, 0
    %p53 = por %p51, %p52
    %p54 = scmp.ne.s32.totalorder %s46, %s48
    %p55 = scmp.eq.s32.totalorder %s17, 1
    %p56 = por %p54, %p55
    %p57 = scmp.ne.s32.totalorder %s48, %s49
    %p58 = scmp.eq.s32.totalorder %s17, 0
    %p59 = por %p57, %p58
    %p60 = scmp.ne.s32.totalorder %s48, %s49
    %p61 = scmp.eq.s32.totalorder %s18, 1
    %p62 = por %p60, %p61
    %p64 = scmp.ne.s32.totalorder %s49, %s63
    %p65 = scmp.eq.s32.totalorder %s18, 0
    %p66 = por %p64, %p65
    %s68 = sadd.s32 %s67, 1
    %p71 = scmp.eq.s32.totalorder %s12, 1
    %p72 = scmp.ne.s32.totalorder %s67, %s69
    %p73 = scmp.eq.s32.totalorder %s12, 0
    %p74 = por %p72, %p73
    %p75 = scmp.ne.s32.totalorder %s67, %s69
    %p76 = scmp.eq.s32.totalorder %s17, 1
    %p77 = por %p75, %p76
    %p78 = scmp.ne.s32.totalorder %s69, %s70
    %p79 = scmp.eq.s32.totalorder %s17, 0
    %p80 = por %p78, %p79
    %p81 = scmp.ne.s32.totalorder %s69, %s70
    %p82 = scmp.eq.s32.totalorder %s18, 1
    %p83 = por %p81, %p82
    %p85 = scmp.ne.s32.totalorder %s70, %s84
    %p86 = scmp.eq.s32.totalorder %s18, 0
    %p87 = por %p85, %p86
    %s89 = sadd.s32 %s88, 1
    %p92 = scmp.eq.s32.totalorder %s12, 1
    %p93 = scmp.ne.s32.totalorder %s88, %s90
    %p94 = scmp.eq.s32.totalorder %s12, 0
    %p95 = por %p93, %p94
    %p96 = scmp.ne.s32.totalorder %s88, %s90
    %p97 = scmp.eq.s32.totalorder %s17, 1
    %p98 = por %p96, %p97
    %p99 = scmp.ne.s32.totalorder %s90, %s91
    %p100 = scmp.eq.s32.totalorder %s17, 0
    %p101 = por %p99, %p100
    %p102 = scmp.ne.s32.totalorder %s90, %s91
    %p103 = scmp.eq.s32.totalorder %s18, 1
    %p104 = por %p102, %p103
    %p106 = scmp.ne.s32.totalorder %s91, %s105
    %p107 = scmp.eq.s32.totalorder %s18, 0
    %p108 = por %p106, %p107
    %s109 = ssub.s32 %s12, %s19
    %p110 = scmp.eq.s32.totalorder %s109, 0
    %s112 = sadd.s32 %s111, 1
    %s113 = scalar_select %p110, %s111, %s112
    %p116 = pneg %p110
    %p117 = scmp.eq.s32.totalorder %s12, 1
    %p118 = por %p116, %p117
    %p119 = scmp.ne.s32.totalorder %s111, %s114
    %p120 = scmp.eq.s32.totalorder %s12, 0
    %p121 = por %p119, %p120
    %p122 = scmp.ne.s32.totalorder %s111, %s114
    %p123 = scmp.eq.s32.totalorder %s17, 1
    %p124 = por %p122, %p123
    %p125 = scmp.ne.s32.totalorder %s114, %s115
    %p126 = scmp.eq.s32.totalorder %s17, 0
    %p127 = por %p125, %p126
    %p128 = scmp.ne.s32.totalorder %s114, %s115
    %p129 = scmp.eq.s32.totalorder %s18, 1
    %p130 = por %p128, %p129
    %p132 = scmp.ne.s32.totalorder %s115, %s131
    %p133 = scmp.eq.s32.totalorder %s18, 0
    %p134 = por %p132, %p133
    %s135 = ssub.s32 %s12, %s19
    %p136 = scmp.eq.s32.totalorder %s135, 0
    %s138 = sadd.s32 %s137, 1
    %s139 = scalar_select %p136, %s137, %s138
    %p142 = pneg %p136
    %p143 = scmp.eq.s32.totalorder %s12, 1
    %p144 = por %p142, %p143
    %p145 = scmp.ne.s32.totalorder %s137, %s140
    %p146 = scmp.eq.s32.totalorder %s12, 0
    %p147 = por %p145, %p146
    %p148 = scmp.ne.s32.totalorder %s137, %s140
    %p149 = scmp.eq.s32.totalorder %s17, 1
    %p150 = por %p148, %p149
    %p151 = scmp.ne.s32.totalorder %s140, %s141
    %p152 = scmp.eq.s32.totalorder %s17, 0
    %p153 = por %p151, %p152
    %p154 = scmp.ne.s32.totalorder %s140, %s141
    %p155 = scmp.eq.s32.totalorder %s18, 1
    %p156 = por %p154, %p155
    %p158 = scmp.ne.s32.totalorder %s141, %s157
    %p159 = scmp.eq.s32.totalorder %s18, 0
    %p160 = por %p158, %p159
    %p161 = scmp.le.s32.totalorder 1, %s12
    %p162 = scmp.lt.s32.totalorder %s12, 3
    %p163 = pnand %p161, %p162
    %p164 = pneg %p163
    // Predicated region
    $region9: #{bottleneck_forward.4} parent=5 // pred_check
      _
    $region10: #{bottleneck_forward.4} parent=5 // pred_check_branch
      %166 = sbr.rel (%p163) target = $region12
    $region11: #{bottleneck_forward.4} parent=5 // pred_region
      %s167 = ssub.s32 %s12, 1
      // Predicated region
      $region13: #{bottleneck_forward.4} parent=11 // pred_check
        %p168 = pneg %p59
      $region14: #{bottleneck_forward.4} parent=11 // pred_check_branch
        %170 = sbr.rel (%p168) target = $region16
      $region15: #{bottleneck_forward.4} parent=11 // pred_region
        _
      $region16: #{bottleneck_forward.4} parent=11 // pred_fallthru
        _
      // Predicated region
      $region17: #{bottleneck_forward.4} parent=11 // pred_check
        %p171 = pneg %p80
      $region18: #{bottleneck_forward.4} parent=11 // pred_check_branch
        %173 = sbr.rel (%p171) target = $region20
      $region19: #{bottleneck_forward.4} parent=11 // pred_region
        _
      $region20: #{bottleneck_forward.4} parent=11 // pred_fallthru
        _
      // Predicated region
      $region21: #{bottleneck_forward.4} parent=11 // pred_check
        %p174 = pneg %p101
      $region22: #{bottleneck_forward.4} parent=11 // pred_check_branch
        %176 = sbr.rel (%p174) target = $region24
      $region23: #{bottleneck_forward.4} parent=11 // pred_region
        _
      $region24: #{bottleneck_forward.4} parent=11 // pred_fallthru
        _
    $region12: #{bottleneck_forward.4} parent=5 // pred_fallthru
      _
    %p177 = scmp.lt.s32.totalorder %s12, 2
    // Predicated region
    $region25: #{bottleneck_forward.4} parent=5 // pred_check
      %p178 = pneg %p177
    $region26: #{bottleneck_forward.4} parent=5 // pred_check_branch
      %180 = sbr.rel (%p178) target = $region28
    $region27: #{bottleneck_forward.4} parent=5 // pred_region
      // Predicated region
      $region29: #{bottleneck_forward.4} parent=27 // pred_check
        %p181 = pneg %p32
      $region30: #{bottleneck_forward.4} parent=27 // pred_check_branch
        %183 = sbr.rel (%p181) target = $region32
      $region31: #{bottleneck_forward.4} parent=27 // pred_region
        %s184 = smul.u32 32, %s12
        %p185 = scmp.lt.s32.totalorder %s184, 63
        %s186 = scalar_select %p185, %s184, 63
        %s187 = smul.addr %s186, 8
        %s188 = scalar_lea.vmem %s0, %s187
        %s189 = smul.u32 32, %s12
      $region32: #{bottleneck_forward.4} parent=27 // pred_fallthru
        _
    $region28: #{bottleneck_forward.4} parent=5 // pred_fallthru
      _
    %p190 = scmp.le.s32.totalorder 1, %s12
    %p191 = scmp.lt.s32.totalorder %s12, 3
    %p192 = pnand %p190, %p191
    %p193 = pneg %p192
    // Predicated region
    $region33: #{bottleneck_forward.4} parent=5 // pred_check
      _
    $region34: #{bottleneck_forward.4} parent=5 // pred_check_branch
      %195 = sbr.rel (%p192) target = $region36
    $region35: #{bottleneck_forward.4} parent=5 // pred_region
      %s196 = ssub.s32 %s12, 1
      %s197 = smul.u32 32, %s17
      %p198 = scmp.lt.s32.totalorder %s197, 63
      %s199 = scalar_select %p198, %s197, 63
      %s200 = smul.addr %s199, 8
      %s201 = scalar_lea.vmem %s0, %s200
      %p202 = pneg %p38
      %p203 = pneg %p35
      %p204 = pneg %p59
      %p205 = pneg %p56
      %p206 = pneg %p80
      %p207 = pneg %p77
      %p208 = pneg %p101
      %p209 = pneg %p98
      %p210 = pneg %p127
      %p211 = pneg %p124
      %s212 = smul.u32 32, %s17
      %p213 = scmp.lt.s32.totalorder %s212, 63
      %s214 = scalar_select %p213, %s212, 63
      %s215 = smul.addr %s214, 8
      %s216 = scalar_lea.vmem %s4, %s215
      %p217 = pneg %p153
      %p218 = pneg %p150
      %p219 = scmp.lt.s32.totalorder %s17, 1
      %s220 = scalar_select %p219, %s17, 1
      %s221 = smul.addr %s220, 2
      %s222 = scalar_lea.vmem %s5, %s221
      %s223 = smul.u32 32, %s17
      %p224 = scmp.lt.s32.totalorder %s223, 63
      %s225 = scalar_select %p224, %s223, 63
      %s226 = smul.addr %s225, 8
      %s227 = scalar_lea.vmem %s0, %s226
      %s228 = smul.u32 32, %s17
      %s229 = smul.u32 32, %s17
      %p230 = scmp.lt.s32.totalorder %s229, 63
      %s231 = scalar_select %p230, %s229, 63
      %s232 = smul.addr %s231, 8
      %s233 = scalar_lea.vmem %s4, %s232
      %s234 = smul.u32 32, %s17
      %p235 = scmp.lt.s32.totalorder %s17, 1
      %s236 = scalar_select %p235, %s17, 1
      %s237 = smul.addr %s236, 2
      %s238 = scalar_lea.vmem %s5, %s237
      %v240 = vld [vmem:[%s227] sm:$0xff]
      %v241 = vld [vmem:[%s227 + $0x8] sm:$0xff]
      %v242 = vld [vmem:[%s227 + $0x10] sm:$0xff]
      %v243 = vld [vmem:[%s227 + $0x18] sm:$0xff]
      %v244 = vld [vmem:[%s227 + $0x20] sm:$0xff]
      %v245 = vld [vmem:[%s227 + $0x28] sm:$0xff]
      %v246 = vld [vmem:[%s227 + $0x30] sm:$0xff]
      %v247 = vld [vmem:[%s227 + $0x38] sm:$0xff]
      %v248 = vld [vmem:[%s227 + $0x40] sm:$0xff]
      %v249 = vld [vmem:[%s227 + $0x48] sm:$0xff]
      %v250 = vld [vmem:[%s227 + $0x50] sm:$0xff]
      %v251 = vld [vmem:[%s227 + $0x58] sm:$0xff]
      %v252 = vld [vmem:[%s227 + $0x60] sm:$0xff]
      %v253 = vld [vmem:[%s227 + $0x68] sm:$0xff]
      %v254 = vld [vmem:[%s227 + $0x70] sm:$0xff]
      %v255 = vld [vmem:[%s227 + $0x78] sm:$0xff]
      %v256 = vld [vmem:[%s227 + $0x80] sm:$0xff]
      %v257 = vld [vmem:[%s227 + $0x88] sm:$0xff]
      %v258 = vld [vmem:[%s227 + $0x90] sm:$0xff]
      %v259 = vld [vmem:[%s227 + $0x98] sm:$0xff]
      %v260 = vld [vmem:[%s227 + $0xa0] sm:$0xff]
      %v261 = vld [vmem:[%s227 + $0xa8] sm:$0xff]
      %v262 = vld [vmem:[%s227 + $0xb0] sm:$0xff]
      %v263 = vld [vmem:[%s227 + $0xb8] sm:$0xff]
      %v264 = vld [vmem:[%s227 + $0xc0] sm:$0xff]
      %v265 = vld [vmem:[%s227 + $0xc8] sm:$0xff]
      %v266 = vld [vmem:[%s227 + $0xd0] sm:$0xff]
      %v267 = vld [vmem:[%s227 + $0xd8] sm:$0xff]
      %v268 = vld [vmem:[%s227 + $0xe0] sm:$0xff]
      %v269 = vld [vmem:[%s227 + $0xe8] sm:$0xff]
      %v270 = vld [vmem:[%s227 + $0xf0] sm:$0xff]
      %v271 = vld [vmem:[%s227 + $0xf8] sm:$0xff]
      %v272 = vpack.c.bf16 %v241, %v240
      %v273 = vpack.c.bf16 %v243, %v242
      %v274 = vpack.c.bf16 %v245, %v244
      %v275 = vpack.c.bf16 %v247, %v246
      %v276 = vpack.c.bf16 %v249, %v248
      %v277 = vpack.c.bf16 %v251, %v250
      %v278 = vpack.c.bf16 %v253, %v252
      %v279 = vpack.c.bf16 %v255, %v254
      %v280 = vpack.c.bf16 %v257, %v256
      %v281 = vpack.c.bf16 %v259, %v258
      %v282 = vpack.c.bf16 %v261, %v260
      %v283 = vpack.c.bf16 %v263, %v262
      %v284 = vpack.c.bf16 %v265, %v264
      %v285 = vpack.c.bf16 %v267, %v266
      %v286 = vpack.c.bf16 %v269, %v268
      %v287 = vpack.c.bf16 %v271, %v270
      %v288 = vld [vmem:[%s1] sm:$0xff]
      %v289 = vld [vmem:[%s1 + $0x8] sm:$0xff]
      %v290 = vld [vmem:[%s1 + $0x10] sm:$0xff]
      %v291 = vld [vmem:[%s1 + $0x18] sm:$0xff]
      %v292 = vld [vmem:[%s1 + $0x20] sm:$0xff]
      %v293 = vld [vmem:[%s1 + $0x28] sm:$0xff]
      %v294 = vld [vmem:[%s1 + $0x30] sm:$0xff]
      %v295 = vld [vmem:[%s1 + $0x38] sm:$0xff]
      %v296 = vld [vmem:[%s1 + $0x40] sm:$0xff]
      %v297 = vld [vmem:[%s1 + $0x48] sm:$0xff]
      %v298 = vld [vmem:[%s1 + $0x50] sm:$0xff]
      %v299 = vld [vmem:[%s1 + $0x58] sm:$0xff]
      %v300 = vld [vmem:[%s1 + $0x60] sm:$0xff]
      %v301 = vld [vmem:[%s1 + $0x68] sm:$0xff]
      %v302 = vld [vmem:[%s1 + $0x70] sm:$0xff]
      %v303 = vld [vmem:[%s1 + $0x78] sm:$0xff]
      %v304 = vpack.c.bf16 %v289, %v288
      %v305 = vpack.c.bf16 %v291, %v290
      %v306 = vpack.c.bf16 %v293, %v292
      %v307 = vpack.c.bf16 %v295, %v294
      %v308 = vpack.c.bf16 %v297, %v296
      %v309 = vpack.c.bf16 %v299, %v298
      %v310 = vpack.c.bf16 %v301, %v300
      %v311 = vpack.c.bf16 %v303, %v302
      %312 = vmatprep.subr.bf16.mxu0 0
      %313 = vmatpush1.bf16.msra.mxu0 %v311
      %314 = vmatprep.subr.bf16.mxu0 0
      %315 = vmatpush1.bf16.msra.mxu0 %v310
      %316 = vmatprep.subr.bf16.mxu0 0
      %317 = vmatpush1.bf16.msra.mxu0 %v309
      %318 = vmatprep.subr.bf16.mxu0 0
      %319 = vmatpush1.bf16.msra.mxu0 %v308
      %320 = vmatprep.subr.bf16.mxu0 0
      %321 = vmatpush1.bf16.msra.mxu0 %v307
      %322 = vmatprep.subr.bf16.mxu0 0
      %323 = vmatpush1.bf16.msra.mxu0 %v306
      %324 = vmatprep.subr.bf16.mxu0 0
      %325 = vmatpush1.bf16.msra.mxu0 %v305
      %326 = vmatprep.subr.bf16.mxu0 0
      %327 = vmatpush1.bf16.msra.mxu0 %v304
      %328 = vmatprep.subr.bf16.mxu0 0
      %329 = vmatpush2.bf16.msra.mxu0 0
      %330 = vmatprep.subr.bf16.mxu0 0
      %331 = vmatpush2.bf16.msra.mxu0 0
      %332 = vmatprep.subr.bf16.mxu0 0
      %333 = vmatpush2.bf16.msra.mxu0 0
      %334 = vmatprep.subr.bf16.mxu0 0
      %335 = vmatpush2.bf16.msra.mxu0 0
      %336 = vmatprep.subr.bf16.mxu0 0
      %337 = vmatpush2.bf16.msra.mxu0 0
      %338 = vmatprep.subr.bf16.mxu0 0
      %339 = vmatpush2.bf16.msra.mxu0 0
      %340 = vmatprep.subr.bf16.mxu0 0
      %341 = vmatpush2.bf16.msra.mxu0 0
      %342 = vmatprep.subr.bf16.mxu0 0
      %343 = vmatpush2.bf16.msra.mxu0 0
      %344 = vmatprep.mubr.bf16.mxu0 0
      %345 = vmatmul.mubr.bf16.gmra.mxu0 %v272
      %v346 = vpop.f32.mrf.mxu0
      %v347 = vadd.f32 0.0, %v346
      %v348 = vpop.f32.mrf.mxu0
      %v349 = vpop.f32.mrf.mxu0
      %v350 = vadd.f32 0.0, %v349
      %v351 = vpop.f32.mrf.mxu0
      %352 = vmatprep.mubr.bf16.mxu0 0
      %353 = vmatmul.mubr.bf16.gmra.mxu0 %v273
      %v354 = vpop.f32.mrf.mxu0
      %v355 = vadd.f32 0.0, %v354
      %v356 = vpop.f32.mrf.mxu0
      %v357 = vpop.f32.mrf.mxu0
      %v358 = vadd.f32 0.0, %v357
      %v359 = vpop.f32.mrf.mxu0
      %360 = vmatprep.mubr.bf16.mxu0 0
      %361 = vmatmul.mubr.bf16.gmra.mxu0 %v274
      %v362 = vpop.f32.mrf.mxu0
      %v363 = vadd.f32 0.0, %v362
      %v364 = vpop.f32.mrf.mxu0
      %v365 = vpop.f32.mrf.mxu0
      %v366 = vadd.f32 0.0, %v365
      %v367 = vpop.f32.mrf.mxu0
      %368 = vmatprep.mubr.bf16.mxu0 0
      %369 = vmatmul.mubr.bf16.gmra.mxu0 %v275
      %v370 = vpop.f32.mrf.mxu0
      %v371 = vadd.f32 0.0, %v370
      %v372 = vpop.f32.mrf.mxu0
      %v373 = vpop.f32.mrf.mxu0
      %v374 = vadd.f32 0.0, %v373
      %v375 = vpop.f32.mrf.mxu0
      %376 = vmatprep.mubr.bf16.mxu0 0
      %377 = vmatmul.mubr.bf16.gmra.mxu0 %v276
      %v378 = vpop.f32.mrf.mxu0
      %v379 = vadd.f32 0.0, %v378
      %v380 = vpop.f32.mrf.mxu0
      %v381 = vpop.f32.mrf.mxu0
      %v382 = vadd.f32 0.0, %v381
      %v383 = vpop.f32.mrf.mxu0
      %384 = vmatprep.mubr.bf16.mxu0 0
      %385 = vmatmul.mubr.bf16.gmra.mxu0 %v277
      %v386 = vpop.f32.mrf.mxu0
      %v387 = vadd.f32 0.0, %v386
      %v388 = vpop.f32.mrf.mxu0
      %v389 = vpop.f32.mrf.mxu0
      %v390 = vadd.f32 0.0, %v389
      %v391 = vpop.f32.mrf.mxu0
      %392 = vmatprep.mubr.bf16.mxu0 0
      %393 = vmatmul.mubr.bf16.gmra.mxu0 %v278
      %v394 = vpop.f32.mrf.mxu0
      %v395 = vadd.f32 0.0, %v394
      %v396 = vpop.f32.mrf.mxu0
      %v397 = vpop.f32.mrf.mxu0
      %v398 = vadd.f32 0.0, %v397
      %v399 = vpop.f32.mrf.mxu0
      %400 = vmatprep.mubr.bf16.mxu0 0
      %401 = vmatmul.mubr.bf16.gmra.mxu0 %v279
      %v402 = vpop.f32.mrf.mxu0
      %v403 = vadd.f32 0.0, %v402
      %v404 = vpop.f32.mrf.mxu0
      %v405 = vpop.f32.mrf.mxu0
      %v406 = vadd.f32 0.0, %v405
      %v407 = vpop.f32.mrf.mxu0
      %408 = vmatprep.mubr.bf16.mxu0 0
      %409 = vmatmul.mubr.bf16.gmra.mxu0 %v280
      %v410 = vpop.f32.mrf.mxu0
      %v411 = vadd.f32 0.0, %v410
      %v412 = vpop.f32.mrf.mxu0
      %v413 = vpop.f32.mrf.mxu0
      %v414 = vadd.f32 0.0, %v413
      %v415 = vpop.f32.mrf.mxu0
      %416 = vmatprep.mubr.bf16.mxu0 0
      %417 = vmatmul.mubr.bf16.gmra.mxu0 %v281
      %v418 = vpop.f32.mrf.mxu0
      %v419 = vadd.f32 0.0, %v418
      %v420 = vpop.f32.mrf.mxu0
      %v421 = vpop.f32.mrf.mxu0
      %v422 = vadd.f32 0.0, %v421
      %v423 = vpop.f32.mrf.mxu0
      %424 = vmatprep.mubr.bf16.mxu0 0
      %425 = vmatmul.mubr.bf16.gmra.mxu0 %v282
      %v426 = vpop.f32.mrf.mxu0
      %v427 = vadd.f32 0.0, %v426
      %v428 = vpop.f32.mrf.mxu0
      %v429 = vpop.f32.mrf.mxu0
      %v430 = vadd.f32 0.0, %v429
      %v431 = vpop.f32.mrf.mxu0
      %432 = vmatprep.mubr.bf16.mxu0 0
      %433 = vmatmul.mubr.bf16.gmra.mxu0 %v283
      %v434 = vpop.f32.mrf.mxu0
      %v435 = vadd.f32 0.0, %v434
      %v436 = vpop.f32.mrf.mxu0
      %v437 = vpop.f32.mrf.mxu0
      %v438 = vadd.f32 0.0, %v437
      %v439 = vpop.f32.mrf.mxu0
      %440 = vmatprep.mubr.bf16.mxu0 0
      %441 = vmatmul.mubr.bf16.gmra.mxu0 %v284
      %v442 = vpop.f32.mrf.mxu0
      %v443 = vadd.f32 0.0, %v442
      %v444 = vpop.f32.mrf.mxu0
      %v445 = vpop.f32.mrf.mxu0
      %v446 = vadd.f32 0.0, %v445
      %v447 = vpop.f32.mrf.mxu0
      %448 = vmatprep.mubr.bf16.mxu0 0
      %449 = vmatmul.mubr.bf16.gmra.mxu0 %v285
      %v450 = vpop.f32.mrf.mxu0
      %v451 = vadd.f32 0.0, %v450
      %v452 = vpop.f32.mrf.mxu0
      %v453 = vpop.f32.mrf.mxu0
      %v454 = vadd.f32 0.0, %v453
      %v455 = vpop.f32.mrf.mxu0
      %456 = vmatprep.mubr.bf16.mxu0 0
      %457 = vmatmul.mubr.bf16.gmra.mxu0 %v286
      %v458 = vpop.f32.mrf.mxu0
      %v459 = vadd.f32 0.0, %v458
      %v460 = vpop.f32.mrf.mxu0
      %v461 = vpop.f32.mrf.mxu0
      %v462 = vadd.f32 0.0, %v461
      %v463 = vpop.f32.mrf.mxu0
      %464 = vmatprep.mubr.bf16.mxu0 0
      %465 = vmatmul.mubr.bf16.gmra.mxu0 %v287
      %v466 = vpop.f32.mrf.mxu0
      %v467 = vadd.f32 0.0, %v466
      %v468 = vpop.f32.mrf.mxu0
      %v469 = vpop.f32.mrf.mxu0
      %v470 = vadd.f32 0.0, %v469
      %v471 = vpop.f32.mrf.mxu0
      %472 = vdwg.mxu0
      %473 = vst [vmem:[%s233] sm:$0xff] %v347
      %474 = vst [vmem:[%s233 + $0x8] sm:$0xff] %v350
      %475 = vst [vmem:[%s233 + $0x10] sm:$0xff] %v355
      %476 = vst [vmem:[%s233 + $0x18] sm:$0xff] %v358
      %477 = vst [vmem:[%s233 + $0x20] sm:$0xff] %v363
      %478 = vst [vmem:[%s233 + $0x28] sm:$0xff] %v366
      %479 = vst [vmem:[%s233 + $0x30] sm:$0xff] %v371
      %480 = vst [vmem:[%s233 + $0x38] sm:$0xff] %v374
      %481 = vst [vmem:[%s233 + $0x40] sm:$0xff] %v379
      %482 = vst [vmem:[%s233 + $0x48] sm:$0xff] %v382
      %483 = vst [vmem:[%s233 + $0x50] sm:$0xff] %v387
      %484 = vst [vmem:[%s233 + $0x58] sm:$0xff] %v390
      %485 = vst [vmem:[%s233 + $0x60] sm:$0xff] %v395
      %486 = vst [vmem:[%s233 + $0x68] sm:$0xff] %v398
      %487 = vst [vmem:[%s233 + $0x70] sm:$0xff] %v403
      %488 = vst [vmem:[%s233 + $0x78] sm:$0xff] %v406
      %489 = vst [vmem:[%s233 + $0x80] sm:$0xff] %v411
      %490 = vst [vmem:[%s233 + $0x88] sm:$0xff] %v414
      %491 = vst [vmem:[%s233 + $0x90] sm:$0xff] %v419
      %492 = vst [vmem:[%s233 + $0x98] sm:$0xff] %v422
      %493 = vst [vmem:[%s233 + $0xa0] sm:$0xff] %v427
      %494 = vst [vmem:[%s233 + $0xa8] sm:$0xff] %v430
      %495 = vst [vmem:[%s233 + $0xb0] sm:$0xff] %v435
      %496 = vst [vmem:[%s233 + $0xb8] sm:$0xff] %v438
      %497 = vst [vmem:[%s233 + $0xc0] sm:$0xff] %v443
      %498 = vst [vmem:[%s233 + $0xc8] sm:$0xff] %v446
      %499 = vst [vmem:[%s233 + $0xd0] sm:$0xff] %v451
      %500 = vst [vmem:[%s233 + $0xd8] sm:$0xff] %v454
      %501 = vst [vmem:[%s233 + $0xe0] sm:$0xff] %v459
      %502 = vst [vmem:[%s233 + $0xe8] sm:$0xff] %v462
      %503 = vst [vmem:[%s233 + $0xf0] sm:$0xff] %v467
      %504 = vst [vmem:[%s233 + $0xf8] sm:$0xff] %v470
      %v505 = vadd.f32 %v347, %v350
      %v506 = vadd.f32 %v505, %v355
      %v507 = vadd.f32 %v506, %v358
      %v508 = vadd.f32 %v507, %v363
      %v509 = vadd.f32 %v508, %v366
      %v510 = vadd.f32 %v509, %v371
      %v511 = vadd.f32 %v510, %v374
      %v512 = vadd.f32 %v511, %v379
      %v513 = vadd.f32 %v512, %v382
      %v514 = vadd.f32 %v513, %v387
      %v515 = vadd.f32 %v514, %v390
      %v516 = vadd.f32 %v515, %v395
      %v517 = vadd.f32 %v516, %v398
      %v518 = vadd.f32 %v517, %v403
      %v519 = vadd.f32 %v518, %v406
      %v520 = vadd.f32 %v519, %v411
      %v521 = vadd.f32 %v520, %v414
      %v522 = vadd.f32 %v521, %v419
      %v523 = vadd.f32 %v522, %v422
      %v524 = vadd.f32 %v523, %v427
      %v525 = vadd.f32 %v524, %v430
      %v526 = vadd.f32 %v525, %v435
      %v527 = vadd.f32 %v526, %v438
      %v528 = vadd.f32 %v527, %v443
      %v529 = vadd.f32 %v528, %v446
      %v530 = vadd.f32 %v529, %v451
      %v531 = vadd.f32 %v530, %v454
      %v532 = vadd.f32 %v531, %v459
      %v533 = vadd.f32 %v532, %v462
      %v534 = vadd.f32 %v533, %v467
      %v535 = vadd.f32 %v534, %v470
      %v536 = vrot.slane %v535, 4
      %v537 = vadd.f32 %v535, %v536
      %v538 = vrot.slane %v537, 2
      %v539 = vadd.f32 %v537, %v538
      %v540 = vrot.slane %v539, 1
      %v541 = vadd.f32 %v539, %v540
      %v542 = vmul.f32 %v347, %v347
      %v543 = vmul.f32 %v350, %v350
      %v544 = vmul.f32 %v355, %v355
      %v545 = vmul.f32 %v358, %v358
      %v546 = vmul.f32 %v363, %v363
      %v547 = vmul.f32 %v366, %v366
      %v548 = vmul.f32 %v371, %v371
      %v549 = vmul.f32 %v374, %v374
      %v550 = vmul.f32 %v379, %v379
      %v551 = vmul.f32 %v382, %v382
      %v552 = vmul.f32 %v387, %v387
      %v553 = vmul.f32 %v390, %v390
      %v554 = vmul.f32 %v395, %v395
      %v555 = vmul.f32 %v398, %v398
      %v556 = vmul.f32 %v403, %v403
      %v557 = vmul.f32 %v406, %v406
      %v558 = vmul.f32 %v411, %v411
      %v559 = vmul.f32 %v414, %v414
      %v560 = vmul.f32 %v419, %v419
      %v561 = vmul.f32 %v422, %v422
      %v562 = vmul.f32 %v427, %v427
      %v563 = vmul.f32 %v430, %v430
      %v564 = vmul.f32 %v435, %v435
      %v565 = vmul.f32 %v438, %v438
      %v566 = vmul.f32 %v443, %v443
      %v567 = vmul.f32 %v446, %v446
      %v568 = vmul.f32 %v451, %v451
      %v569 = vmul.f32 %v454, %v454
      %v570 = vmul.f32 %v459, %v459
      %v571 = vmul.f32 %v462, %v462
      %v572 = vmul.f32 %v467, %v467
      %v573 = vmul.f32 %v470, %v470
      %v574 = vadd.f32 %v542, %v543
      %v575 = vadd.f32 %v574, %v544
      %v576 = vadd.f32 %v575, %v545
      %v577 = vadd.f32 %v576, %v546
      %v578 = vadd.f32 %v577, %v547
      %v579 = vadd.f32 %v578, %v548
      %v580 = vadd.f32 %v579, %v549
      %v581 = vadd.f32 %v580, %v550
      %v582 = vadd.f32 %v581, %v551
      %v583 = vadd.f32 %v582, %v552
      %v584 = vadd.f32 %v583, %v553
      %v585 = vadd.f32 %v584, %v554
      %v586 = vadd.f32 %v585, %v555
      %v587 = vadd.f32 %v586, %v556
      %v588 = vadd.f32 %v587, %v557
      %v589 = vadd.f32 %v588, %v558
      %v590 = vadd.f32 %v589, %v559
      %v591 = vadd.f32 %v590, %v560
      %v592 = vadd.f32 %v591, %v561
      %v593 = vadd.f32 %v592, %v562
      %v594 = vadd.f32 %v593, %v563
      %v595 = vadd.f32 %v594, %v564
      %v596 = vadd.f32 %v595, %v565
      %v597 = vadd.f32 %v596, %v566
      %v598 = vadd.f32 %v597, %v567
      %v599 = vadd.f32 %v598, %v568
      %v600 = vadd.f32 %v599, %v569
      %v601 = vadd.f32 %v600, %v570
      %v602 = vadd.f32 %v601, %v571
      %v603 = vadd.f32 %v602, %v572
      %v604 = vadd.f32 %v603, %v573
      %v605 = vrot.slane %v604, 4
      %v606 = vadd.f32 %v604, %v605
      %v607 = vrot.slane %v606, 2
      %v608 = vadd.f32 %v606, %v607
      %v609 = vrot.slane %v608, 1
      %v610 = vadd.f32 %v608, %v609
      %vm611 = vcmask 1040384
      %v612 = vsel %vm611, %v541, %v610
      %613 = vst [vmem:[%s238] sm:$0x3] %v612
      %s614 = smul.u32 32, %s17
      %p615 = scmp.lt.s32.totalorder %s614, 63
      %s616 = scalar_select %p615, %s614, 63
      %s617 = smul.addr %s616, 8
      %s618 = scalar_lea.vmem %s4, %s617
      %p619 = scmp.lt.s32.totalorder %s17, 1
      %s620 = scalar_select %p619, %s17, 1
      %s621 = smul.addr %s620, 2
      %s622 = scalar_lea.vmem %s5, %s621
      // Predicated region
      $region37: #{bottleneck_forward.4} parent=35 // pred_check
        %p623 = pneg %p124
      $region38: #{bottleneck_forward.4} parent=35 // pred_check_branch
        %625 = sbr.rel (%p623) target = $region40
      $region39: #{bottleneck_forward.4} parent=35 // pred_region
        %s626 = smul.u32 32, %s17
      $region40: #{bottleneck_forward.4} parent=35 // pred_fallthru
        _
      // Predicated region
      $region41: #{bottleneck_forward.4} parent=35 // pred_check
        %p627 = pneg %p150
      $region42: #{bottleneck_forward.4} parent=35 // pred_check_branch
        %629 = sbr.rel (%p627) target = $region44
      $region43: #{bottleneck_forward.4} parent=35 // pred_region
        _
      $region44: #{bottleneck_forward.4} parent=35 // pred_fallthru
        _
    $region36: #{bottleneck_forward.4} parent=5 // pred_fallthru
      _
    %p630 = scmp.le.s32.totalorder 2, %s12
    // Predicated region
    $region45: #{bottleneck_forward.4} parent=5 // pred_check
      %p631 = pneg %p630
    $region46: #{bottleneck_forward.4} parent=5 // pred_check_branch
      %633 = sbr.rel (%p631) target = $region48
    $region47: #{bottleneck_forward.4} parent=5 // pred_region
      %s634 = ssub.s32 %s12, 2
      // Predicated region
      $region49: #{bottleneck_forward.4} parent=47 // pred_check
        %p635 = pneg %p130
      $region50: #{bottleneck_forward.4} parent=47 // pred_check_branch
        %637 = sbr.rel (%p635) target = $region52
      $region51: #{bottleneck_forward.4} parent=47 // pred_region
        %s638 = smul.u32 32, %s18
        %p639 = scmp.lt.s32.totalorder %s638, 63
        %s640 = scalar_select %p639, %s638, 63
        %s641 = smul.addr %s640, 8
        %s642 = scalar_lea.vmem %s4, %s641
      $region52: #{bottleneck_forward.4} parent=47 // pred_fallthru
        _
      // Predicated region
      $region53: #{bottleneck_forward.4} parent=47 // pred_check
        %p643 = pneg %p156
      $region54: #{bottleneck_forward.4} parent=47 // pred_check_branch
        %645 = sbr.rel (%p643) target = $region56
      $region55: #{bottleneck_forward.4} parent=47 // pred_region
        %p646 = scmp.lt.s32.totalorder %s18, 1
        %s647 = scalar_select %p646, %s18, 1
        %s648 = smul.addr %s647, 2
        %s649 = scalar_lea.vmem %s5, %s648
      $region56: #{bottleneck_forward.4} parent=47 // pred_fallthru
        _
    $region48: #{bottleneck_forward.4} parent=5 // pred_fallthru
      _
  $region6: #{bottleneck_forward.4} parent=0 // loop_footer
    %s16 = sadd.s32 1, %s12
  $region7: #{bottleneck_forward.4} parent=0 // loop_footer_branch
    %11 = sbr.rel target = $region3
  $region8: #{bottleneck_forward.4} parent=0 // loop_exit
    _

// kernel: bottleneck_forward.6
$region0: #{bottleneck_forward.6}
  #allocation0 [shape = 'u32[]', space=smem, size = 0x4, offset = 0x4, fixed_abs, tag = 'smem constant byte address 0x4 - core index']
  #allocation1 [shape = 'u32[144,128]{1,0:T(1,128)}', space=vmem, size = 0x12000, scoped, tag = 'internal scratch']
  %s0 = inlined_call_operand.vmem [shape: f32[512,128], index: 0, kind: input, shape index: {}]
  %s1 = inlined_call_operand.vmem [shape: f32[128,128], index: 1, kind: input, shape index: {}]
  %s2 = inlined_call_operand.vmem [shape: f32[1,128], index: 2, kind: input, shape index: {}]
  %s3 = inlined_call_operand.vmem [shape: f32[1,128], index: 3, kind: input, shape index: {}]
  %s4 = inlined_call_operand.vmem [shape: f32[512,128], index: 4, kind: output, shape index: {0}]
  %s5 = inlined_call_operand.vmem [shape: f32[2,2,128], index: 5, kind: output, shape index: {1}]
  %6 = xla_tuple %s4, %s5
  %s7 = sld [smem:[#allocation0]]
  $region57: #{bottleneck_forward.6} parent=0
    _
  %s9 = ssub.s32 1, %s7
  %s10 = scalar_select 0, %s9, %s7
  loop: start=0, step=1, limit=4
  $region2: #{bottleneck_forward.6} parent=0 // loop_pre_header
    _
  $region3: #{bottleneck_forward.6} parent=0 // loop_header
    %s12 = sphi 0, %s16
    %p13 = scmp.ge.s32.totalorder %s12, 4
    %s22 = sphi 0, %s24
    %s25 = sphi 0, %s22
    %s26 = sphi 0, %s25
    %s42 = sphi 0, %s26
    %s46 = sphi 0, %s46
    %s48 = sphi 0, %s46
    %s49 = sphi 0, %s48
    %s63 = sphi 0, %s49
    %s67 = sphi 0, %s67
    %s69 = sphi 0, %s67
    %s70 = sphi 0, %s69
    %s84 = sphi 0, %s70
    %s88 = sphi 0, %s88
    %s90 = sphi 0, %s88
    %s91 = sphi 0, %s90
    %s105 = sphi 0, %s91
    %s111 = sphi 0, %s113
    %s114 = sphi 0, %s111
    %s115 = sphi 0, %s114
    %s131 = sphi 0, %s115
    %s137 = sphi 0, %s139
    %s140 = sphi 0, %s137
    %s141 = sphi 0, %s140
    %s157 = sphi 0, %s141
  $region4: #{bottleneck_forward.6} parent=0 // loop_header_branch
    %15 = sbr.rel (%p13) target = $region8
  $region5: #{bottleneck_forward.6} parent=0 // loop_body
    %s17 = ssub.s32 %s12, 1
    %s18 = ssub.s32 %s12, 2
    %s19 = sadd.s32 %s12, 1
    %s20 = ssub.s32 %s12, %s19
    %p21 = scmp.eq.s32.totalorder %s20, 0
    %s23 = sadd.s32 %s22, 1
    %s24 = scalar_select %p21, %s22, %s23
    %p27 = pneg %p21
    %p28 = scmp.eq.s32.totalorder %s12, 1
    %p29 = por %p27, %p28
    %p30 = scmp.ne.s32.totalorder %s22, %s25
    %p31 = scmp.eq.s32.totalorder %s12, 0
    %p32 = por %p30, %p31
    %p33 = scmp.ne.s32.totalorder %s22, %s25
    %p34 = scmp.eq.s32.totalorder %s17, 1
    %p35 = por %p33, %p34
    %p36 = scmp.ne.s32.totalorder %s25, %s26
    %p37 = scmp.eq.s32.totalorder %s17, 0
    %p38 = por %p36, %p37
    %p39 = scmp.ne.s32.totalorder %s25, %s26
    %p40 = scmp.eq.s32.totalorder %s18, 1
    %p41 = por %p39, %p40
    %p43 = scmp.ne.s32.totalorder %s26, %s42
    %p44 = scmp.eq.s32.totalorder %s18, 0
    %p45 = por %p43, %p44
    %s47 = sadd.s32 %s46, 1
    %p50 = scmp.eq.s32.totalorder %s12, 1
    %p51 = scmp.ne.s32.totalorder %s46, %s48
    %p52 = scmp.eq.s32.totalorder %s12, 0
    %p53 = por %p51, %p52
    %p54 = scmp.ne.s32.totalorder %s46, %s48
    %p55 = scmp.eq.s32.totalorder %s17, 1
    %p56 = por %p54, %p55
    %p57 = scmp.ne.s32.totalorder %s48, %s49
    %p58 = scmp.eq.s32.totalorder %s17, 0
    %p59 = por %p57, %p58
    %p60 = scmp.ne.s32.totalorder %s48, %s49
    %p61 = scmp.eq.s32.totalorder %s18, 1
    %p62 = por %p60, %p61
    %p64 = scmp.ne.s32.totalorder %s49, %s63
    %p65 = scmp.eq.s32.totalorder %s18, 0
    %p66 = por %p64, %p65
    %s68 = sadd.s32 %s67, 1
    %p71 = scmp.eq.s32.totalorder %s12, 1
    %p72 = scmp.ne.s32.totalorder %s67, %s69
    %p73 = scmp.eq.s32.totalorder %s12, 0
    %p74 = por %p72, %p73
    %p75 = scmp.ne.s32.totalorder %s67, %s69
    %p76 = scmp.eq.s32.totalorder %s17, 1
    %p77 = por %p75, %p76
    %p78 = scmp.ne.s32.totalorder %s69, %s70
    %p79 = scmp.eq.s32.totalorder %s17, 0
    %p80 = por %p78, %p79
    %p81 = scmp.ne.s32.totalorder %s69, %s70
    %p82 = scmp.eq.s32.totalorder %s18, 1
    %p83 = por %p81, %p82
    %p85 = scmp.ne.s32.totalorder %s70, %s84
    %p86 = scmp.eq.s32.totalorder %s18, 0
    %p87 = por %p85, %p86
    %s89 = sadd.s32 %s88, 1
    %p92 = scmp.eq.s32.totalorder %s12, 1
    %p93 = scmp.ne.s32.totalorder %s88, %s90
    %p94 = scmp.eq.s32.totalorder %s12, 0
    %p95 = por %p93, %p94
    %p96 = scmp.ne.s32.totalorder %s88, %s90
    %p97 = scmp.eq.s32.totalorder %s17, 1
    %p98 = por %p96, %p97
    %p99 = scmp.ne.s32.totalorder %s90, %s91
    %p100 = scmp.eq.s32.totalorder %s17, 0
    %p101 = por %p99, %p100
    %p102 = scmp.ne.s32.totalorder %s90, %s91
    %p103 = scmp.eq.s32.totalorder %s18, 1
    %p104 = por %p102, %p103
    %p106 = scmp.ne.s32.totalorder %s91, %s105
    %p107 = scmp.eq.s32.totalorder %s18, 0
    %p108 = por %p106, %p107
    %s109 = ssub.s32 %s12, %s19
    %p110 = scmp.eq.s32.totalorder %s109, 0
    %s112 = sadd.s32 %s111, 1
    %s113 = scalar_select %p110, %s111, %s112
    %p116 = pneg %p110
    %p117 = scmp.eq.s32.totalorder %s12, 1
    %p118 = por %p116, %p117
    %p119 = scmp.ne.s32.totalorder %s111, %s114
    %p120 = scmp.eq.s32.totalorder %s12, 0
    %p121 = por %p119, %p120
    %p122 = scmp.ne.s32.totalorder %s111, %s114
    %p123 = scmp.eq.s32.totalorder %s17, 1
    %p124 = por %p122, %p123
    %p125 = scmp.ne.s32.totalorder %s114, %s115
    %p126 = scmp.eq.s32.totalorder %s17, 0
    %p127 = por %p125, %p126
    %p128 = scmp.ne.s32.totalorder %s114, %s115
    %p129 = scmp.eq.s32.totalorder %s18, 1
    %p130 = por %p128, %p129
    %p132 = scmp.ne.s32.totalorder %s115, %s131
    %p133 = scmp.eq.s32.totalorder %s18, 0
    %p134 = por %p132, %p133
    %s135 = ssub.s32 %s12, %s19
    %p136 = scmp.eq.s32.totalorder %s135, 0
    %s138 = sadd.s32 %s137, 1
    %s139 = scalar_select %p136, %s137, %s138
    %p142 = pneg %p136
    %p143 = scmp.eq.s32.totalorder %s12, 1
    %p144 = por %p142, %p143
    %p145 = scmp.ne.s32.totalorder %s137, %s140
    %p146 = scmp.eq.s32.totalorder %s12, 0
    %p147 = por %p145, %p146
    %p148 = scmp.ne.s32.totalorder %s137, %s140
    %p149 = scmp.eq.s32.totalorder %s17, 1
    %p150 = por %p148, %p149
    %p151 = scmp.ne.s32.totalorder %s140, %s141
    %p152 = scmp.eq.s32.totalorder %s17, 0
    %p153 = por %p151, %p152
    %p154 = scmp.ne.s32.totalorder %s140, %s141
    %p155 = scmp.eq.s32.totalorder %s18, 1
    %p156 = por %p154, %p155
    %p158 = scmp.ne.s32.totalorder %s141, %s157
    %p159 = scmp.eq.s32.totalorder %s18, 0
    %p160 = por %p158, %p159
    %p161 = scmp.le.s32.totalorder 1, %s12
    %p162 = scmp.lt.s32.totalorder %s12, 3
    %p163 = pnand %p161, %p162
    %p164 = pneg %p163
    // Predicated region
    $region9: #{bottleneck_forward.6} parent=5 // pred_check
      _
    $region10: #{bottleneck_forward.6} parent=5 // pred_check_branch
      %166 = sbr.rel (%p163) target = $region12
    $region11: #{bottleneck_forward.6} parent=5 // pred_region
      %s167 = ssub.s32 %s12, 1
      // Predicated region
      $region13: #{bottleneck_forward.6} parent=11 // pred_check
        %p168 = pneg %p59
      $region14: #{bottleneck_forward.6} parent=11 // pred_check_branch
        %170 = sbr.rel (%p168) target = $region16
      $region15: #{bottleneck_forward.6} parent=11 // pred_region
        _
      $region16: #{bottleneck_forward.6} parent=11 // pred_fallthru
        _
      // Predicated region
      $region17: #{bottleneck_forward.6} parent=11 // pred_check
        %p171 = pneg %p80
      $region18: #{bottleneck_forward.6} parent=11 // pred_check_branch
        %173 = sbr.rel (%p171) target = $region20
      $region19: #{bottleneck_forward.6} parent=11 // pred_region
        _
      $region20: #{bottleneck_forward.6} parent=11 // pred_fallthru
        _
      // Predicated region
      $region21: #{bottleneck_forward.6} parent=11 // pred_check
        %p174 = pneg %p101
      $region22: #{bottleneck_forward.6} parent=11 // pred_check_branch
        %176 = sbr.rel (%p174) target = $region24
      $region23: #{bottleneck_forward.6} parent=11 // pred_region
        _
      $region24: #{bottleneck_forward.6} parent=11 // pred_fallthru
        _
    $region12: #{bottleneck_forward.6} parent=5 // pred_fallthru
      _
    %p177 = scmp.lt.s32.totalorder %s12, 2
    // Predicated region
    $region25: #{bottleneck_forward.6} parent=5 // pred_check
      %p178 = pneg %p177
    $region26: #{bottleneck_forward.6} parent=5 // pred_check_branch
      %180 = sbr.rel (%p178) target = $region28
    $region27: #{bottleneck_forward.6} parent=5 // pred_region
      // Predicated region
      $region29: #{bottleneck_forward.6} parent=27 // pred_check
        %p181 = pneg %p32
      $region30: #{bottleneck_forward.6} parent=27 // pred_check_branch
        %183 = sbr.rel (%p181) target = $region32
      $region31: #{bottleneck_forward.6} parent=27 // pred_region
        %s184 = smul.u32 32, %s12
        %p185 = scmp.lt.s32.totalorder %s184, 63
        %s186 = scalar_select %p185, %s184, 63
        %s187 = smul.addr %s186, 8
        %s188 = scalar_lea.vmem %s0, %s187
        %s189 = smul.u32 32, %s12
      $region32: #{bottleneck_forward.6} parent=27 // pred_fallthru
        _
    $region28: #{bottleneck_forward.6} parent=5 // pred_fallthru
      _
    %p190 = scmp.le.s32.totalorder 1, %s12
    %p191 = scmp.lt.s32.totalorder %s12, 3
    %p192 = pnand %p190, %p191
    %p193 = pneg %p192
    // Predicated region
    $region33: #{bottleneck_forward.6} parent=5 // pred_check
      _
    $region34: #{bottleneck_forward.6} parent=5 // pred_check_branch
      %195 = sbr.rel (%p192) target = $region36
    $region35: #{bottleneck_forward.6} parent=5 // pred_region
      %s196 = ssub.s32 %s12, 1
      %s197 = smul.u32 32, %s17
      %p198 = scmp.lt.s32.totalorder %s197, 63
      %s199 = scalar_select %p198, %s197, 63
      %s200 = smul.addr %s199, 8
      %s201 = scalar_lea.vmem %s0, %s200
      %p202 = pneg %p38
      %p203 = pneg %p35
      %p204 = pneg %p59
      %p205 = pneg %p56
      %p206 = pneg %p80
      %p207 = pneg %p77
      %p208 = pneg %p101
      %p209 = pneg %p98
      %p210 = pneg %p127
      %p211 = pneg %p124
      %s212 = smul.u32 32, %s17
      %p213 = scmp.lt.s32.totalorder %s212, 63
      %s214 = scalar_select %p213, %s212, 63
      %s215 = smul.addr %s214, 8
      %s216 = scalar_lea.vmem %s4, %s215
      %p217 = pneg %p153
      %p218 = pneg %p150
      %p219 = scmp.lt.s32.totalorder %s17, 1
      %s220 = scalar_select %p219, %s17, 1
      %s221 = smul.addr %s220, 2
      %s222 = scalar_lea.vmem %s5, %s221
      %s223 = smul.u32 32, %s17
      %p224 = scmp.lt.s32.totalorder %s223, 63
      %s225 = scalar_select %p224, %s223, 63
      %s226 = smul.addr %s225, 8
      %s227 = scalar_lea.vmem %s0, %s226
      %s228 = smul.u32 32, %s17
      %s229 = smul.u32 32, %s17
      %p230 = scmp.lt.s32.totalorder %s229, 63
      %s231 = scalar_select %p230, %s229, 63
      %s232 = smul.addr %s231, 8
      %s233 = scalar_lea.vmem %s4, %s232
      %s234 = smul.u32 32, %s17
      %p235 = scmp.lt.s32.totalorder %s17, 1
      %s236 = scalar_select %p235, %s17, 1
      %s237 = smul.addr %s236, 2
      %s238 = scalar_lea.vmem %s5, %s237
      %v240 = vld [vmem:[%s227] sm:$0xff]
      %v241 = vld [vmem:[%s227 + $0x8] sm:$0xff]
      %v242 = vld [vmem:[%s227 + $0x10] sm:$0xff]
      %v243 = vld [vmem:[%s227 + $0x18] sm:$0xff]
      %v244 = vld [vmem:[%s227 + $0x20] sm:$0xff]
      %v245 = vld [vmem:[%s227 + $0x28] sm:$0xff]
      %v246 = vld [vmem:[%s227 + $0x30] sm:$0xff]
      %v247 = vld [vmem:[%s227 + $0x38] sm:$0xff]
      %v248 = vld [vmem:[%s227 + $0x40] sm:$0xff]
      %v249 = vld [vmem:[%s227 + $0x48] sm:$0xff]
      %v250 = vld [vmem:[%s227 + $0x50] sm:$0xff]
      %v251 = vld [vmem:[%s227 + $0x58] sm:$0xff]
      %v252 = vld [vmem:[%s227 + $0x60] sm:$0xff]
      %v253 = vld [vmem:[%s227 + $0x68] sm:$0xff]
      %v254 = vld [vmem:[%s227 + $0x70] sm:$0xff]
      %v255 = vld [vmem:[%s227 + $0x78] sm:$0xff]
      %v256 = vld [vmem:[%s227 + $0x80] sm:$0xff]
      %v257 = vld [vmem:[%s227 + $0x88] sm:$0xff]
      %v258 = vld [vmem:[%s227 + $0x90] sm:$0xff]
      %v259 = vld [vmem:[%s227 + $0x98] sm:$0xff]
      %v260 = vld [vmem:[%s227 + $0xa0] sm:$0xff]
      %v261 = vld [vmem:[%s227 + $0xa8] sm:$0xff]
      %v262 = vld [vmem:[%s227 + $0xb0] sm:$0xff]
      %v263 = vld [vmem:[%s227 + $0xb8] sm:$0xff]
      %v264 = vld [vmem:[%s227 + $0xc0] sm:$0xff]
      %v265 = vld [vmem:[%s227 + $0xc8] sm:$0xff]
      %v266 = vld [vmem:[%s227 + $0xd0] sm:$0xff]
      %v267 = vld [vmem:[%s227 + $0xd8] sm:$0xff]
      %v268 = vld [vmem:[%s227 + $0xe0] sm:$0xff]
      %v269 = vld [vmem:[%s227 + $0xe8] sm:$0xff]
      %v270 = vld [vmem:[%s227 + $0xf0] sm:$0xff]
      %v271 = vld [vmem:[%s227 + $0xf8] sm:$0xff]
      %v272 = vld [vmem:[%s2] sm:$0x1]
      %v274 = vlaneseq
      %v275 = vshrl.u32 %v274, 7
      %v276 = vsub.s32 0, %v275
      %v277 = vrot.slane %v272, %v276
      %v279 = vmul.f32 %v240, %v277
      %v280 = vmul.f32 %v241, %v277
      %v281 = vmul.f32 %v242, %v277
      %v282 = vmul.f32 %v243, %v277
      %v283 = vmul.f32 %v244, %v277
      %v284 = vmul.f32 %v245, %v277
      %v285 = vmul.f32 %v246, %v277
      %v286 = vmul.f32 %v247, %v277
      %v287 = vmul.f32 %v248, %v277
      %v288 = vmul.f32 %v249, %v277
      %v289 = vmul.f32 %v250, %v277
      %v290 = vmul.f32 %v251, %v277
      %v291 = vmul.f32 %v252, %v277
      %v292 = vmul.f32 %v253, %v277
      %v293 = vmul.f32 %v254, %v277
      %v294 = vmul.f32 %v255, %v277
      %v295 = vmul.f32 %v256, %v277
      %v296 = vmul.f32 %v257, %v277
      %v297 = vmul.f32 %v258, %v277
      %v298 = vmul.f32 %v259, %v277
      %v299 = vmul.f32 %v260, %v277
      %v300 = vmul.f32 %v261, %v277
      %v301 = vmul.f32 %v262, %v277
      %v302 = vmul.f32 %v263, %v277
      %v303 = vmul.f32 %v264, %v277
      %v304 = vmul.f32 %v265, %v277
      %v305 = vmul.f32 %v266, %v277
      %v306 = vmul.f32 %v267, %v277
      %v307 = vmul.f32 %v268, %v277
      %v308 = vmul.f32 %v269, %v277
      %v309 = vmul.f32 %v270, %v277
      %v310 = vmul.f32 %v271, %v277
      %v311 = vld [vmem:[%s3] sm:$0x1]
      %v313 = vlaneseq
      %v314 = vshrl.u32 %v313, 7
      %v315 = vsub.s32 0, %v314
      %v316 = vrot.slane %v311, %v315
      %v318 = vadd.f32 %v279, %v316
      %v319 = vadd.f32 %v280, %v316
      %v320 = vadd.f32 %v281, %v316
      %v321 = vadd.f32 %v282, %v316
      %v322 = vadd.f32 %v283, %v316
      %v323 = vadd.f32 %v284, %v316
      %v324 = vadd.f32 %v285, %v316
      %v325 = vadd.f32 %v286, %v316
      %v326 = vadd.f32 %v287, %v316
      %v327 = vadd.f32 %v288, %v316
      %v328 = vadd.f32 %v289, %v316
      %v329 = vadd.f32 %v290, %v316
      %v330 = vadd.f32 %v291, %v316
      %v331 = vadd.f32 %v292, %v316
      %v332 = vadd.f32 %v293, %v316
      %v333 = vadd.f32 %v294, %v316
      %v334 = vadd.f32 %v295, %v316
      %v335 = vadd.f32 %v296, %v316
      %v336 = vadd.f32 %v297, %v316
      %v337 = vadd.f32 %v298, %v316
      %v338 = vadd.f32 %v299, %v316
      %v339 = vadd.f32 %v300, %v316
      %v340 = vadd.f32 %v301, %v316
      %v341 = vadd.f32 %v302, %v316
      %v342 = vadd.f32 %v303, %v316
      %v343 = vadd.f32 %v304, %v316
      %v344 = vadd.f32 %v305, %v316
      %v345 = vadd.f32 %v306, %v316
      %v346 = vadd.f32 %v307, %v316
      %v347 = vadd.f32 %v308, %v316
      %v348 = vadd.f32 %v309, %v316
      %v349 = vadd.f32 %v310, %v316
      %v350 = vmax.f32 %v318, 0.0
      %v351 = vmax.f32 %v319, 0.0
      %v352 = vmax.f32 %v320, 0.0
      %v353 = vmax.f32 %v321, 0.0
      %v354 = vmax.f32 %v322, 0.0
      %v355 = vmax.f32 %v323, 0.0
      %v356 = vmax.f32 %v324, 0.0
      %v357 = vmax.f32 %v325, 0.0
      %v358 = vmax.f32 %v326, 0.0
      %v359 = vmax.f32 %v327, 0.0
      %v360 = vmax.f32 %v328, 0.0
      %v361 = vmax.f32 %v329, 0.0
      %v362 = vmax.f32 %v330, 0.0
      %v363 = vmax.f32 %v331, 0.0
      %v364 = vmax.f32 %v332, 0.0
      %v365 = vmax.f32 %v333, 0.0
      %v366 = vmax.f32 %v334, 0.0
      %v367 = vmax.f32 %v335, 0.0
      %v368 = vmax.f32 %v336, 0.0
      %v369 = vmax.f32 %v337, 0.0
      %v370 = vmax.f32 %v338, 0.0
      %v371 = vmax.f32 %v339, 0.0
      %v372 = vmax.f32 %v340, 0.0
      %v373 = vmax.f32 %v341, 0.0
      %v374 = vmax.f32 %v342, 0.0
      %v375 = vmax.f32 %v343, 0.0
      %v376 = vmax.f32 %v344, 0.0
      %v377 = vmax.f32 %v345, 0.0
      %v378 = vmax.f32 %v346, 0.0
      %v379 = vmax.f32 %v347, 0.0
      %v380 = vmax.f32 %v348, 0.0
      %v381 = vmax.f32 %v349, 0.0
      %v382 = vpack.c.bf16 %v351, %v350
      %v383 = vpack.c.bf16 %v353, %v352
      %v384 = vpack.c.bf16 %v355, %v354
      %v385 = vpack.c.bf16 %v357, %v356
      %v386 = vpack.c.bf16 %v359, %v358
      %v387 = vpack.c.bf16 %v361, %v360
      %v388 = vpack.c.bf16 %v363, %v362
      %v389 = vpack.c.bf16 %v365, %v364
      %v390 = vpack.c.bf16 %v367, %v366
      %v391 = vpack.c.bf16 %v369, %v368
      %v392 = vpack.c.bf16 %v371, %v370
      %v393 = vpack.c.bf16 %v373, %v372
      %v394 = vpack.c.bf16 %v375, %v374
      %v395 = vpack.c.bf16 %v377, %v376
      %v396 = vpack.c.bf16 %v379, %v378
      %v397 = vpack.c.bf16 %v381, %v380
      %v398 = vld [vmem:[%s1] sm:$0xff]
      %v399 = vld [vmem:[%s1 + $0x8] sm:$0xff]
      %v400 = vld [vmem:[%s1 + $0x10] sm:$0xff]
      %v401 = vld [vmem:[%s1 + $0x18] sm:$0xff]
      %v402 = vld [vmem:[%s1 + $0x20] sm:$0xff]
      %v403 = vld [vmem:[%s1 + $0x28] sm:$0xff]
      %v404 = vld [vmem:[%s1 + $0x30] sm:$0xff]
      %v405 = vld [vmem:[%s1 + $0x38] sm:$0xff]
      %v406 = vld [vmem:[%s1 + $0x40] sm:$0xff]
      %v407 = vld [vmem:[%s1 + $0x48] sm:$0xff]
      %v408 = vld [vmem:[%s1 + $0x50] sm:$0xff]
      %v409 = vld [vmem:[%s1 + $0x58] sm:$0xff]
      %v410 = vld [vmem:[%s1 + $0x60] sm:$0xff]
      %v411 = vld [vmem:[%s1 + $0x68] sm:$0xff]
      %v412 = vld [vmem:[%s1 + $0x70] sm:$0xff]
      %v413 = vld [vmem:[%s1 + $0x78] sm:$0xff]
      %v414 = vpack.c.bf16 %v399, %v398
      %v415 = vpack.c.bf16 %v401, %v400
      %v416 = vpack.c.bf16 %v403, %v402
      %v417 = vpack.c.bf16 %v405, %v404
      %v418 = vpack.c.bf16 %v407, %v406
      %v419 = vpack.c.bf16 %v409, %v408
      %v420 = vpack.c.bf16 %v411, %v410
      %v421 = vpack.c.bf16 %v413, %v412
      %422 = vmatprep.subr.bf16.mxu0 0
      %423 = vmatpush1.bf16.msra.mxu0 %v421
      %424 = vmatprep.subr.bf16.mxu0 0
      %425 = vmatpush1.bf16.msra.mxu0 %v420
      %426 = vmatprep.subr.bf16.mxu0 0
      %427 = vmatpush1.bf16.msra.mxu0 %v419
      %428 = vmatprep.subr.bf16.mxu0 0
      %429 = vmatpush1.bf16.msra.mxu0 %v418
      %430 = vmatprep.subr.bf16.mxu0 0
      %431 = vmatpush1.bf16.msra.mxu0 %v417
      %432 = vmatprep.subr.bf16.mxu0 0
      %433 = vmatpush1.bf16.msra.mxu0 %v416
      %434 = vmatprep.subr.bf16.mxu0 0
      %435 = vmatpush1.bf16.msra.mxu0 %v415
      %436 = vmatprep.subr.bf16.mxu0 0
      %437 = vmatpush1.bf16.msra.mxu0 %v414
      %438 = vmatprep.subr.bf16.mxu0 0
      %439 = vmatpush2.bf16.msra.mxu0 0
      %440 = vmatprep.subr.bf16.mxu0 0
      %441 = vmatpush2.bf16.msra.mxu0 0
      %442 = vmatprep.subr.bf16.mxu0 0
      %443 = vmatpush2.bf16.msra.mxu0 0
      %444 = vmatprep.subr.bf16.mxu0 0
      %445 = vmatpush2.bf16.msra.mxu0 0
      %446 = vmatprep.subr.bf16.mxu0 0
      %447 = vmatpush2.bf16.msra.mxu0 0
      %448 = vmatprep.subr.bf16.mxu0 0
      %449 = vmatpush2.bf16.msra.mxu0 0
      %450 = vmatprep.subr.bf16.mxu0 0
      %451 = vmatpush2.bf16.msra.mxu0 0
      %452 = vmatprep.subr.bf16.mxu0 0
      %453 = vmatpush2.bf16.msra.mxu0 0
      %454 = vmatprep.mubr.bf16.mxu0 0
      %455 = vmatmul.mubr.bf16.gmra.mxu0 %v382
      %v456 = vpop.f32.mrf.mxu0
      %v457 = vadd.f32 0.0, %v456
      %v458 = vpop.f32.mrf.mxu0
      %v459 = vpop.f32.mrf.mxu0
      %v460 = vadd.f32 0.0, %v459
      %v461 = vpop.f32.mrf.mxu0
      %462 = vmatprep.mubr.bf16.mxu0 0
      %463 = vmatmul.mubr.bf16.gmra.mxu0 %v383
      %v464 = vpop.f32.mrf.mxu0
      %v465 = vadd.f32 0.0, %v464
      %v466 = vpop.f32.mrf.mxu0
      %v467 = vpop.f32.mrf.mxu0
      %v468 = vadd.f32 0.0, %v467
      %v469 = vpop.f32.mrf.mxu0
      %470 = vmatprep.mubr.bf16.mxu0 0
      %471 = vmatmul.mubr.bf16.gmra.mxu0 %v384
      %v472 = vpop.f32.mrf.mxu0
      %v473 = vadd.f32 0.0, %v472
      %v474 = vpop.f32.mrf.mxu0
      %v475 = vpop.f32.mrf.mxu0
      %v476 = vadd.f32 0.0, %v475
      %v477 = vpop.f32.mrf.mxu0
      %478 = vmatprep.mubr.bf16.mxu0 0
      %479 = vmatmul.mubr.bf16.gmra.mxu0 %v385
      %v480 = vpop.f32.mrf.mxu0
      %v481 = vadd.f32 0.0, %v480
      %v482 = vpop.f32.mrf.mxu0
      %v483 = vpop.f32.mrf.mxu0
      %v484 = vadd.f32 0.0, %v483
      %v485 = vpop.f32.mrf.mxu0
      %486 = vmatprep.mubr.bf16.mxu0 0
      %487 = vmatmul.mubr.bf16.gmra.mxu0 %v386
      %v488 = vpop.f32.mrf.mxu0
      %v489 = vadd.f32 0.0, %v488
      %v490 = vpop.f32.mrf.mxu0
      %v491 = vpop.f32.mrf.mxu0
      %v492 = vadd.f32 0.0, %v491
      %v493 = vpop.f32.mrf.mxu0
      %494 = vmatprep.mubr.bf16.mxu0 0
      %495 = vmatmul.mubr.bf16.gmra.mxu0 %v387
      %v496 = vpop.f32.mrf.mxu0
      %v497 = vadd.f32 0.0, %v496
      %v498 = vpop.f32.mrf.mxu0
      %v499 = vpop.f32.mrf.mxu0
      %v500 = vadd.f32 0.0, %v499
      %v501 = vpop.f32.mrf.mxu0
      %502 = vmatprep.mubr.bf16.mxu0 0
      %503 = vmatmul.mubr.bf16.gmra.mxu0 %v388
      %v504 = vpop.f32.mrf.mxu0
      %v505 = vadd.f32 0.0, %v504
      %v506 = vpop.f32.mrf.mxu0
      %v507 = vpop.f32.mrf.mxu0
      %v508 = vadd.f32 0.0, %v507
      %v509 = vpop.f32.mrf.mxu0
      %510 = vmatprep.mubr.bf16.mxu0 0
      %511 = vmatmul.mubr.bf16.gmra.mxu0 %v389
      %v512 = vpop.f32.mrf.mxu0
      %v513 = vadd.f32 0.0, %v512
      %v514 = vpop.f32.mrf.mxu0
      %v515 = vpop.f32.mrf.mxu0
      %v516 = vadd.f32 0.0, %v515
      %v517 = vpop.f32.mrf.mxu0
      %518 = vmatprep.mubr.bf16.mxu0 0
      %519 = vmatmul.mubr.bf16.gmra.mxu0 %v390
      %v520 = vpop.f32.mrf.mxu0
      %v521 = vadd.f32 0.0, %v520
      %v522 = vpop.f32.mrf.mxu0
      %v523 = vpop.f32.mrf.mxu0
      %v524 = vadd.f32 0.0, %v523
      %v525 = vpop.f32.mrf.mxu0
      %526 = vmatprep.mubr.bf16.mxu0 0
      %527 = vmatmul.mubr.bf16.gmra.mxu0 %v391
      %v528 = vpop.f32.mrf.mxu0
      %v529 = vadd.f32 0.0, %v528
      %v530 = vpop.f32.mrf.mxu0
      %v531 = vpop.f32.mrf.mxu0
      %v532 = vadd.f32 0.0, %v531
      %v533 = vpop.f32.mrf.mxu0
      %534 = vmatprep.mubr.bf16.mxu0 0
      %535 = vmatmul.mubr.bf16.gmra.mxu0 %v392
      %v536 = vpop.f32.mrf.mxu0
      %v537 = vadd.f32 0.0, %v536
      %v538 = vpop.f32.mrf.mxu0
      %v539 = vpop.f32.mrf.mxu0
      %v540 = vadd.f32 0.0, %v539
      %v541 = vpop.f32.mrf.mxu0
      %542 = vmatprep.mubr.bf16.mxu0 0
      %543 = vmatmul.mubr.bf16.gmra.mxu0 %v393
      %v544 = vpop.f32.mrf.mxu0
      %v545 = vadd.f32 0.0, %v544
      %v546 = vpop.f32.mrf.mxu0
      %v547 = vpop.f32.mrf.mxu0
      %v548 = vadd.f32 0.0, %v547
      %v549 = vpop.f32.mrf.mxu0
      %550 = vmatprep.mubr.bf16.mxu0 0
      %551 = vmatmul.mubr.bf16.gmra.mxu0 %v394
      %v552 = vpop.f32.mrf.mxu0
      %v553 = vadd.f32 0.0, %v552
      %v554 = vpop.f32.mrf.mxu0
      %v555 = vpop.f32.mrf.mxu0
      %v556 = vadd.f32 0.0, %v555
      %v557 = vpop.f32.mrf.mxu0
      %558 = vmatprep.mubr.bf16.mxu0 0
      %559 = vmatmul.mubr.bf16.gmra.mxu0 %v395
      %v560 = vpop.f32.mrf.mxu0
      %v561 = vadd.f32 0.0, %v560
      %v562 = vpop.f32.mrf.mxu0
      %v563 = vpop.f32.mrf.mxu0
      %v564 = vadd.f32 0.0, %v563
      %v565 = vpop.f32.mrf.mxu0
      %566 = vmatprep.mubr.bf16.mxu0 0
      %567 = vmatmul.mubr.bf16.gmra.mxu0 %v396
      %v568 = vpop.f32.mrf.mxu0
      %v569 = vadd.f32 0.0, %v568
      %v570 = vpop.f32.mrf.mxu0
      %v571 = vpop.f32.mrf.mxu0
      %v572 = vadd.f32 0.0, %v571
      %v573 = vpop.f32.mrf.mxu0
      %574 = vmatprep.mubr.bf16.mxu0 0
      %575 = vmatmul.mubr.bf16.gmra.mxu0 %v397
      %v576 = vpop.f32.mrf.mxu0
      %v577 = vadd.f32 0.0, %v576
      %v578 = vpop.f32.mrf.mxu0
      %v579 = vpop.f32.mrf.mxu0
      %v580 = vadd.f32 0.0, %v579
      %v581 = vpop.f32.mrf.mxu0
      %582 = vdwg.mxu0
      %583 = vst [vmem:[%s233] sm:$0xff] %v457
      %584 = vst [vmem:[%s233 + $0x8] sm:$0xff] %v460
      %585 = vst [vmem:[%s233 + $0x10] sm:$0xff] %v465
      %586 = vst [vmem:[%s233 + $0x18] sm:$0xff] %v468
      %587 = vst [vmem:[%s233 + $0x20] sm:$0xff] %v473
      %588 = vst [vmem:[%s233 + $0x28] sm:$0xff] %v476
      %589 = vst [vmem:[%s233 + $0x30] sm:$0xff] %v481
      %590 = vst [vmem:[%s233 + $0x38] sm:$0xff] %v484
      %591 = vst [vmem:[%s233 + $0x40] sm:$0xff] %v489
      %592 = vst [vmem:[%s233 + $0x48] sm:$0xff] %v492
      %593 = vst [vmem:[%s233 + $0x50] sm:$0xff] %v497
      %594 = vst [vmem:[%s233 + $0x58] sm:$0xff] %v500
      %595 = vst [vmem:[%s233 + $0x60] sm:$0xff] %v505
      %596 = vst [vmem:[%s233 + $0x68] sm:$0xff] %v508
      %597 = vst [vmem:[%s233 + $0x70] sm:$0xff] %v513
      %598 = vst [vmem:[%s233 + $0x78] sm:$0xff] %v516
      %599 = vst [vmem:[%s233 + $0x80] sm:$0xff] %v521
      %600 = vst [vmem:[%s233 + $0x88] sm:$0xff] %v524
      %601 = vst [vmem:[%s233 + $0x90] sm:$0xff] %v529
      %602 = vst [vmem:[%s233 + $0x98] sm:$0xff] %v532
      %603 = vst [vmem:[%s233 + $0xa0] sm:$0xff] %v537
      %604 = vst [vmem:[%s233 + $0xa8] sm:$0xff] %v540
      %605 = vst [vmem:[%s233 + $0xb0] sm:$0xff] %v545
      %606 = vst [vmem:[%s233 + $0xb8] sm:$0xff] %v548
      %607 = vst [vmem:[%s233 + $0xc0] sm:$0xff] %v553
      %608 = vst [vmem:[%s233 + $0xc8] sm:$0xff] %v556
      %609 = vst [vmem:[%s233 + $0xd0] sm:$0xff] %v561
      %610 = vst [vmem:[%s233 + $0xd8] sm:$0xff] %v564
      %611 = vst [vmem:[%s233 + $0xe0] sm:$0xff] %v569
      %612 = vst [vmem:[%s233 + $0xe8] sm:$0xff] %v572
      %613 = vst [vmem:[%s233 + $0xf0] sm:$0xff] %v577
      %614 = vst [vmem:[%s233 + $0xf8] sm:$0xff] %v580
      %v615 = vadd.f32 %v457, %v460
      %v616 = vadd.f32 %v615, %v465
      %v617 = vadd.f32 %v616, %v468
      %v618 = vadd.f32 %v617, %v473
      %v619 = vadd.f32 %v618, %v476
      %v620 = vadd.f32 %v619, %v481
      %v621 = vadd.f32 %v620, %v484
      %v622 = vadd.f32 %v621, %v489
      %v623 = vadd.f32 %v622, %v492
      %v624 = vadd.f32 %v623, %v497
      %v625 = vadd.f32 %v624, %v500
      %v626 = vadd.f32 %v625, %v505
      %v627 = vadd.f32 %v626, %v508
      %v628 = vadd.f32 %v627, %v513
      %v629 = vadd.f32 %v628, %v516
      %v630 = vadd.f32 %v629, %v521
      %v631 = vadd.f32 %v630, %v524
      %v632 = vadd.f32 %v631, %v529
      %v633 = vadd.f32 %v632, %v532
      %v634 = vadd.f32 %v633, %v537
      %v635 = vadd.f32 %v634, %v540
      %v636 = vadd.f32 %v635, %v545
      %v637 = vadd.f32 %v636, %v548
      %v638 = vadd.f32 %v637, %v553
      %v639 = vadd.f32 %v638, %v556
      %v640 = vadd.f32 %v639, %v561
      %v641 = vadd.f32 %v640, %v564
      %v642 = vadd.f32 %v641, %v569
      %v643 = vadd.f32 %v642, %v572
      %v644 = vadd.f32 %v643, %v577
      %v645 = vadd.f32 %v644, %v580
      %v646 = vrot.slane %v645, 4
      %v647 = vadd.f32 %v645, %v646
      %v648 = vrot.slane %v647, 2
      %v649 = vadd.f32 %v647, %v648
      %v650 = vrot.slane %v649, 1
      %v651 = vadd.f32 %v649, %v650
      %v652 = vmul.f32 %v457, %v457
      %v653 = vmul.f32 %v460, %v460
      %v654 = vmul.f32 %v465, %v465
      %v655 = vmul.f32 %v468, %v468
      %v656 = vmul.f32 %v473, %v473
      %v657 = vmul.f32 %v476, %v476
      %v658 = vmul.f32 %v481, %v481
      %v659 = vmul.f32 %v484, %v484
      %v660 = vmul.f32 %v489, %v489
      %v661 = vmul.f32 %v492, %v492
      %v662 = vmul.f32 %v497, %v497
      %v663 = vmul.f32 %v500, %v500
      %v664 = vmul.f32 %v505, %v505
      %v665 = vmul.f32 %v508, %v508
      %v666 = vmul.f32 %v513, %v513
      %v667 = vmul.f32 %v516, %v516
      %v668 = vmul.f32 %v521, %v521
      %v669 = vmul.f32 %v524, %v524
      %v670 = vmul.f32 %v529, %v529
      %v671 = vmul.f32 %v532, %v532
      %v672 = vmul.f32 %v537, %v537
      %v673 = vmul.f32 %v540, %v540
      %v674 = vmul.f32 %v545, %v545
      %v675 = vmul.f32 %v548, %v548
      %v676 = vmul.f32 %v553, %v553
      %v677 = vmul.f32 %v556, %v556
      %v678 = vmul.f32 %v561, %v561
      %v679 = vmul.f32 %v564, %v564
      %v680 = vmul.f32 %v569, %v569
      %v681 = vmul.f32 %v572, %v572
      %v682 = vmul.f32 %v577, %v577
      %v683 = vmul.f32 %v580, %v580
      %v684 = vadd.f32 %v652, %v653
      %v685 = vadd.f32 %v684, %v654
      %v686 = vadd.f32 %v685, %v655
      %v687 = vadd.f32 %v686, %v656
      %v688 = vadd.f32 %v687, %v657
      %v689 = vadd.f32 %v688, %v658
      %v690 = vadd.f32 %v689, %v659
      %v691 = vadd.f32 %v690, %v660
      %v692 = vadd.f32 %v691, %v661
      %v693 = vadd.f32 %v692, %v662
      %v694 = vadd.f32 %v693, %v663
      %v695 = vadd.f32 %v694, %v664
      %v696 = vadd.f32 %v695, %v665
      %v697 = vadd.f32 %v696, %v666
      %v698 = vadd.f32 %v697, %v667
      %v699 = vadd.f32 %v698, %v668
      %v700 = vadd.f32 %v699, %v669
      %v701 = vadd.f32 %v700, %v670
      %v702 = vadd.f32 %v701, %v671
      %v703 = vadd.f32 %v702, %v672
      %v704 = vadd.f32 %v703, %v673
      %v705 = vadd.f32 %v704, %v674
      %v706 = vadd.f32 %v705, %v675
      %v707 = vadd.f32 %v706, %v676
      %v708 = vadd.f32 %v707, %v677
      %v709 = vadd.f32 %v708, %v678
      %v710 = vadd.f32 %v709, %v679
      %v711 = vadd.f32 %v710, %v680
      %v712 = vadd.f32 %v711, %v681
      %v713 = vadd.f32 %v712, %v682
      %v714 = vadd.f32 %v713, %v683
      %v715 = vrot.slane %v714, 4
      %v716 = vadd.f32 %v714, %v715
      %v717 = vrot.slane %v716, 2
      %v718 = vadd.f32 %v716, %v717
      %v719 = vrot.slane %v718, 1
      %v720 = vadd.f32 %v718, %v719
      %vm721 = vcmask 1040384
      %v722 = vsel %vm721, %v651, %v720
      %723 = vst [vmem:[%s238] sm:$0x3] %v722
      %s724 = smul.u32 32, %s17
      %p725 = scmp.lt.s32.totalorder %s724, 63
      %s726 = scalar_select %p725, %s724, 63
      %s727 = smul.addr %s726, 8
      %s728 = scalar_lea.vmem %s4, %s727
      %p729 = scmp.lt.s32.totalorder %s17, 1
      %s730 = scalar_select %p729, %s17, 1
      %s731 = smul.addr %s730, 2
      %s732 = scalar_lea.vmem %s5, %s731
      // Predicated region
      $region37: #{bottleneck_forward.6} parent=35 // pred_check
        %p733 = pneg %p124
      $region38: #{bottleneck_forward.6} parent=35 // pred_check_branch
        %735 = sbr.rel (%p733) target = $region40
      $region39: #{bottleneck_forward.6} parent=35 // pred_region
        %s736 = smul.u32 32, %s17
      $region40: #{bottleneck_forward.6} parent=35 // pred_fallthru
        _
      // Predicated region
      $region41: #{bottleneck_forward.6} parent=35 // pred_check
        %p737 = pneg %p150
      $region42: #{bottleneck_forward.6} parent=35 // pred_check_branch
        %739 = sbr.rel (%p737) target = $region44
      $region43: #{bottleneck_forward.6} parent=35 // pred_region
        _
      $region44: #{bottleneck_forward.6} parent=35 // pred_fallthru
        _
    $region36: #{bottleneck_forward.6} parent=5 // pred_fallthru
      _
    %p740 = scmp.le.s32.totalorder 2, %s12
    // Predicated region
    $region45: #{bottleneck_forward.6} parent=5 // pred_check
      %p741 = pneg %p740
    $region46: #{bottleneck_forward.6} parent=5 // pred_check_branch
      %743 = sbr.rel (%p741) target = $region48
    $region47: #{bottleneck_forward.6} parent=5 // pred_region
      %s744 = ssub.s32 %s12, 2
      // Predicated region
      $region49: #{bottleneck_forward.6} parent=47 // pred_check
        %p745 = pneg %p130
      $region50: #{bottleneck_forward.6} parent=47 // pred_check_branch
        %747 = sbr.rel (%p745) target = $region52
      $region51: #{bottleneck_forward.6} parent=47 // pred_region
        %s748 = smul.u32 32, %s18
        %p749 = scmp.lt.s32.totalorder %s748, 63
        %s750 = scalar_select %p749, %s748, 63
        %s751 = smul.addr %s750, 8
        %s752 = scalar_lea.vmem %s4, %s751
      $region52: #{bottleneck_forward.6} parent=47 // pred_fallthru
        _
      // Predicated region
      $region53: #{bottleneck_forward.6} parent=47 // pred_check
        %p753 = pneg %p156
      $region54: #{bottleneck_forward.6} parent=47 // pred_check_branch
        %755 = sbr.rel (%p753) target = $region56
      $region55: #{bottleneck_forward.6} parent=47 // pred_region
        %p756 = scmp.lt.s32.totalorder %s18, 1
        %s757 = scalar_select %p756, %s18, 1
        %s758 = smul.addr %s757, 2
        %s759 = scalar_lea.vmem %s5, %s758
      $region56: #{bottleneck_forward.6} parent=47 // pred_fallthru
        _
    $region48: #{bottleneck_forward.6} parent=5 // pred_fallthru
      _
  $region6: #{bottleneck_forward.6} parent=0 // loop_footer
    %s16 = sadd.s32 1, %s12
  $region7: #{bottleneck_forward.6} parent=0 // loop_footer_branch
    %11 = sbr.rel target = $region3
  $region8: #{bottleneck_forward.6} parent=0 // loop_exit
    _

// kernel: bottleneck_forward.5
$region0: #{bottleneck_forward.5}
  #allocation0 [shape = 'u32[]', space=smem, size = 0x4, offset = 0x4, fixed_abs, tag = 'smem constant byte address 0x4 - core index']
  #allocation1 [shape = 'u32[144,128]{1,0:T(1,128)}', space=vmem, size = 0x12000, scoped, tag = 'internal scratch']
  %s0 = inlined_call_operand.vmem [shape: f32[1024,128], index: 0, kind: input, shape index: {}, may-alias: {0,1}]
  %s1 = inlined_call_operand.vmem [shape: f32[1024,128], index: 1, kind: input, shape index: {}, may-alias: {0,1}]
  %s2 = inlined_call_operand.vmem [shape: f32[1024,1], index: 2, kind: input, shape index: {}, may-alias: {2,3}]
  %s3 = inlined_call_operand.vmem [shape: f32[1024,1], index: 3, kind: input, shape index: {}, may-alias: {2,3}]
  %s4 = inlined_call_operand.vmem [shape: f32[768,1], index: 4, kind: input, shape index: {}]
  %s5 = inlined_call_operand.vmem [shape: f32[1152,128], index: 5, kind: input, shape index: {}]
  %s6 = inlined_call_operand.vmem [shape: f32[1,128], index: 6, kind: input, shape index: {}]
  %s7 = inlined_call_operand.vmem [shape: f32[1,128], index: 7, kind: input, shape index: {}]
  %s8 = inlined_call_operand.vmem [shape: f32[768,128], index: 8, kind: output, shape index: {0}]
  %s9 = inlined_call_operand.vmem [shape: f32[3,2,128], index: 9, kind: output, shape index: {1}]
  %10 = xla_tuple %s8, %s9
  %s11 = sld [smem:[#allocation0]]
  $region73: #{bottleneck_forward.5} parent=0
    _
  %s13 = ssub.s32 1, %s11
  %s14 = scalar_select 0, %s13, %s11
  loop: start=0, step=1, limit=5
  $region2: #{bottleneck_forward.5} parent=0 // loop_pre_header
    _
  $region3: #{bottleneck_forward.5} parent=0 // loop_header
    %s16 = sphi 0, %s20
    %p17 = scmp.ge.s32.totalorder %s16, 5
    %s26 = sphi 0, %s28
    %s29 = sphi 0, %s26
    %s30 = sphi 0, %s29
    %s46 = sphi 0, %s30
    %s54 = sphi 0, %s56
    %s57 = sphi 0, %s54
    %s58 = sphi 0, %s57
    %s74 = sphi 0, %s58
    %s80 = sphi 0, %s82
    %s83 = sphi 0, %s80
    %s84 = sphi 0, %s83
    %s100 = sphi 0, %s84
    %s108 = sphi 0, %s110
    %s111 = sphi 0, %s108
    %s112 = sphi 0, %s111
    %s128 = sphi 0, %s112
    %s134 = sphi 0, %s136
    %s137 = sphi 0, %s134
    %s138 = sphi 0, %s137
    %s154 = sphi 0, %s138
    %s158 = sphi 0, %s158
    %s160 = sphi 0, %s158
    %s161 = sphi 0, %s160
    %s175 = sphi 0, %s161
    %s179 = sphi 0, %s179
    %s181 = sphi 0, %s179
    %s182 = sphi 0, %s181
    %s196 = sphi 0, %s182
    %s200 = sphi 0, %s200
    %s202 = sphi 0, %s200
    %s203 = sphi 0, %s202
    %s217 = sphi 0, %s203
    %s223 = sphi 0, %s225
    %s226 = sphi 0, %s223
    %s227 = sphi 0, %s226
    %s243 = sphi 0, %s227
    %s249 = sphi 0, %s251
    %s252 = sphi 0, %s249
    %s253 = sphi 0, %s252
    %s269 = sphi 0, %s253
  $region4: #{bottleneck_forward.5} parent=0 // loop_header_branch
    %19 = sbr.rel (%p17) target = $region8
  $region5: #{bottleneck_forward.5} parent=0 // loop_body
    %s21 = ssub.s32 %s16, 1
    %s22 = ssub.s32 %s16, 2
    %s23 = sadd.s32 %s16, 1
    %s24 = ssub.s32 %s16, %s23
    %p25 = scmp.eq.s32.totalorder %s24, 0
    %s27 = sadd.s32 %s26, 1
    %s28 = scalar_select %p25, %s26, %s27
    %p31 = pneg %p25
    %p32 = scmp.eq.s32.totalorder %s16, 2
    %p33 = por %p31, %p32
    %p34 = scmp.ne.s32.totalorder %s26, %s29
    %p35 = scmp.eq.s32.totalorder %s16, 0
    %p36 = por %p34, %p35
    %p37 = scmp.ne.s32.totalorder %s26, %s29
    %p38 = scmp.eq.s32.totalorder %s21, 2
    %p39 = por %p37, %p38
    %p40 = scmp.ne.s32.totalorder %s29, %s30
    %p41 = scmp.eq.s32.totalorder %s21, 0
    %p42 = por %p40, %p41
    %p43 = scmp.ne.s32.totalorder %s29, %s30
    %p44 = scmp.eq.s32.totalorder %s22, 2
    %p45 = por %p43, %p44
    %p47 = scmp.ne.s32.totalorder %s30, %s46
    %p48 = scmp.eq.s32.totalorder %s22, 0
    %p49 = por %p47, %p48
    %s50 = sadd.s32 %s16, 1
    %s51 = sadd.s32 %s23, 1
    %s52 = ssub.s32 %s50, %s51
    %p53 = scmp.eq.s32.totalorder %s52, 0
    %s55 = sadd.s32 %s54, 1
    %s56 = scalar_select %p53, %s54, %s55
    %p59 = pneg %p53
    %p60 = scmp.eq.s32.totalorder %s16, 2
    %p61 = por %p59, %p60
    %p62 = scmp.ne.s32.totalorder %s54, %s57
    %p63 = scmp.eq.s32.totalorder %s16, 0
    %p64 = por %p62, %p63
    %p65 = scmp.ne.s32.totalorder %s54, %s57
    %p66 = scmp.eq.s32.totalorder %s21, 2
    %p67 = por %p65, %p66
    %p68 = scmp.ne.s32.totalorder %s57, %s58
    %p69 = scmp.eq.s32.totalorder %s21, 0
    %p70 = por %p68, %p69
    %p71 = scmp.ne.s32.totalorder %s57, %s58
    %p72 = scmp.eq.s32.totalorder %s22, 2
    %p73 = por %p71, %p72
    %p75 = scmp.ne.s32.totalorder %s58, %s74
    %p76 = scmp.eq.s32.totalorder %s22, 0
    %p77 = por %p75, %p76
    %s78 = ssub.s32 %s16, %s23
    %p79 = scmp.eq.s32.totalorder %s78, 0
    %s81 = sadd.s32 %s80, 1
    %s82 = scalar_select %p79, %s80, %s81
    %p85 = pneg %p79
    %p86 = scmp.eq.s32.totalorder %s16, 2
    %p87 = por %p85, %p86
    %p88 = scmp.ne.s32.totalorder %s80, %s83
    %p89 = scmp.eq.s32.totalorder %s16, 0
    %p90 = por %p88, %p89
    %p91 = scmp.ne.s32.totalorder %s80, %s83
    %p92 = scmp.eq.s32.totalorder %s21, 2
    %p93 = por %p91, %p92
    %p94 = scmp.ne.s32.totalorder %s83, %s84
    %p95 = scmp.eq.s32.totalorder %s21, 0
    %p96 = por %p94, %p95
    %p97 = scmp.ne.s32.totalorder %s83, %s84
    %p98 = scmp.eq.s32.totalorder %s22, 2
    %p99 = por %p97, %p98
    %p101 = scmp.ne.s32.totalorder %s84, %s100
    %p102 = scmp.eq.s32.totalorder %s22, 0
    %p103 = por %p101, %p102
    %s104 = sadd.s32 %s16, 1
    %s105 = sadd.s32 %s23, 1
    %s106 = ssub.s32 %s104, %s105
    %p107 = scmp.eq.s32.totalorder %s106, 0
    %s109 = sadd.s32 %s108, 1
    %s110 = scalar_select %p107, %s108, %s109
    %p113 = pneg %p107
    %p114 = scmp.eq.s32.totalorder %s16, 2
    %p115 = por %p113, %p114
    %p116 = scmp.ne.s32.totalorder %s108, %s111
    %p117 = scmp.eq.s32.totalorder %s16, 0
    %p118 = por %p116, %p117
    %p119 = scmp.ne.s32.totalorder %s108, %s111
    %p120 = scmp.eq.s32.totalorder %s21, 2
    %p121 = por %p119, %p120
    %p122 = scmp.ne.s32.totalorder %s111, %s112
    %p123 = scmp.eq.s32.totalorder %s21, 0
    %p124 = por %p122, %p123
    %p125 = scmp.ne.s32.totalorder %s111, %s112
    %p126 = scmp.eq.s32.totalorder %s22, 2
    %p127 = por %p125, %p126
    %p129 = scmp.ne.s32.totalorder %s112, %s128
    %p130 = scmp.eq.s32.totalorder %s22, 0
    %p131 = por %p129, %p130
    %s132 = ssub.s32 %s16, %s23
    %p133 = scmp.eq.s32.totalorder %s132, 0
    %s135 = sadd.s32 %s134, 1
    %s136 = scalar_select %p133, %s134, %s135
    %p139 = pneg %p133
    %p140 = scmp.eq.s32.totalorder %s16, 2
    %p141 = por %p139, %p140
    %p142 = scmp.ne.s32.totalorder %s134, %s137
    %p143 = scmp.eq.s32.totalorder %s16, 0
    %p144 = por %p142, %p143
    %p145 = scmp.ne.s32.totalorder %s134, %s137
    %p146 = scmp.eq.s32.totalorder %s21, 2
    %p147 = por %p145, %p146
    %p148 = scmp.ne.s32.totalorder %s137, %s138
    %p149 = scmp.eq.s32.totalorder %s21, 0
    %p150 = por %p148, %p149
    %p151 = scmp.ne.s32.totalorder %s137, %s138
    %p152 = scmp.eq.s32.totalorder %s22, 2
    %p153 = por %p151, %p152
    %p155 = scmp.ne.s32.totalorder %s138, %s154
    %p156 = scmp.eq.s32.totalorder %s22, 0
    %p157 = por %p155, %p156
    %s159 = sadd.s32 %s158, 1
    %p162 = scmp.eq.s32.totalorder %s16, 2
    %p163 = scmp.ne.s32.totalorder %s158, %s160
    %p164 = scmp.eq.s32.totalorder %s16, 0
    %p165 = por %p163, %p164
    %p166 = scmp.ne.s32.totalorder %s158, %s160
    %p167 = scmp.eq.s32.totalorder %s21, 2
    %p168 = por %p166, %p167
    %p169 = scmp.ne.s32.totalorder %s160, %s161
    %p170 = scmp.eq.s32.totalorder %s21, 0
    %p171 = por %p169, %p170
    %p172 = scmp.ne.s32.totalorder %s160, %s161
    %p173 = scmp.eq.s32.totalorder %s22, 2
    %p174 = por %p172, %p173
    %p176 = scmp.ne.s32.totalorder %s161, %s175
    %p177 = scmp.eq.s32.totalorder %s22, 0
    %p178 = por %p176, %p177
    %s180 = sadd.s32 %s179, 1
    %p183 = scmp.eq.s32.totalorder %s16, 2
    %p184 = scmp.ne.s32.totalorder %s179, %s181
    %p185 = scmp.eq.s32.totalorder %s16, 0
    %p186 = por %p184, %p185
    %p187 = scmp.ne.s32.totalorder %s179, %s181
    %p188 = scmp.eq.s32.totalorder %s21, 2
    %p189 = por %p187, %p188
    %p190 = scmp.ne.s32.totalorder %s181, %s182
    %p191 = scmp.eq.s32.totalorder %s21, 0
    %p192 = por %p190, %p191
    %p193 = scmp.ne.s32.totalorder %s181, %s182
    %p194 = scmp.eq.s32.totalorder %s22, 2
    %p195 = por %p193, %p194
    %p197 = scmp.ne.s32.totalorder %s182, %s196
    %p198 = scmp.eq.s32.totalorder %s22, 0
    %p199 = por %p197, %p198
    %s201 = sadd.s32 %s200, 1
    %p204 = scmp.eq.s32.totalorder %s16, 2
    %p205 = scmp.ne.s32.totalorder %s200, %s202
    %p206 = scmp.eq.s32.totalorder %s16, 0
    %p207 = por %p205, %p206
    %p208 = scmp.ne.s32.totalorder %s200, %s202
    %p209 = scmp.eq.s32.totalorder %s21, 2
    %p210 = por %p208, %p209
    %p211 = scmp.ne.s32.totalorder %s202, %s203
    %p212 = scmp.eq.s32.totalorder %s21, 0
    %p213 = por %p211, %p212
    %p214 = scmp.ne.s32.totalorder %s202, %s203
    %p215 = scmp.eq.s32.totalorder %s22, 2
    %p216 = por %p214, %p215
    %p218 = scmp.ne.s32.totalorder %s203, %s217
    %p219 = scmp.eq.s32.totalorder %s22, 0
    %p220 = por %p218, %p219
    %s221 = ssub.s32 %s16, %s23
    %p222 = scmp.eq.s32.totalorder %s221, 0
    %s224 = sadd.s32 %s223, 1
    %s225 = scalar_select %p222, %s223, %s224
    %p228 = pneg %p222
    %p229 = scmp.eq.s32.totalorder %s16, 2
    %p230 = por %p228, %p229
    %p231 = scmp.ne.s32.totalorder %s223, %s226
    %p232 = scmp.eq.s32.totalorder %s16, 0
    %p233 = por %p231, %p232
    %p234 = scmp.ne.s32.totalorder %s223, %s226
    %p235 = scmp.eq.s32.totalorder %s21, 2
    %p236 = por %p234, %p235
    %p237 = scmp.ne.s32.totalorder %s226, %s227
    %p238 = scmp.eq.s32.totalorder %s21, 0
    %p239 = por %p237, %p238
    %p240 = scmp.ne.s32.totalorder %s226, %s227
    %p241 = scmp.eq.s32.totalorder %s22, 2
    %p242 = por %p240, %p241
    %p244 = scmp.ne.s32.totalorder %s227, %s243
    %p245 = scmp.eq.s32.totalorder %s22, 0
    %p246 = por %p244, %p245
    %s247 = ssub.s32 %s16, %s23
    %p248 = scmp.eq.s32.totalorder %s247, 0
    %s250 = sadd.s32 %s249, 1
    %s251 = scalar_select %p248, %s249, %s250
    %p254 = pneg %p248
    %p255 = scmp.eq.s32.totalorder %s16, 2
    %p256 = por %p254, %p255
    %p257 = scmp.ne.s32.totalorder %s249, %s252
    %p258 = scmp.eq.s32.totalorder %s16, 0
    %p259 = por %p257, %p258
    %p260 = scmp.ne.s32.totalorder %s249, %s252
    %p261 = scmp.eq.s32.totalorder %s21, 2
    %p262 = por %p260, %p261
    %p263 = scmp.ne.s32.totalorder %s252, %s253
    %p264 = scmp.eq.s32.totalorder %s21, 0
    %p265 = por %p263, %p264
    %p266 = scmp.ne.s32.totalorder %s252, %s253
    %p267 = scmp.eq.s32.totalorder %s22, 2
    %p268 = por %p266, %p267
    %p270 = scmp.ne.s32.totalorder %s253, %s269
    %p271 = scmp.eq.s32.totalorder %s22, 0
    %p272 = por %p270, %p271
    %p273 = scmp.le.s32.totalorder 1, %s16
    %p274 = scmp.lt.s32.totalorder %s16, 4
    %p275 = pnand %p273, %p274
    %p276 = pneg %p275
    // Predicated region
    $region9: #{bottleneck_forward.5} parent=5 // pred_check
      _
    $region10: #{bottleneck_forward.5} parent=5 // pred_check_branch
      %278 = sbr.rel (%p275) target = $region12
    $region11: #{bottleneck_forward.5} parent=5 // pred_region
      %s279 = ssub.s32 %s16, 1
      // Predicated region
      $region13: #{bottleneck_forward.5} parent=11 // pred_check
        %p280 = pneg %p171
      $region14: #{bottleneck_forward.5} parent=11 // pred_check_branch
        %282 = sbr.rel (%p280) target = $region16
      $region15: #{bottleneck_forward.5} parent=11 // pred_region
        _
      $region16: #{bottleneck_forward.5} parent=11 // pred_fallthru
        _
      // Predicated region
      $region17: #{bottleneck_forward.5} parent=11 // pred_check
        %p283 = pneg %p192
      $region18: #{bottleneck_forward.5} parent=11 // pred_check_branch
        %285 = sbr.rel (%p283) target = $region20
      $region19: #{bottleneck_forward.5} parent=11 // pred_region
        _
      $region20: #{bottleneck_forward.5} parent=11 // pred_fallthru
        _
      // Predicated region
      $region21: #{bottleneck_forward.5} parent=11 // pred_check
        %p286 = pneg %p213
      $region22: #{bottleneck_forward.5} parent=11 // pred_check_branch
        %288 = sbr.rel (%p286) target = $region24
      $region23: #{bottleneck_forward.5} parent=11 // pred_region
        _
      $region24: #{bottleneck_forward.5} parent=11 // pred_fallthru
        _
    $region12: #{bottleneck_forward.5} parent=5 // pred_fallthru
      _
    %p289 = scmp.lt.s32.totalorder %s16, 3
    // Predicated region
    $region25: #{bottleneck_forward.5} parent=5 // pred_check
      %p290 = pneg %p289
    $region26: #{bottleneck_forward.5} parent=5 // pred_check_branch
      %292 = sbr.rel (%p290) target = $region28
    $region27: #{bottleneck_forward.5} parent=5 // pred_region
      // Predicated region
      $region29: #{bottleneck_forward.5} parent=27 // pred_check
        %p293 = pneg %p36
      $region30: #{bottleneck_forward.5} parent=27 // pred_check_branch
        %295 = sbr.rel (%p293) target = $region32
      $region31: #{bottleneck_forward.5} parent=27 // pred_region
        %s296 = smul.u32 32, %s16
        %p297 = scmp.lt.s32.totalorder %s296, 127
        %s298 = scalar_select %p297, %s296, 127
        %s299 = smul.addr %s298, 8
        %s300 = scalar_lea.vmem %s0, %s299
        %s301 = smul.u32 32, %s16
      $region32: #{bottleneck_forward.5} parent=27 // pred_fallthru
        _
      // Predicated region
      $region33: #{bottleneck_forward.5} parent=27 // pred_check
        %p302 = pneg %p64
      $region34: #{bottleneck_forward.5} parent=27 // pred_check_branch
        %304 = sbr.rel (%p302) target = $region36
      $region35: #{bottleneck_forward.5} parent=27 // pred_region
        %s305 = sadd.s32 %s16, 1
        %s306 = smul.u32 32, %s305
        %p307 = scmp.lt.s32.totalorder %s306, 127
        %s308 = scalar_select %p307, %s306, 127
        %s309 = smul.addr %s308, 8
        %s310 = scalar_lea.vmem %s1, %s309
        %s311 = sadd.s32 %s16, 1
        %s312 = smul.u32 32, %s311
      $region36: #{bottleneck_forward.5} parent=27 // pred_fallthru
        _
      // Predicated region
      $region37: #{bottleneck_forward.5} parent=27 // pred_check
        %p313 = pneg %p90
      $region38: #{bottleneck_forward.5} parent=27 // pred_check_branch
        %315 = sbr.rel (%p313) target = $region40
      $region39: #{bottleneck_forward.5} parent=27 // pred_region
        %s316 = smul.u32 32, %s16
        %p317 = scmp.lt.s32.totalorder %s316, 127
        %s318 = scalar_select %p317, %s316, 127
        %s319 = smul.addr %s318, 8
        %s320 = scalar_lea.vmem %s2, %s319
        %s321 = smul.u32 32, %s16
      $region40: #{bottleneck_forward.5} parent=27 // pred_fallthru
        _
      // Predicated region
      $region41: #{bottleneck_forward.5} parent=27 // pred_check
        %p322 = pneg %p118
      $region42: #{bottleneck_forward.5} parent=27 // pred_check_branch
        %324 = sbr.rel (%p322) target = $region44
      $region43: #{bottleneck_forward.5} parent=27 // pred_region
        %s325 = sadd.s32 %s16, 1
        %s326 = smul.u32 32, %s325
        %p327 = scmp.lt.s32.totalorder %s326, 127
        %s328 = scalar_select %p327, %s326, 127
        %s329 = smul.addr %s328, 8
        %s330 = scalar_lea.vmem %s3, %s329
        %s331 = sadd.s32 %s16, 1
        %s332 = smul.u32 32, %s331
      $region44: #{bottleneck_forward.5} parent=27 // pred_fallthru
        _
      // Predicated region
      $region45: #{bottleneck_forward.5} parent=27 // pred_check
        %p333 = pneg %p144
      $region46: #{bottleneck_forward.5} parent=27 // pred_check_branch
        %335 = sbr.rel (%p333) target = $region48
      $region47: #{bottleneck_forward.5} parent=27 // pred_region
        %s336 = smul.u32 32, %s16
        %p337 = scmp.lt.s32.totalorder %s336, 95
        %s338 = scalar_select %p337, %s336, 95
        %s339 = smul.addr %s338, 8
        %s340 = scalar_lea.vmem %s4, %s339
        %s341 = smul.u32 32, %s16
      $region48: #{bottleneck_forward.5} parent=27 // pred_fallthru
        _
    $region28: #{bottleneck_forward.5} parent=5 // pred_fallthru
      _
    %p342 = scmp.le.s32.totalorder 1, %s16
    %p343 = scmp.lt.s32.totalorder %s16, 4
    %p344 = pnand %p342, %p343
    %p345 = pneg %p344
    // Predicated region
    $region49: #{bottleneck_forward.5} parent=5 // pred_check
      _
    $region50: #{bottleneck_forward.5} parent=5 // pred_check_branch
      %347 = sbr.rel (%p344) target = $region52
    $region51: #{bottleneck_forward.5} parent=5 // pred_region
      %s348 = ssub.s32 %s16, 1
      %s349 = smul.u32 32, %s21
      %p350 = scmp.lt.s32.totalorder %s349, 127
      %s351 = scalar_select %p350, %s349, 127
      %s352 = smul.addr %s351, 8
      %s353 = scalar_lea.vmem %s0, %s352
      %p354 = pneg %p42
      %p355 = pneg %p39
      %s356 = sadd.s32 %s21, 1
      %s357 = smul.u32 32, %s356
      %p358 = scmp.lt.s32.totalorder %s357, 127
      %s359 = scalar_select %p358, %s357, 127
      %s360 = smul.addr %s359, 8
      %s361 = scalar_lea.vmem %s1, %s360
      %p362 = pneg %p70
      %p363 = pneg %p67
      %s364 = smul.u32 32, %s21
      %p365 = scmp.lt.s32.totalorder %s364, 127
      %s366 = scalar_select %p365, %s364, 127
      %s367 = smul.addr %s366, 8
      %s368 = scalar_lea.vmem %s2, %s367
      %p369 = pneg %p96
      %p370 = pneg %p93
      %s371 = sadd.s32 %s21, 1
      %s372 = smul.u32 32, %s371
      %p373 = scmp.lt.s32.totalorder %s372, 127
      %s374 = scalar_select %p373, %s372, 127
      %s375 = smul.addr %s374, 8
      %s376 = scalar_lea.vmem %s3, %s375
      %p377 = pneg %p124
      %p378 = pneg %p121
      %s379 = smul.u32 32, %s21
      %p380 = scmp.lt.s32.totalorder %s379, 95
      %s381 = scalar_select %p380, %s379, 95
      %s382 = smul.addr %s381, 8
      %s383 = scalar_lea.vmem %s4, %s382
      %p384 = pneg %p150
      %p385 = pneg %p147
      %p386 = pneg %p171
      %p387 = pneg %p168
      %p388 = pneg %p192
      %p389 = pneg %p189
      %p390 = pneg %p213
      %p391 = pneg %p210
      %p392 = pneg %p239
      %p393 = pneg %p236
      %s394 = smul.u32 32, %s21
      %p395 = scmp.lt.s32.totalorder %s394, 95
      %s396 = scalar_select %p395, %s394, 95
      %s397 = smul.addr %s396, 8
      %s398 = scalar_lea.vmem %s8, %s397
      %p399 = pneg %p265
      %p400 = pneg %p262
      %p401 = scmp.lt.s32.totalorder %s21, 2
      %s402 = scalar_select %p401, %s21, 2
      %s403 = smul.addr %s402, 2
      %s404 = scalar_lea.vmem %s9, %s403
      %s405 = smul.u32 32, %s21
      %p406 = scmp.lt.s32.totalorder %s405, 127
      %s407 = scalar_select %p406, %s405, 127
      %s408 = smul.addr %s407, 8
      %s409 = scalar_lea.vmem %s0, %s408
      %s410 = smul.u32 32, %s21
      %s411 = sadd.s32 %s21, 1
      %s412 = smul.u32 32, %s411
      %p413 = scmp.lt.s32.totalorder %s412, 127
      %s414 = scalar_select %p413, %s412, 127
      %s415 = smul.addr %s414, 8
      %s416 = scalar_lea.vmem %s1, %s415
      %s417 = sadd.s32 %s21, 1
      %s418 = smul.u32 32, %s417
      %s419 = smul.u32 32, %s21
      %p420 = scmp.lt.s32.totalorder %s419, 127
      %s421 = scalar_select %p420, %s419, 127
      %s422 = smul.addr %s421, 8
      %s423 = scalar_lea.vmem %s2, %s422
      %s424 = smul.u32 32, %s21
      %s425 = sadd.s32 %s21, 1
      %s426 = smul.u32 32, %s425
      %p427 = scmp.lt.s32.totalorder %s426, 127
      %s428 = scalar_select %p427, %s426, 127
      %s429 = smul.addr %s428, 8
      %s430 = scalar_lea.vmem %s3, %s429
      %s431 = sadd.s32 %s21, 1
      %s432 = smul.u32 32, %s431
      %s433 = smul.u32 32, %s21
      %p434 = scmp.lt.s32.totalorder %s433, 95
      %s435 = scalar_select %p434, %s433, 95
      %s436 = smul.addr %s435, 8
      %s437 = scalar_lea.vmem %s4, %s436
      %s438 = smul.u32 32, %s21
      %s439 = smul.u32 32, %s21
      %p440 = scmp.lt.s32.totalorder %s439, 95
      %s441 = scalar_select %p440, %s439, 95
      %s442 = smul.addr %s441, 8
      %s443 = scalar_lea.vmem %s8, %s442
      %s444 = smul.u32 32, %s21
      %p445 = scmp.lt.s32.totalorder %s21, 2
      %s446 = scalar_select %p445, %s21, 2
      %s447 = smul.addr %s446, 2
      %s448 = scalar_lea.vmem %s9, %s447
      %v450 = vld [vmem:[%s409] sm:$0xff]
      %v451 = vld [vmem:[%s409 + $0x8] sm:$0xff]
      %v452 = vld [vmem:[%s409 + $0x10] sm:$0xff]
      %v453 = vld [vmem:[%s409 + $0x18] sm:$0xff]
      %v454 = vld [vmem:[%s409 + $0x20] sm:$0xff]
      %v455 = vld [vmem:[%s409 + $0x28] sm:$0xff]
      %v456 = vld [vmem:[%s409 + $0x30] sm:$0xff]
      %v457 = vld [vmem:[%s409 + $0x38] sm:$0xff]
      %v458 = vld [vmem:[%s409 + $0x40] sm:$0xff]
      %v459 = vld [vmem:[%s409 + $0x48] sm:$0xff]
      %v460 = vld [vmem:[%s409 + $0x50] sm:$0xff]
      %v461 = vld [vmem:[%s409 + $0x58] sm:$0xff]
      %v462 = vld [vmem:[%s409 + $0x60] sm:$0xff]
      %v463 = vld [vmem:[%s409 + $0x68] sm:$0xff]
      %v464 = vld [vmem:[%s409 + $0x70] sm:$0xff]
      %v465 = vld [vmem:[%s409 + $0x78] sm:$0xff]
      %v466 = vld [vmem:[%s409 + $0x80] sm:$0xff]
      %v467 = vld [vmem:[%s409 + $0x88] sm:$0xff]
      %v468 = vld [vmem:[%s409 + $0x90] sm:$0xff]
      %v469 = vld [vmem:[%s409 + $0x98] sm:$0xff]
      %v470 = vld [vmem:[%s409 + $0xa0] sm:$0xff]
      %v471 = vld [vmem:[%s409 + $0xa8] sm:$0xff]
      %v472 = vld [vmem:[%s409 + $0xb0] sm:$0xff]
      %v473 = vld [vmem:[%s409 + $0xb8] sm:$0xff]
      %v474 = vld [vmem:[%s409 + $0xc0] sm:$0xff]
      %v475 = vld [vmem:[%s409 + $0xc8] sm:$0xff]
      %v476 = vld [vmem:[%s409 + $0xd0] sm:$0xff]
      %v477 = vld [vmem:[%s409 + $0xd8] sm:$0xff]
      %v478 = vld [vmem:[%s409 + $0xe0] sm:$0xff]
      %v479 = vld [vmem:[%s409 + $0xe8] sm:$0xff]
      %v480 = vld [vmem:[%s409 + $0xf0] sm:$0xff]
      %v481 = vld [vmem:[%s409 + $0xf8] sm:$0xff]
      %v482 = vld [vmem:[%s416] sm:$0xff]
      %v483 = vld [vmem:[%s416 + $0x8] sm:$0xff]
      %v484 = vld [vmem:[%s416 + $0x10] sm:$0xff]
      %v485 = vld [vmem:[%s416 + $0x18] sm:$0xff]
      %v486 = vld [vmem:[%s416 + $0x20] sm:$0xff]
      %v487 = vld [vmem:[%s423] sm:$0xff]
      %v488 = vld [vmem:[%s423 + $0x8] sm:$0xff]
      %v489 = vld [vmem:[%s423 + $0x10] sm:$0xff]
      %v490 = vld [vmem:[%s423 + $0x18] sm:$0xff]
      %v491 = vld [vmem:[%s423 + $0x20] sm:$0xff]
      %v492 = vld [vmem:[%s423 + $0x28] sm:$0xff]
      %v493 = vld [vmem:[%s423 + $0x30] sm:$0xff]
      %v494 = vld [vmem:[%s423 + $0x38] sm:$0xff]
      %v495 = vld [vmem:[%s423 + $0x40] sm:$0xff]
      %v496 = vld [vmem:[%s423 + $0x48] sm:$0xff]
      %v497 = vld [vmem:[%s423 + $0x50] sm:$0xff]
      %v498 = vld [vmem:[%s423 + $0x58] sm:$0xff]
      %v499 = vld [vmem:[%s423 + $0x60] sm:$0xff]
      %v500 = vld [vmem:[%s423 + $0x68] sm:$0xff]
      %v501 = vld [vmem:[%s423 + $0x70] sm:$0xff]
      %v502 = vld [vmem:[%s423 + $0x78] sm:$0xff]
      %v503 = vld [vmem:[%s423 + $0x80] sm:$0xff]
      %v504 = vld [vmem:[%s423 + $0x88] sm:$0xff]
      %v505 = vld [vmem:[%s423 + $0x90] sm:$0xff]
      %v506 = vld [vmem:[%s423 + $0x98] sm:$0xff]
      %v507 = vld [vmem:[%s423 + $0xa0] sm:$0xff]
      %v508 = vld [vmem:[%s423 + $0xa8] sm:$0xff]
      %v509 = vld [vmem:[%s423 + $0xb0] sm:$0xff]
      %v510 = vld [vmem:[%s423 + $0xb8] sm:$0xff]
      %v511 = vld [vmem:[%s423 + $0xc0] sm:$0xff]
      %v512 = vld [vmem:[%s423 + $0xc8] sm:$0xff]
      %v513 = vld [vmem:[%s423 + $0xd0] sm:$0xff]
      %v514 = vld [vmem:[%s423 + $0xd8] sm:$0xff]
      %v515 = vld [vmem:[%s423 + $0xe0] sm:$0xff]
      %v516 = vld [vmem:[%s423 + $0xe8] sm:$0xff]
      %v517 = vld [vmem:[%s423 + $0xf0] sm:$0xff]
      %v518 = vld [vmem:[%s423 + $0xf8] sm:$0xff]
      %v519 = vld [vmem:[%s430] sm:$0xff]
      %v520 = vld [vmem:[%s430 + $0x8] sm:$0xff]
      %v521 = vld [vmem:[%s430 + $0x10] sm:$0xff]
      %v522 = vld [vmem:[%s430 + $0x18] sm:$0xff]
      %v523 = vld [vmem:[%s430 + $0x20] sm:$0xff]
      %v524 = vld [vmem:[%s6] sm:$0x1]
      %v526 = vlaneseq
      %v527 = vshrl.u32 %v526, 7
      %v528 = vsub.s32 0, %v527
      %v529 = vrot.slane %v524, %v528
      %v531 = vmul.f32 %v450, %v529
      %v532 = vmul.f32 %v451, %v529
      %v533 = vmul.f32 %v452, %v529
      %v534 = vmul.f32 %v453, %v529
      %v535 = vmul.f32 %v454, %v529
      %v536 = vmul.f32 %v455, %v529
      %v537 = vmul.f32 %v456, %v529
      %v538 = vmul.f32 %v457, %v529
      %v539 = vmul.f32 %v458, %v529
      %v540 = vmul.f32 %v459, %v529
      %v541 = vmul.f32 %v460, %v529
      %v542 = vmul.f32 %v461, %v529
      %v543 = vmul.f32 %v462, %v529
      %v544 = vmul.f32 %v463, %v529
      %v545 = vmul.f32 %v464, %v529
      %v546 = vmul.f32 %v465, %v529
      %v547 = vmul.f32 %v466, %v529
      %v548 = vmul.f32 %v467, %v529
      %v549 = vmul.f32 %v468, %v529
      %v550 = vmul.f32 %v469, %v529
      %v551 = vmul.f32 %v470, %v529
      %v552 = vmul.f32 %v471, %v529
      %v553 = vmul.f32 %v472, %v529
      %v554 = vmul.f32 %v473, %v529
      %v555 = vmul.f32 %v474, %v529
      %v556 = vmul.f32 %v475, %v529
      %v557 = vmul.f32 %v476, %v529
      %v558 = vmul.f32 %v477, %v529
      %v559 = vmul.f32 %v478, %v529
      %v560 = vmul.f32 %v479, %v529
      %v561 = vmul.f32 %v480, %v529
      %v562 = vmul.f32 %v481, %v529
      %v563 = vmul.f32 %v482, %v529
      %v564 = vmul.f32 %v483, %v529
      %v565 = vmul.f32 %v484, %v529
      %v566 = vmul.f32 %v485, %v529
      %v567 = vmul.f32 %v486, %v529
      %v568 = vld [vmem:[%s7] sm:$0x1]
      %v570 = vlaneseq
      %v571 = vshrl.u32 %v570, 7
      %v572 = vsub.s32 0, %v571
      %v573 = vrot.slane %v568, %v572
      %v575 = vadd.f32 %v531, %v573
      %v576 = vadd.f32 %v532, %v573
      %v577 = vadd.f32 %v533, %v573
      %v578 = vadd.f32 %v534, %v573
      %v579 = vadd.f32 %v535, %v573
      %v580 = vadd.f32 %v536, %v573
      %v581 = vadd.f32 %v537, %v573
      %v582 = vadd.f32 %v538, %v573
      %v583 = vadd.f32 %v539, %v573
      %v584 = vadd.f32 %v540, %v573
      %v585 = vadd.f32 %v541, %v573
      %v586 = vadd.f32 %v542, %v573
      %v587 = vadd.f32 %v543, %v573
      %v588 = vadd.f32 %v544, %v573
      %v589 = vadd.f32 %v545, %v573
      %v590 = vadd.f32 %v546, %v573
      %v591 = vadd.f32 %v547, %v573
      %v592 = vadd.f32 %v548, %v573
      %v593 = vadd.f32 %v549, %v573
      %v594 = vadd.f32 %v550, %v573
      %v595 = vadd.f32 %v551, %v573
      %v596 = vadd.f32 %v552, %v573
      %v597 = vadd.f32 %v553, %v573
      %v598 = vadd.f32 %v554, %v573
      %v599 = vadd.f32 %v555, %v573
      %v600 = vadd.f32 %v556, %v573
      %v601 = vadd.f32 %v557, %v573
      %v602 = vadd.f32 %v558, %v573
      %v603 = vadd.f32 %v559, %v573
      %v604 = vadd.f32 %v560, %v573
      %v605 = vadd.f32 %v561, %v573
      %v606 = vadd.f32 %v562, %v573
      %v607 = vadd.f32 %v563, %v573
      %v608 = vadd.f32 %v564, %v573
      %v609 = vadd.f32 %v565, %v573
      %v610 = vadd.f32 %v566, %v573
      %v611 = vadd.f32 %v567, %v573
      %v612 = vmax.f32 %v575, 0.0
      %v613 = vmax.f32 %v576, 0.0
      %v614 = vmax.f32 %v577, 0.0
      %v615 = vmax.f32 %v578, 0.0
      %v616 = vmax.f32 %v579, 0.0
      %v617 = vmax.f32 %v580, 0.0
      %v618 = vmax.f32 %v581, 0.0
      %v619 = vmax.f32 %v582, 0.0
      %v620 = vmax.f32 %v583, 0.0
      %v621 = vmax.f32 %v584, 0.0
      %v622 = vmax.f32 %v585, 0.0
      %v623 = vmax.f32 %v586, 0.0
      %v624 = vmax.f32 %v587, 0.0
      %v625 = vmax.f32 %v588, 0.0
      %v626 = vmax.f32 %v589, 0.0
      %v627 = vmax.f32 %v590, 0.0
      %v628 = vmax.f32 %v591, 0.0
      %v629 = vmax.f32 %v592, 0.0
      %v630 = vmax.f32 %v593, 0.0
      %v631 = vmax.f32 %v594, 0.0
      %v632 = vmax.f32 %v595, 0.0
      %v633 = vmax.f32 %v596, 0.0
      %v634 = vmax.f32 %v597, 0.0
      %v635 = vmax.f32 %v598, 0.0
      %v636 = vmax.f32 %v599, 0.0
      %v637 = vmax.f32 %v600, 0.0
      %v638 = vmax.f32 %v601, 0.0
      %v639 = vmax.f32 %v602, 0.0
      %v640 = vmax.f32 %v603, 0.0
      %v641 = vmax.f32 %v604, 0.0
      %v642 = vmax.f32 %v605, 0.0
      %v643 = vmax.f32 %v606, 0.0
      %v644 = vmax.f32 %v607, 0.0
      %v645 = vmax.f32 %v608, 0.0
      %v646 = vmax.f32 %v609, 0.0
      %v647 = vmax.f32 %v610, 0.0
      %v648 = vmax.f32 %v611, 0.0
      %650 = vset.pattern.permute.xlu0 0
      %651 = vperm.xlu0 %650, %v487
      %v652 = vpop.permute.xlu0 %651
      %655 = vset.pattern.permute.xlu0 0
      %656 = vperm.xlu0 %655, %v488
      %v657 = vpop.permute.xlu0 %656
      %660 = vset.pattern.permute.xlu0 0
      %661 = vperm.xlu0 %660, %v489
      %v662 = vpop.permute.xlu0 %661
      %665 = vset.pattern.permute.xlu0 0
      %666 = vperm.xlu0 %665, %v490
      %v667 = vpop.permute.xlu0 %666
      %670 = vset.pattern.permute.xlu0 0
      %671 = vperm.xlu0 %670, %v491
      %v672 = vpop.permute.xlu0 %671
      %675 = vset.pattern.permute.xlu0 0
      %676 = vperm.xlu0 %675, %v492
      %v677 = vpop.permute.xlu0 %676
      %680 = vset.pattern.permute.xlu0 0
      %681 = vperm.xlu0 %680, %v493
      %v682 = vpop.permute.xlu0 %681
      %685 = vset.pattern.permute.xlu0 0
      %686 = vperm.xlu0 %685, %v494
      %v687 = vpop.permute.xlu0 %686
      %690 = vset.pattern.permute.xlu0 0
      %691 = vperm.xlu0 %690, %v495
      %v692 = vpop.permute.xlu0 %691
      %695 = vset.pattern.permute.xlu0 0
      %696 = vperm.xlu0 %695, %v496
      %v697 = vpop.permute.xlu0 %696
      %700 = vset.pattern.permute.xlu0 0
      %701 = vperm.xlu0 %700, %v497
      %v702 = vpop.permute.xlu0 %701
      %705 = vset.pattern.permute.xlu0 0
      %706 = vperm.xlu0 %705, %v498
      %v707 = vpop.permute.xlu0 %706
      %710 = vset.pattern.permute.xlu0 0
      %711 = vperm.xlu0 %710, %v499
      %v712 = vpop.permute.xlu0 %711
      %715 = vset.pattern.permute.xlu0 0
      %716 = vperm.xlu0 %715, %v500
      %v717 = vpop.permute.xlu0 %716
      %720 = vset.pattern.permute.xlu0 0
      %721 = vperm.xlu0 %720, %v501
      %v722 = vpop.permute.xlu0 %721
      %725 = vset.pattern.permute.xlu0 0
      %726 = vperm.xlu0 %725, %v502
      %v727 = vpop.permute.xlu0 %726
      %730 = vset.pattern.permute.xlu0 0
      %731 = vperm.xlu0 %730, %v503
      %v732 = vpop.permute.xlu0 %731
      %735 = vset.pattern.permute.xlu0 0
      %736 = vperm.xlu0 %735, %v504
      %v737 = vpop.permute.xlu0 %736
      %740 = vset.pattern.permute.xlu0 0
      %741 = vperm.xlu0 %740, %v505
      %v742 = vpop.permute.xlu0 %741
      %745 = vset.pattern.permute.xlu0 0
      %746 = vperm.xlu0 %745, %v506
      %v747 = vpop.permute.xlu0 %746
      %750 = vset.pattern.permute.xlu0 0
      %751 = vperm.xlu0 %750, %v507
      %v752 = vpop.permute.xlu0 %751
      %755 = vset.pattern.permute.xlu0 0
      %756 = vperm.xlu0 %755, %v508
      %v757 = vpop.permute.xlu0 %756
      %760 = vset.pattern.permute.xlu0 0
      %761 = vperm.xlu0 %760, %v509
      %v762 = vpop.permute.xlu0 %761
      %765 = vset.pattern.permute.xlu0 0
      %766 = vperm.xlu0 %765, %v510
      %v767 = vpop.permute.xlu0 %766
      %770 = vset.pattern.permute.xlu0 0
      %771 = vperm.xlu0 %770, %v511
      %v772 = vpop.permute.xlu0 %771
      %775 = vset.pattern.permute.xlu0 0
      %776 = vperm.xlu0 %775, %v512
      %v777 = vpop.permute.xlu0 %776
      %780 = vset.pattern.permute.xlu0 0
      %781 = vperm.xlu0 %780, %v513
      %v782 = vpop.permute.xlu0 %781
      %785 = vset.pattern.permute.xlu0 0
      %786 = vperm.xlu0 %785, %v514
      %v787 = vpop.permute.xlu0 %786
      %790 = vset.pattern.permute.xlu0 0
      %791 = vperm.xlu0 %790, %v515
      %v792 = vpop.permute.xlu0 %791
      %795 = vset.pattern.permute.xlu0 0
      %796 = vperm.xlu0 %795, %v516
      %v797 = vpop.permute.xlu0 %796
      %800 = vset.pattern.permute.xlu0 0
      %801 = vperm.xlu0 %800, %v517
      %v802 = vpop.permute.xlu0 %801
      %805 = vset.pattern.permute.xlu0 0
      %806 = vperm.xlu0 %805, %v518
      %v807 = vpop.permute.xlu0 %806
      %810 = vset.pattern.permute.xlu0 0
      %811 = vperm.xlu0 %810, %v519
      %v812 = vpop.permute.xlu0 %811
      %815 = vset.pattern.permute.xlu0 0
      %816 = vperm.xlu0 %815, %v520
      %v817 = vpop.permute.xlu0 %816
      %820 = vset.pattern.permute.xlu0 0
      %821 = vperm.xlu0 %820, %v521
      %v822 = vpop.permute.xlu0 %821
      %825 = vset.pattern.permute.xlu0 0
      %826 = vperm.xlu0 %825, %v522
      %v827 = vpop.permute.xlu0 %826
      %830 = vset.pattern.permute.xlu0 0
      %831 = vperm.xlu0 %830, %v523
      %v832 = vpop.permute.xlu0 %831
      %v834 = vmul.f32 %v612, %v652
      %v835 = vmul.f32 %v613, %v657
      %v836 = vmul.f32 %v614, %v662
      %v837 = vmul.f32 %v615, %v667
      %v838 = vmul.f32 %v616, %v672
      %v839 = vmul.f32 %v617, %v677
      %v840 = vmul.f32 %v618, %v682
      %v841 = vmul.f32 %v619, %v687
      %v842 = vmul.f32 %v620, %v692
      %v843 = vmul.f32 %v621, %v697
      %v844 = vmul.f32 %v622, %v702
      %v845 = vmul.f32 %v623, %v707
      %v846 = vmul.f32 %v624, %v712
      %v847 = vmul.f32 %v625, %v717
      %v848 = vmul.f32 %v626, %v722
      %v849 = vmul.f32 %v627, %v727
      %v850 = vmul.f32 %v628, %v732
      %v851 = vmul.f32 %v629, %v737
      %v852 = vmul.f32 %v630, %v742
      %v853 = vmul.f32 %v631, %v747
      %v854 = vmul.f32 %v632, %v752
      %v855 = vmul.f32 %v633, %v757
      %v856 = vmul.f32 %v634, %v762
      %v857 = vmul.f32 %v635, %v767
      %v858 = vmul.f32 %v636, %v772
      %v859 = vmul.f32 %v637, %v777
      %v860 = vmul.f32 %v638, %v782
      %v861 = vmul.f32 %v639, %v787
      %v862 = vmul.f32 %v640, %v792
      %v863 = vmul.f32 %v641, %v797
      %v864 = vmul.f32 %v642, %v802
      %v865 = vmul.f32 %v643, %v807
      %v866 = vmul.f32 %v644, %v812
      %v867 = vmul.f32 %v645, %v817
      %v868 = vmul.f32 %v646, %v822
      %v869 = vmul.f32 %v647, %v827
      %v870 = vmul.f32 %v648, %v832
      %v871 = vpack.c.bf16 %v835, %v834
      %v872 = vpack.c.bf16 %v837, %v836
      %v873 = vpack.c.bf16 %v839, %v838
      %v874 = vpack.c.bf16 %v841, %v840
      %v875 = vpack.c.bf16 %v843, %v842
      %v876 = vpack.c.bf16 %v845, %v844
      %v877 = vpack.c.bf16 %v847, %v846
      %v878 = vpack.c.bf16 %v849, %v848
      %v879 = vpack.c.bf16 %v851, %v850
      %v880 = vpack.c.bf16 %v853, %v852
      %v881 = vpack.c.bf16 %v855, %v854
      %v882 = vpack.c.bf16 %v857, %v856
      %v883 = vpack.c.bf16 %v859, %v858
      %v884 = vpack.c.bf16 %v861, %v860
      %v885 = vpack.c.bf16 %v863, %v862
      %v886 = vpack.c.bf16 %v865, %v864
      %v887 = vld [vmem:[%s5] sm:$0xff]
      %v888 = vld [vmem:[%s5 + $0x8] sm:$0xff]
      %v889 = vld [vmem:[%s5 + $0x10] sm:$0xff]
      %v890 = vld [vmem:[%s5 + $0x18] sm:$0xff]
      %v891 = vld [vmem:[%s5 + $0x20] sm:$0xff]
      %v892 = vld [vmem:[%s5 + $0x28] sm:$0xff]
      %v893 = vld [vmem:[%s5 + $0x30] sm:$0xff]
      %v894 = vld [vmem:[%s5 + $0x38] sm:$0xff]
      %v895 = vld [vmem:[%s5 + $0x40] sm:$0xff]
      %v896 = vld [vmem:[%s5 + $0x48] sm:$0xff]
      %v897 = vld [vmem:[%s5 + $0x50] sm:$0xff]
      %v898 = vld [vmem:[%s5 + $0x58] sm:$0xff]
      %v899 = vld [vmem:[%s5 + $0x60] sm:$0xff]
      %v900 = vld [vmem:[%s5 + $0x68] sm:$0xff]
      %v901 = vld [vmem:[%s5 + $0x70] sm:$0xff]
      %v902 = vld [vmem:[%s5 + $0x78] sm:$0xff]
      %v903 = vpack.c.bf16 %v888, %v887
      %v904 = vpack.c.bf16 %v890, %v889
      %v905 = vpack.c.bf16 %v892, %v891
      %v906 = vpack.c.bf16 %v894, %v893
      %v907 = vpack.c.bf16 %v896, %v895
      %v908 = vpack.c.bf16 %v898, %v897
      %v909 = vpack.c.bf16 %v900, %v899
      %v910 = vpack.c.bf16 %v902, %v901
      %v911 = vpack.c.bf16 %v866, %v866
      %v912 = vld [vmem:[%s5 + $0x80] sm:$0xff]
      %v913 = vld [vmem:[%s5 + $0x88] sm:$0xff]
      %v914 = vld [vmem:[%s5 + $0x90] sm:$0xff]
      %v915 = vld [vmem:[%s5 + $0x98] sm:$0xff]
      %v916 = vld [vmem:[%s5 + $0xa0] sm:$0xff]
      %v917 = vld [vmem:[%s5 + $0xa8] sm:$0xff]
      %v918 = vld [vmem:[%s5 + $0xb0] sm:$0xff]
      %v919 = vld [vmem:[%s5 + $0xb8] sm:$0xff]
      %v920 = vld [vmem:[%s5 + $0xc0] sm:$0xff]
      %v921 = vld [vmem:[%s5 + $0xc8] sm:$0xff]
      %v922 = vld [vmem:[%s5 + $0xd0] sm:$0xff]
      %v923 = vld [vmem:[%s5 + $0xd8] sm:$0xff]
      %v924 = vld [vmem:[%s5 + $0xe0] sm:$0xff]
      %v925 = vld [vmem:[%s5 + $0xe8] sm:$0xff]
      %v926 = vld [vmem:[%s5 + $0xf0] sm:$0xff]
      %v927 = vld [vmem:[%s5 + $0xf8] sm:$0xff]
      %v928 = vpack.c.bf16 %v913, %v912
      %v929 = vpack.c.bf16 %v915, %v914
      %v930 = vpack.c.bf16 %v917, %v916
      %v931 = vpack.c.bf16 %v919, %v918
      %v932 = vpack.c.bf16 %v921, %v920
      %v933 = vpack.c.bf16 %v923, %v922
      %v934 = vpack.c.bf16 %v925, %v924
      %v935 = vpack.c.bf16 %v927, %v926
      %vm936 = vsmask.f32 7424
      %v938 = vshrl.u32 %v871, 16
      %v940 = vshll.u32 %v871, 16
      %v942 = vrot.slane %v940, 1
      %v943 = vor.u32 %v938, %v942
      %v945 = vshll.u32 %v872, 16
      %v947 = vrot.slane %v945, 1
      %v948 = vsel %vm936, %v943, %v947
      %v949 = vshrl.u32 %v872, 16
      %v951 = vor.u32 %v949, %v947
      %v953 = vshll.u32 %v873, 16
      %v955 = vrot.slane %v953, 1
      %v956 = vsel %vm936, %v951, %v955
      %v957 = vshrl.u32 %v873, 16
      %v959 = vor.u32 %v957, %v955
      %v961 = vshll.u32 %v874, 16
      %v963 = vrot.slane %v961, 1
      %v964 = vsel %vm936, %v959, %v963
      %v965 = vshrl.u32 %v874, 16
      %v967 = vor.u32 %v965, %v963
      %v969 = vshll.u32 %v875, 16
      %v971 = vrot.slane %v969, 1
      %v972 = vsel %vm936, %v967, %v971
      %v973 = vshrl.u32 %v875, 16
      %v975 = vor.u32 %v973, %v971
      %v977 = vshll.u32 %v876, 16
      %v979 = vrot.slane %v977, 1
      %v980 = vsel %vm936, %v975, %v979
      %v981 = vshrl.u32 %v876, 16
      %v983 = vor.u32 %v981, %v979
      %v985 = vshll.u32 %v877, 16
      %v987 = vrot.slane %v985, 1
      %v988 = vsel %vm936, %v983, %v987
      %v989 = vshrl.u32 %v877, 16
      %v991 = vor.u32 %v989, %v987
      %v993 = vshll.u32 %v878, 16
      %v995 = vrot.slane %v993, 1
      %v996 = vsel %vm936, %v991, %v995
      %v997 = vshrl.u32 %v878, 16
      %v999 = vor.u32 %v997, %v995
      %v1001 = vshll.u32 %v879, 16
      %v1003 = vrot.slane %v1001, 1
      %v1004 = vsel %vm936, %v999, %v1003
      %v1005 = vshrl.u32 %v879, 16
      %v1007 = vor.u32 %v1005, %v1003
      %v1009 = vshll.u32 %v880, 16
      %v1011 = vrot.slane %v1009, 1
      %v1012 = vsel %vm936, %v1007, %v1011
      %v1013 = vshrl.u32 %v880, 16
      %v1015 = vor.u32 %v1013, %v1011
      %v1017 = vshll.u32 %v881, 16
      %v1019 = vrot.slane %v1017, 1
      %v1020 = vsel %vm936, %v1015, %v1019
      %v1021 = vshrl.u32 %v881, 16
      %v1023 = vor.u32 %v1021, %v1019
      %v1025 = vshll.u32 %v882, 16
      %v1027 = vrot.slane %v1025, 1
      %v1028 = vsel %vm936, %v1023, %v1027
      %v1029 = vshrl.u32 %v882, 16
      %v1031 = vor.u32 %v1029, %v1027
      %v1033 = vshll.u32 %v883, 16
      %v1035 = vrot.slane %v1033, 1
      %v1036 = vsel %vm936, %v1031, %v1035
      %v1037 = vshrl.u32 %v883, 16
      %v1039 = vor.u32 %v1037, %v1035
      %v1041 = vshll.u32 %v884, 16
      %v1043 = vrot.slane %v1041, 1
      %v1044 = vsel %vm936, %v1039, %v1043
      %v1045 = vshrl.u32 %v884, 16
      %v1047 = vor.u32 %v1045, %v1043
      %v1049 = vshll.u32 %v885, 16
      %v1051 = vrot.slane %v1049, 1
      %v1052 = vsel %vm936, %v1047, %v1051
      %v1053 = vshrl.u32 %v885, 16
      %v1055 = vor.u32 %v1053, %v1051
      %v1057 = vshll.u32 %v886, 16
      %v1059 = vrot.slane %v1057, 1
      %v1060 = vsel %vm936, %v1055, %v1059
      %v1061 = vshrl.u32 %v886, 16
      %v1063 = vor.u32 %v1061, %v1059
      %v1065 = vshll.u32 %v911, 16
      %v1067 = vrot.slane %v1065, 1
      %v1068 = vsel %vm936, %v1063, %v1067
      %1085 = vmatprep.subr.bf16.mxu0 0
      %1086 = vmatpush1.bf16.msra.mxu0 %v935
      %1087 = vmatprep.subr.bf16.mxu0 0
      %1088 = vmatpush1.bf16.msra.mxu0 %v934
      %1089 = vmatprep.subr.bf16.mxu0 0
      %1090 = vmatpush1.bf16.msra.mxu0 %v933
      %1091 = vmatprep.subr.bf16.mxu0 0
      %1092 = vmatpush1.bf16.msra.mxu0 %v932
      %1093 = vmatprep.subr.bf16.mxu0 0
      %1094 = vmatpush1.bf16.msra.mxu0 %v931
      %1095 = vmatprep.subr.bf16.mxu0 0
      %1096 = vmatpush1.bf16.msra.mxu0 %v930
      %1097 = vmatprep.subr.bf16.mxu0 0
      %1098 = vmatpush1.bf16.msra.mxu0 %v929
      %1099 = vmatprep.subr.bf16.mxu0 0
      %1100 = vmatpush1.bf16.msra.mxu0 %v928
      %1101 = vmatprep.subr.bf16.mxu0 0
      %1102 = vmatpush2.bf16.msra.mxu0 0
      %1103 = vmatprep.subr.bf16.mxu0 0
      %1104 = vmatpush2.bf16.msra.mxu0 0
      %1105 = vmatprep.subr.bf16.mxu0 0
      %1106 = vmatpush2.bf16.msra.mxu0 0
      %1107 = vmatprep.subr.bf16.mxu0 0
      %1108 = vmatpush2.bf16.msra.mxu0 0
      %1109 = vmatprep.subr.bf16.mxu0 0
      %1110 = vmatpush2.bf16.msra.mxu0 0
      %1111 = vmatprep.subr.bf16.mxu0 0
      %1112 = vmatpush2.bf16.msra.mxu0 0
      %1113 = vmatprep.subr.bf16.mxu0 0
      %1114 = vmatpush2.bf16.msra.mxu0 0
      %1115 = vmatprep.subr.bf16.mxu0 0
      %1116 = vmatpush2.bf16.msra.mxu0 0
      %1117 = vmatprep.mubr.bf16.mxu0 0
      %1118 = vmatmul.mubr.bf16.gmra.mxu0 %v948
      %v1119 = vpop.f32.mrf.mxu0
      %v1120 = vadd.f32 0.0, %v1119
      %v1121 = vpop.f32.mrf.mxu0
      %v1122 = vpop.f32.mrf.mxu0
      %v1123 = vadd.f32 0.0, %v1122
      %v1124 = vpop.f32.mrf.mxu0
      %1125 = vmatprep.mubr.bf16.mxu0 0
      %1126 = vmatmul.mubr.bf16.gmra.mxu0 %v956
      %v1127 = vpop.f32.mrf.mxu0
      %v1128 = vadd.f32 0.0, %v1127
      %v1129 = vpop.f32.mrf.mxu0
      %v1130 = vpop.f32.mrf.mxu0
      %v1131 = vadd.f32 0.0, %v1130
      %v1132 = vpop.f32.mrf.mxu0
      %1133 = vmatprep.mubr.bf16.mxu0 0
      %1134 = vmatmul.mubr.bf16.gmra.mxu0 %v964
      %v1135 = vpop.f32.mrf.mxu0
      %v1136 = vadd.f32 0.0, %v1135
      %v1137 = vpop.f32.mrf.mxu0
      %v1138 = vpop.f32.mrf.mxu0
      %v1139 = vadd.f32 0.0, %v1138
      %v1140 = vpop.f32.mrf.mxu0
      %1141 = vmatprep.mubr.bf16.mxu0 0
      %1142 = vmatmul.mubr.bf16.gmra.mxu0 %v972
      %v1143 = vpop.f32.mrf.mxu0
      %v1144 = vadd.f32 0.0, %v1143
      %v1145 = vpop.f32.mrf.mxu0
      %v1146 = vpop.f32.mrf.mxu0
      %v1147 = vadd.f32 0.0, %v1146
      %v1148 = vpop.f32.mrf.mxu0
      %1149 = vmatprep.mubr.bf16.mxu0 0
      %1150 = vmatmul.mubr.bf16.gmra.mxu0 %v980
      %v1151 = vpop.f32.mrf.mxu0
      %v1152 = vadd.f32 0.0, %v1151
      %v1153 = vpop.f32.mrf.mxu0
      %v1154 = vpop.f32.mrf.mxu0
      %v1155 = vadd.f32 0.0, %v1154
      %v1156 = vpop.f32.mrf.mxu0
      %1157 = vmatprep.mubr.bf16.mxu0 0
      %1158 = vmatmul.mubr.bf16.gmra.mxu0 %v988
      %v1159 = vpop.f32.mrf.mxu0
      %v1160 = vadd.f32 0.0, %v1159
      %v1161 = vpop.f32.mrf.mxu0
      %v1162 = vpop.f32.mrf.mxu0
      %v1163 = vadd.f32 0.0, %v1162
      %v1164 = vpop.f32.mrf.mxu0
      %1165 = vmatprep.mubr.bf16.mxu0 0
      %1166 = vmatmul.mubr.bf16.gmra.mxu0 %v996
      %v1167 = vpop.f32.mrf.mxu0
      %v1168 = vadd.f32 0.0, %v1167
      %v1169 = vpop.f32.mrf.mxu0
      %v1170 = vpop.f32.mrf.mxu0
      %v1171 = vadd.f32 0.0, %v1170
      %v1172 = vpop.f32.mrf.mxu0
      %1173 = vmatprep.mubr.bf16.mxu0 0
      %1174 = vmatmul.mubr.bf16.gmra.mxu0 %v1004
      %v1175 = vpop.f32.mrf.mxu0
      %v1176 = vadd.f32 0.0, %v1175
      %v1177 = vpop.f32.mrf.mxu0
      %v1178 = vpop.f32.mrf.mxu0
      %v1179 = vadd.f32 0.0, %v1178
      %v1180 = vpop.f32.mrf.mxu0
      %1181 = vmatprep.mubr.bf16.mxu0 0
      %1182 = vmatmul.mubr.bf16.gmra.mxu0 %v1012
      %v1183 = vpop.f32.mrf.mxu0
      %v1184 = vadd.f32 0.0, %v1183
      %v1185 = vpop.f32.mrf.mxu0
      %v1186 = vpop.f32.mrf.mxu0
      %v1187 = vadd.f32 0.0, %v1186
      %v1188 = vpop.f32.mrf.mxu0
      %1189 = vmatprep.mubr.bf16.mxu0 0
      %1190 = vmatmul.mubr.bf16.gmra.mxu0 %v1020
      %v1191 = vpop.f32.mrf.mxu0
      %v1192 = vadd.f32 0.0, %v1191
      %v1193 = vpop.f32.mrf.mxu0
      %v1194 = vpop.f32.mrf.mxu0
      %v1195 = vadd.f32 0.0, %v1194
      %v1196 = vpop.f32.mrf.mxu0
      %1197 = vmatprep.mubr.bf16.mxu0 0
      %1198 = vmatmul.mubr.bf16.gmra.mxu0 %v1028
      %v1199 = vpop.f32.mrf.mxu0
      %v1200 = vadd.f32 0.0, %v1199
      %v1201 = vpop.f32.mrf.mxu0
      %v1202 = vpop.f32.mrf.mxu0
      %v1203 = vadd.f32 0.0, %v1202
      %v1204 = vpop.f32.mrf.mxu0
      %1205 = vmatprep.mubr.bf16.mxu0 0
      %1206 = vmatmul.mubr.bf16.gmra.mxu0 %v1036
      %v1207 = vpop.f32.mrf.mxu0
      %v1208 = vadd.f32 0.0, %v1207
      %v1209 = vpop.f32.mrf.mxu0
      %v1210 = vpop.f32.mrf.mxu0
      %v1211 = vadd.f32 0.0, %v1210
      %v1212 = vpop.f32.mrf.mxu0
      %1213 = vmatprep.mubr.bf16.mxu0 0
      %1214 = vmatmul.mubr.bf16.gmra.mxu0 %v1044
      %v1215 = vpop.f32.mrf.mxu0
      %v1216 = vadd.f32 0.0, %v1215
      %v1217 = vpop.f32.mrf.mxu0
      %v1218 = vpop.f32.mrf.mxu0
      %v1219 = vadd.f32 0.0, %v1218
      %v1220 = vpop.f32.mrf.mxu0
      %1221 = vmatprep.mubr.bf16.mxu0 0
      %1222 = vmatmul.mubr.bf16.gmra.mxu0 %v1052
      %v1223 = vpop.f32.mrf.mxu0
      %v1224 = vadd.f32 0.0, %v1223
      %v1225 = vpop.f32.mrf.mxu0
      %v1226 = vpop.f32.mrf.mxu0
      %v1227 = vadd.f32 0.0, %v1226
      %v1228 = vpop.f32.mrf.mxu0
      %1229 = vmatprep.mubr.bf16.mxu0 0
      %1230 = vmatmul.mubr.bf16.gmra.mxu0 %v1060
      %v1231 = vpop.f32.mrf.mxu0
      %v1232 = vadd.f32 0.0, %v1231
      %v1233 = vpop.f32.mrf.mxu0
      %v1234 = vpop.f32.mrf.mxu0
      %v1235 = vadd.f32 0.0, %v1234
      %v1236 = vpop.f32.mrf.mxu0
      %1237 = vmatprep.mubr.bf16.mxu0 0
      %1238 = vmatmul.mubr.bf16.gmra.mxu0 %v1068
      %v1239 = vpop.f32.mrf.mxu0
      %v1240 = vadd.f32 0.0, %v1239
      %v1241 = vpop.f32.mrf.mxu0
      %v1242 = vpop.f32.mrf.mxu0
      %v1243 = vadd.f32 0.0, %v1242
      %v1244 = vpop.f32.mrf.mxu0
      %1245 = vdwg.mxu0
      %1246 = vmatprep.subr.bf16.mxu0 0
      %1247 = vmatpush1.bf16.msra.mxu0 %v910
      %1248 = vmatprep.subr.bf16.mxu0 0
      %1249 = vmatpush1.bf16.msra.mxu0 %v909
      %1250 = vmatprep.subr.bf16.mxu0 0
      %1251 = vmatpush1.bf16.msra.mxu0 %v908
      %1252 = vmatprep.subr.bf16.mxu0 0
      %1253 = vmatpush1.bf16.msra.mxu0 %v907
      %1254 = vmatprep.subr.bf16.mxu0 0
      %1255 = vmatpush1.bf16.msra.mxu0 %v906
      %1256 = vmatprep.subr.bf16.mxu0 0
      %1257 = vmatpush1.bf16.msra.mxu0 %v905
      %1258 = vmatprep.subr.bf16.mxu0 0
      %1259 = vmatpush1.bf16.msra.mxu0 %v904
      %1260 = vmatprep.subr.bf16.mxu0 0
      %1261 = vmatpush1.bf16.msra.mxu0 %v903
      %1262 = vmatprep.subr.bf16.mxu0 0
      %1263 = vmatpush2.bf16.msra.mxu0 0
      %1264 = vmatprep.subr.bf16.mxu0 0
      %1265 = vmatpush2.bf16.msra.mxu0 0
      %1266 = vmatprep.subr.bf16.mxu0 0
      %1267 = vmatpush2.bf16.msra.mxu0 0
      %1268 = vmatprep.subr.bf16.mxu0 0
      %1269 = vmatpush2.bf16.msra.mxu0 0
      %1270 = vmatprep.subr.bf16.mxu0 0
      %1271 = vmatpush2.bf16.msra.mxu0 0
      %1272 = vmatprep.subr.bf16.mxu0 0
      %1273 = vmatpush2.bf16.msra.mxu0 0
      %1274 = vmatprep.subr.bf16.mxu0 0
      %1275 = vmatpush2.bf16.msra.mxu0 0
      %1276 = vmatprep.subr.bf16.mxu0 0
      %1277 = vmatpush2.bf16.msra.mxu0 0
      %1278 = vmatprep.mubr.bf16.mxu0 0
      %1279 = vmatmul.mubr.bf16.gmra.mxu0 %v871
      %v1280 = vpop.f32.mrf.mxu0
      %v1281 = vadd.f32 %v1120, %v1280
      %v1282 = vpop.f32.mrf.mxu0
      %v1283 = vpop.f32.mrf.mxu0
      %v1284 = vadd.f32 %v1123, %v1283
      %v1285 = vpop.f32.mrf.mxu0
      %1286 = vmatprep.mubr.bf16.mxu0 0
      %1287 = vmatmul.mubr.bf16.gmra.mxu0 %v872
      %v1288 = vpop.f32.mrf.mxu0
      %v1289 = vadd.f32 %v1128, %v1288
      %v1290 = vpop.f32.mrf.mxu0
      %v1291 = vpop.f32.mrf.mxu0
      %v1292 = vadd.f32 %v1131, %v1291
      %v1293 = vpop.f32.mrf.mxu0
      %1294 = vmatprep.mubr.bf16.mxu0 0
      %1295 = vmatmul.mubr.bf16.gmra.mxu0 %v873
      %v1296 = vpop.f32.mrf.mxu0
      %v1297 = vadd.f32 %v1136, %v1296
      %v1298 = vpop.f32.mrf.mxu0
      %v1299 = vpop.f32.mrf.mxu0
      %v1300 = vadd.f32 %v1139, %v1299
      %v1301 = vpop.f32.mrf.mxu0
      %1302 = vmatprep.mubr.bf16.mxu0 0
      %1303 = vmatmul.mubr.bf16.gmra.mxu0 %v874
      %v1304 = vpop.f32.mrf.mxu0
      %v1305 = vadd.f32 %v1144, %v1304
      %v1306 = vpop.f32.mrf.mxu0
      %v1307 = vpop.f32.mrf.mxu0
      %v1308 = vadd.f32 %v1147, %v1307
      %v1309 = vpop.f32.mrf.mxu0
      %1310 = vmatprep.mubr.bf16.mxu0 0
      %1311 = vmatmul.mubr.bf16.gmra.mxu0 %v875
      %v1312 = vpop.f32.mrf.mxu0
      %v1313 = vadd.f32 %v1152, %v1312
      %v1314 = vpop.f32.mrf.mxu0
      %v1315 = vpop.f32.mrf.mxu0
      %v1316 = vadd.f32 %v1155, %v1315
      %v1317 = vpop.f32.mrf.mxu0
      %1318 = vmatprep.mubr.bf16.mxu0 0
      %1319 = vmatmul.mubr.bf16.gmra.mxu0 %v876
      %v1320 = vpop.f32.mrf.mxu0
      %v1321 = vadd.f32 %v1160, %v1320
      %v1322 = vpop.f32.mrf.mxu0
      %v1323 = vpop.f32.mrf.mxu0
      %v1324 = vadd.f32 %v1163, %v1323
      %v1325 = vpop.f32.mrf.mxu0
      %1326 = vmatprep.mubr.bf16.mxu0 0
      %1327 = vmatmul.mubr.bf16.gmra.mxu0 %v877
      %v1328 = vpop.f32.mrf.mxu0
      %v1329 = vadd.f32 %v1168, %v1328
      %v1330 = vpop.f32.mrf.mxu0
      %v1331 = vpop.f32.mrf.mxu0
      %v1332 = vadd.f32 %v1171, %v1331
      %v1333 = vpop.f32.mrf.mxu0
      %1334 = vmatprep.mubr.bf16.mxu0 0
      %1335 = vmatmul.mubr.bf16.gmra.mxu0 %v878
      %v1336 = vpop.f32.mrf.mxu0
      %v1337 = vadd.f32 %v1176, %v1336
      %v1338 = vpop.f32.mrf.mxu0
      %v1339 = vpop.f32.mrf.mxu0
      %v1340 = vadd.f32 %v1179, %v1339
      %v1341 = vpop.f32.mrf.mxu0
      %1342 = vmatprep.mubr.bf16.mxu0 0
      %1343 = vmatmul.mubr.bf16.gmra.mxu0 %v879
      %v1344 = vpop.f32.mrf.mxu0
      %v1345 = vadd.f32 %v1184, %v1344
      %v1346 = vpop.f32.mrf.mxu0
      %v1347 = vpop.f32.mrf.mxu0
      %v1348 = vadd.f32 %v1187, %v1347
      %v1349 = vpop.f32.mrf.mxu0
      %1350 = vmatprep.mubr.bf16.mxu0 0
      %1351 = vmatmul.mubr.bf16.gmra.mxu0 %v880
      %v1352 = vpop.f32.mrf.mxu0
      %v1353 = vadd.f32 %v1192, %v1352
      %v1354 = vpop.f32.mrf.mxu0
      %v1355 = vpop.f32.mrf.mxu0
      %v1356 = vadd.f32 %v1195, %v1355
      %v1357 = vpop.f32.mrf.mxu0
      %1358 = vmatprep.mubr.bf16.mxu0 0
      %1359 = vmatmul.mubr.bf16.gmra.mxu0 %v881
      %v1360 = vpop.f32.mrf.mxu0
      %v1361 = vadd.f32 %v1200, %v1360
      %v1362 = vpop.f32.mrf.mxu0
      %v1363 = vpop.f32.mrf.mxu0
      %v1364 = vadd.f32 %v1203, %v1363
      %v1365 = vpop.f32.mrf.mxu0
      %1366 = vmatprep.mubr.bf16.mxu0 0
      %1367 = vmatmul.mubr.bf16.gmra.mxu0 %v882
      %v1368 = vpop.f32.mrf.mxu0
      %v1369 = vadd.f32 %v1208, %v1368
      %v1370 = vpop.f32.mrf.mxu0
      %v1371 = vpop.f32.mrf.mxu0
      %v1372 = vadd.f32 %v1211, %v1371
      %v1373 = vpop.f32.mrf.mxu0
      %1374 = vmatprep.mubr.bf16.mxu0 0
      %1375 = vmatmul.mubr.bf16.gmra.mxu0 %v883
      %v1376 = vpop.f32.mrf.mxu0
      %v1377 = vadd.f32 %v1216, %v1376
      %v1378 = vpop.f32.mrf.mxu0
      %v1379 = vpop.f32.mrf.mxu0
      %v1380 = vadd.f32 %v1219, %v1379
      %v1381 = vpop.f32.mrf.mxu0
      %1382 = vmatprep.mubr.bf16.mxu0 0
      %1383 = vmatmul.mubr.bf16.gmra.mxu0 %v884
      %v1384 = vpop.f32.mrf.mxu0
      %v1385 = vadd.f32 %v1224, %v1384
      %v1386 = vpop.f32.mrf.mxu0
      %v1387 = vpop.f32.mrf.mxu0
      %v1388 = vadd.f32 %v1227, %v1387
      %v1389 = vpop.f32.mrf.mxu0
      %1390 = vmatprep.mubr.bf16.mxu0 0
      %1391 = vmatmul.mubr.bf16.gmra.mxu0 %v885
      %v1392 = vpop.f32.mrf.mxu0
      %v1393 = vadd.f32 %v1232, %v1392
      %v1394 = vpop.f32.mrf.mxu0
      %v1395 = vpop.f32.mrf.mxu0
      %v1396 = vadd.f32 %v1235, %v1395
      %v1397 = vpop.f32.mrf.mxu0
      %1398 = vmatprep.mubr.bf16.mxu0 0
      %1399 = vmatmul.mubr.bf16.gmra.mxu0 %v886
      %v1400 = vpop.f32.mrf.mxu0
      %v1401 = vadd.f32 %v1240, %v1400
      %v1402 = vpop.f32.mrf.mxu0
      %v1403 = vpop.f32.mrf.mxu0
      %v1404 = vadd.f32 %v1243, %v1403
      %v1405 = vpop.f32.mrf.mxu0
      %1406 = vdwg.mxu0
      %v1407 = vld [vmem:[%s5 + $0x100] sm:$0xff]
      %v1408 = vld [vmem:[%s5 + $0x108] sm:$0xff]
      %v1409 = vld [vmem:[%s5 + $0x110] sm:$0xff]
      %v1410 = vld [vmem:[%s5 + $0x118] sm:$0xff]
      %v1411 = vld [vmem:[%s5 + $0x120] sm:$0xff]
      %v1412 = vld [vmem:[%s5 + $0x128] sm:$0xff]
      %v1413 = vld [vmem:[%s5 + $0x130] sm:$0xff]
      %v1414 = vld [vmem:[%s5 + $0x138] sm:$0xff]
      %v1415 = vld [vmem:[%s5 + $0x140] sm:$0xff]
      %v1416 = vld [vmem:[%s5 + $0x148] sm:$0xff]
      %v1417 = vld [vmem:[%s5 + $0x150] sm:$0xff]
      %v1418 = vld [vmem:[%s5 + $0x158] sm:$0xff]
      %v1419 = vld [vmem:[%s5 + $0x160] sm:$0xff]
      %v1420 = vld [vmem:[%s5 + $0x168] sm:$0xff]
      %v1421 = vld [vmem:[%s5 + $0x170] sm:$0xff]
      %v1422 = vld [vmem:[%s5 + $0x178] sm:$0xff]
      %v1423 = vpack.c.bf16 %v1408, %v1407
      %v1424 = vpack.c.bf16 %v1410, %v1409
      %v1425 = vpack.c.bf16 %v1412, %v1411
      %v1426 = vpack.c.bf16 %v1414, %v1413
      %v1427 = vpack.c.bf16 %v1416, %v1415
      %v1428 = vpack.c.bf16 %v1418, %v1417
      %v1429 = vpack.c.bf16 %v1420, %v1419
      %v1430 = vpack.c.bf16 %v1422, %v1421
      %vm1448 = vcmask 1046528
      %v1449 = vrot.slane %v871, 1
      %v1450 = vrot.slane %v872, 1
      %v1451 = vsel %vm1448, %v1449, %v1450
      %v1452 = vrot.slane %v873, 1
      %v1453 = vsel %vm1448, %v1450, %v1452
      %v1454 = vrot.slane %v874, 1
      %v1455 = vsel %vm1448, %v1452, %v1454
      %v1456 = vrot.slane %v875, 1
      %v1457 = vsel %vm1448, %v1454, %v1456
      %v1458 = vrot.slane %v876, 1
      %v1459 = vsel %vm1448, %v1456, %v1458
      %v1460 = vrot.slane %v877, 1
      %v1461 = vsel %vm1448, %v1458, %v1460
      %v1462 = vrot.slane %v878, 1
      %v1463 = vsel %vm1448, %v1460, %v1462
      %v1464 = vrot.slane %v879, 1
      %v1465 = vsel %vm1448, %v1462, %v1464
      %v1466 = vrot.slane %v880, 1
      %v1467 = vsel %vm1448, %v1464, %v1466
      %v1468 = vrot.slane %v881, 1
      %v1469 = vsel %vm1448, %v1466, %v1468
      %v1470 = vrot.slane %v882, 1
      %v1471 = vsel %vm1448, %v1468, %v1470
      %v1472 = vrot.slane %v883, 1
      %v1473 = vsel %vm1448, %v1470, %v1472
      %v1474 = vrot.slane %v884, 1
      %v1475 = vsel %vm1448, %v1472, %v1474
      %v1476 = vrot.slane %v885, 1
      %v1477 = vsel %vm1448, %v1474, %v1476
      %v1478 = vrot.slane %v886, 1
      %v1479 = vsel %vm1448, %v1476, %v1478
      %v1480 = vrot.slane %v911, 1
      %v1481 = vsel %vm1448, %v1478, %v1480
      %1498 = vmatprep.subr.bf16.mxu0 0
      %1499 = vmatpush1.bf16.msra.mxu0 %v1430
      %1500 = vmatprep.subr.bf16.mxu0 0
      %1501 = vmatpush1.bf16.msra.mxu0 %v1429
      %1502 = vmatprep.subr.bf16.mxu0 0
      %1503 = vmatpush1.bf16.msra.mxu0 %v1428
      %1504 = vmatprep.subr.bf16.mxu0 0
      %1505 = vmatpush1.bf16.msra.mxu0 %v1427
      %1506 = vmatprep.subr.bf16.mxu0 0
      %1507 = vmatpush1.bf16.msra.mxu0 %v1426
      %1508 = vmatprep.subr.bf16.mxu0 0
      %1509 = vmatpush1.bf16.msra.mxu0 %v1425
      %1510 = vmatprep.subr.bf16.mxu0 0
      %1511 = vmatpush1.bf16.msra.mxu0 %v1424
      %1512 = vmatprep.subr.bf16.mxu0 0
      %1513 = vmatpush1.bf16.msra.mxu0 %v1423
      %1514 = vmatprep.subr.bf16.mxu0 0
      %1515 = vmatpush2.bf16.msra.mxu0 0
      %1516 = vmatprep.subr.bf16.mxu0 0
      %1517 = vmatpush2.bf16.msra.mxu0 0
      %1518 = vmatprep.subr.bf16.mxu0 0
      %1519 = vmatpush2.bf16.msra.mxu0 0
      %1520 = vmatprep.subr.bf16.mxu0 0
      %1521 = vmatpush2.bf16.msra.mxu0 0
      %1522 = vmatprep.subr.bf16.mxu0 0
      %1523 = vmatpush2.bf16.msra.mxu0 0
      %1524 = vmatprep.subr.bf16.mxu0 0
      %1525 = vmatpush2.bf16.msra.mxu0 0
      %1526 = vmatprep.subr.bf16.mxu0 0
      %1527 = vmatpush2.bf16.msra.mxu0 0
      %1528 = vmatprep.subr.bf16.mxu0 0
      %1529 = vmatpush2.bf16.msra.mxu0 0
      %1530 = vmatprep.mubr.bf16.mxu0 0
      %1531 = vmatmul.mubr.bf16.gmra.mxu0 %v1451
      %v1532 = vpop.f32.mrf.mxu0
      %v1533 = vadd.f32 0.0, %v1532
      %v1534 = vpop.f32.mrf.mxu0
      %v1535 = vpop.f32.mrf.mxu0
      %v1536 = vadd.f32 0.0, %v1535
      %v1537 = vpop.f32.mrf.mxu0
      %1538 = vmatprep.mubr.bf16.mxu0 0
      %1539 = vmatmul.mubr.bf16.gmra.mxu0 %v1453
      %v1540 = vpop.f32.mrf.mxu0
      %v1541 = vadd.f32 0.0, %v1540
      %v1542 = vpop.f32.mrf.mxu0
      %v1543 = vpop.f32.mrf.mxu0
      %v1544 = vadd.f32 0.0, %v1543
      %v1545 = vpop.f32.mrf.mxu0
      %1546 = vmatprep.mubr.bf16.mxu0 0
      %1547 = vmatmul.mubr.bf16.gmra.mxu0 %v1455
      %v1548 = vpop.f32.mrf.mxu0
      %v1549 = vadd.f32 0.0, %v1548
      %v1550 = vpop.f32.mrf.mxu0
      %v1551 = vpop.f32.mrf.mxu0
      %v1552 = vadd.f32 0.0, %v1551
      %v1553 = vpop.f32.mrf.mxu0
      %1554 = vmatprep.mubr.bf16.mxu0 0
      %1555 = vmatmul.mubr.bf16.gmra.mxu0 %v1457
      %v1556 = vpop.f32.mrf.mxu0
      %v1557 = vadd.f32 0.0, %v1556
      %v1558 = vpop.f32.mrf.mxu0
      %v1559 = vpop.f32.mrf.mxu0
      %v1560 = vadd.f32 0.0, %v1559
      %v1561 = vpop.f32.mrf.mxu0
      %1562 = vmatprep.mubr.bf16.mxu0 0
      %1563 = vmatmul.mubr.bf16.gmra.mxu0 %v1459
      %v1564 = vpop.f32.mrf.mxu0
      %v1565 = vadd.f32 0.0, %v1564
      %v1566 = vpop.f32.mrf.mxu0
      %v1567 = vpop.f32.mrf.mxu0
      %v1568 = vadd.f32 0.0, %v1567
      %v1569 = vpop.f32.mrf.mxu0
      %1570 = vmatprep.mubr.bf16.mxu0 0
      %1571 = vmatmul.mubr.bf16.gmra.mxu0 %v1461
      %v1572 = vpop.f32.mrf.mxu0
      %v1573 = vadd.f32 0.0, %v1572
      %v1574 = vpop.f32.mrf.mxu0
      %v1575 = vpop.f32.mrf.mxu0
      %v1576 = vadd.f32 0.0, %v1575
      %v1577 = vpop.f32.mrf.mxu0
      %1578 = vmatprep.mubr.bf16.mxu0 0
      %1579 = vmatmul.mubr.bf16.gmra.mxu0 %v1463
      %v1580 = vpop.f32.mrf.mxu0
      %v1581 = vadd.f32 0.0, %v1580
      %v1582 = vpop.f32.mrf.mxu0
      %v1583 = vpop.f32.mrf.mxu0
      %v1584 = vadd.f32 0.0, %v1583
      %v1585 = vpop.f32.mrf.mxu0
      %1586 = vmatprep.mubr.bf16.mxu0 0
      %1587 = vmatmul.mubr.bf16.gmra.mxu0 %v1465
      %v1588 = vpop.f32.mrf.mxu0
      %v1589 = vadd.f32 0.0, %v1588
      %v1590 = vpop.f32.mrf.mxu0
      %v1591 = vpop.f32.mrf.mxu0
      %v1592 = vadd.f32 0.0, %v1591
      %v1593 = vpop.f32.mrf.mxu0
      %1594 = vmatprep.mubr.bf16.mxu0 0
      %1595 = vmatmul.mubr.bf16.gmra.mxu0 %v1467
      %v1596 = vpop.f32.mrf.mxu0
      %v1597 = vadd.f32 0.0, %v1596
      %v1598 = vpop.f32.mrf.mxu0
      %v1599 = vpop.f32.mrf.mxu0
      %v1600 = vadd.f32 0.0, %v1599
      %v1601 = vpop.f32.mrf.mxu0
      %1602 = vmatprep.mubr.bf16.mxu0 0
      %1603 = vmatmul.mubr.bf16.gmra.mxu0 %v1469
      %v1604 = vpop.f32.mrf.mxu0
      %v1605 = vadd.f32 0.0, %v1604
      %v1606 = vpop.f32.mrf.mxu0
      %v1607 = vpop.f32.mrf.mxu0
      %v1608 = vadd.f32 0.0, %v1607
      %v1609 = vpop.f32.mrf.mxu0
      %1610 = vmatprep.mubr.bf16.mxu0 0
      %1611 = vmatmul.mubr.bf16.gmra.mxu0 %v1471
      %v1612 = vpop.f32.mrf.mxu0
      %v1613 = vadd.f32 0.0, %v1612
      %v1614 = vpop.f32.mrf.mxu0
      %v1615 = vpop.f32.mrf.mxu0
      %v1616 = vadd.f32 0.0, %v1615
      %v1617 = vpop.f32.mrf.mxu0
      %1618 = vmatprep.mubr.bf16.mxu0 0
      %1619 = vmatmul.mubr.bf16.gmra.mxu0 %v1473
      %v1620 = vpop.f32.mrf.mxu0
      %v1621 = vadd.f32 0.0, %v1620
      %v1622 = vpop.f32.mrf.mxu0
      %v1623 = vpop.f32.mrf.mxu0
      %v1624 = vadd.f32 0.0, %v1623
      %v1625 = vpop.f32.mrf.mxu0
      %1626 = vmatprep.mubr.bf16.mxu0 0
      %1627 = vmatmul.mubr.bf16.gmra.mxu0 %v1475
      %v1628 = vpop.f32.mrf.mxu0
      %v1629 = vadd.f32 0.0, %v1628
      %v1630 = vpop.f32.mrf.mxu0
      %v1631 = vpop.f32.mrf.mxu0
      %v1632 = vadd.f32 0.0, %v1631
      %v1633 = vpop.f32.mrf.mxu0
      %1634 = vmatprep.mubr.bf16.mxu0 0
      %1635 = vmatmul.mubr.bf16.gmra.mxu0 %v1477
      %v1636 = vpop.f32.mrf.mxu0
      %v1637 = vadd.f32 0.0, %v1636
      %v1638 = vpop.f32.mrf.mxu0
      %v1639 = vpop.f32.mrf.mxu0
      %v1640 = vadd.f32 0.0, %v1639
      %v1641 = vpop.f32.mrf.mxu0
      %1642 = vmatprep.mubr.bf16.mxu0 0
      %1643 = vmatmul.mubr.bf16.gmra.mxu0 %v1479
      %v1644 = vpop.f32.mrf.mxu0
      %v1645 = vadd.f32 0.0, %v1644
      %v1646 = vpop.f32.mrf.mxu0
      %v1647 = vpop.f32.mrf.mxu0
      %v1648 = vadd.f32 0.0, %v1647
      %v1649 = vpop.f32.mrf.mxu0
      %1650 = vmatprep.mubr.bf16.mxu0 0
      %1651 = vmatmul.mubr.bf16.gmra.mxu0 %v1481
      %v1652 = vpop.f32.mrf.mxu0
      %v1653 = vadd.f32 0.0, %v1652
      %v1654 = vpop.f32.mrf.mxu0
      %v1655 = vpop.f32.mrf.mxu0
      %v1656 = vadd.f32 0.0, %v1655
      %v1657 = vpop.f32.mrf.mxu0
      %1658 = vdwg.mxu0
      %v1659 = vadd.f32 %v1281, %v1533
      %v1660 = vadd.f32 %v1284, %v1536
      %v1661 = vadd.f32 %v1289, %v1541
      %v1662 = vadd.f32 %v1292, %v1544
      %v1663 = vadd.f32 %v1297, %v1549
      %v1664 = vadd.f32 %v1300, %v1552
      %v1665 = vadd.f32 %v1305, %v1557
      %v1666 = vadd.f32 %v1308, %v1560
      %v1667 = vadd.f32 %v1313, %v1565
      %v1668 = vadd.f32 %v1316, %v1568
      %v1669 = vadd.f32 %v1321, %v1573
      %v1670 = vadd.f32 %v1324, %v1576
      %v1671 = vadd.f32 %v1329, %v1581
      %v1672 = vadd.f32 %v1332, %v1584
      %v1673 = vadd.f32 %v1337, %v1589
      %v1674 = vadd.f32 %v1340, %v1592
      %v1675 = vadd.f32 %v1345, %v1597
      %v1676 = vadd.f32 %v1348, %v1600
      %v1677 = vadd.f32 %v1353, %v1605
      %v1678 = vadd.f32 %v1356, %v1608
      %v1679 = vadd.f32 %v1361, %v1613
      %v1680 = vadd.f32 %v1364, %v1616
      %v1681 = vadd.f32 %v1369, %v1621
      %v1682 = vadd.f32 %v1372, %v1624
      %v1683 = vadd.f32 %v1377, %v1629
      %v1684 = vadd.f32 %v1380, %v1632
      %v1685 = vadd.f32 %v1385, %v1637
      %v1686 = vadd.f32 %v1388, %v1640
      %v1687 = vadd.f32 %v1393, %v1645
      %v1688 = vadd.f32 %v1396, %v1648
      %v1689 = vadd.f32 %v1401, %v1653
      %v1690 = vadd.f32 %v1404, %v1656
      %v1691 = vpack.c.bf16 %v867, %v866
      %v1692 = vpack.c.bf16 %v868, %v868
      %v1693 = vld [vmem:[%s5 + $0x180] sm:$0xff]
      %v1694 = vld [vmem:[%s5 + $0x188] sm:$0xff]
      %v1695 = vld [vmem:[%s5 + $0x190] sm:$0xff]
      %v1696 = vld [vmem:[%s5 + $0x198] sm:$0xff]
      %v1697 = vld [vmem:[%s5 + $0x1a0] sm:$0xff]
      %v1698 = vld [vmem:[%s5 + $0x1a8] sm:$0xff]
      %v1699 = vld [vmem:[%s5 + $0x1b0] sm:$0xff]
      %v1700 = vld [vmem:[%s5 + $0x1b8] sm:$0xff]
      %v1701 = vld [vmem:[%s5 + $0x1c0] sm:$0xff]
      %v1702 = vld [vmem:[%s5 + $0x1c8] sm:$0xff]
      %v1703 = vld [vmem:[%s5 + $0x1d0] sm:$0xff]
      %v1704 = vld [vmem:[%s5 + $0x1d8] sm:$0xff]
      %v1705 = vld [vmem:[%s5 + $0x1e0] sm:$0xff]
      %v1706 = vld [vmem:[%s5 + $0x1e8] sm:$0xff]
      %v1707 = vld [vmem:[%s5 + $0x1f0] sm:$0xff]
      %v1708 = vld [vmem:[%s5 + $0x1f8] sm:$0xff]
      %v1709 = vpack.c.bf16 %v1694, %v1693
      %v1710 = vpack.c.bf16 %v1696, %v1695
      %v1711 = vpack.c.bf16 %v1698, %v1697
      %v1712 = vpack.c.bf16 %v1700, %v1699
      %v1713 = vpack.c.bf16 %v1702, %v1701
      %v1714 = vpack.c.bf16 %v1704, %v1703
      %v1715 = vpack.c.bf16 %v1706, %v1705
      %v1716 = vpack.c.bf16 %v1708, %v1707
      %v1719 = vrot.slane %v1691, 1
      %v1720 = vsel %vm1448, %v1478, %v1719
      %v1721 = vrot.slane %v1692, 1
      %v1722 = vsel %vm1448, %v1719, %v1721
      %1725 = vmatprep.subr.bf16.mxu0 0
      %1726 = vmatpush1.bf16.msra.mxu0 %v1716
      %1727 = vmatprep.subr.bf16.mxu0 0
      %1728 = vmatpush1.bf16.msra.mxu0 %v1715
      %1729 = vmatprep.subr.bf16.mxu0 0
      %1730 = vmatpush1.bf16.msra.mxu0 %v1714
      %1731 = vmatprep.subr.bf16.mxu0 0
      %1732 = vmatpush1.bf16.msra.mxu0 %v1713
      %1733 = vmatprep.subr.bf16.mxu0 0
      %1734 = vmatpush1.bf16.msra.mxu0 %v1712
      %1735 = vmatprep.subr.bf16.mxu0 0
      %1736 = vmatpush1.bf16.msra.mxu0 %v1711
      %1737 = vmatprep.subr.bf16.mxu0 0
      %1738 = vmatpush1.bf16.msra.mxu0 %v1710
      %1739 = vmatprep.subr.bf16.mxu0 0
      %1740 = vmatpush1.bf16.msra.mxu0 %v1709
      %1741 = vmatprep.subr.bf16.mxu0 0
      %1742 = vmatpush2.bf16.msra.mxu0 0
      %1743 = vmatprep.subr.bf16.mxu0 0
      %1744 = vmatpush2.bf16.msra.mxu0 0
      %1745 = vmatprep.subr.bf16.mxu0 0
      %1746 = vmatpush2.bf16.msra.mxu0 0
      %1747 = vmatprep.subr.bf16.mxu0 0
      %1748 = vmatpush2.bf16.msra.mxu0 0
      %1749 = vmatprep.subr.bf16.mxu0 0
      %1750 = vmatpush2.bf16.msra.mxu0 0
      %1751 = vmatprep.subr.bf16.mxu0 0
      %1752 = vmatpush2.bf16.msra.mxu0 0
      %1753 = vmatprep.subr.bf16.mxu0 0
      %1754 = vmatpush2.bf16.msra.mxu0 0
      %1755 = vmatprep.subr.bf16.mxu0 0
      %1756 = vmatpush2.bf16.msra.mxu0 0
      %1757 = vmatprep.mubr.bf16.mxu0 0
      %1758 = vmatmul.mubr.bf16.gmra.mxu0 %v1453
      %v1759 = vpop.f32.mrf.mxu0
      %v1760 = vadd.f32 0.0, %v1759
      %v1761 = vpop.f32.mrf.mxu0
      %v1762 = vpop.f32.mrf.mxu0
      %v1763 = vadd.f32 0.0, %v1762
      %v1764 = vpop.f32.mrf.mxu0
      %1765 = vmatprep.mubr.bf16.mxu0 0
      %1766 = vmatmul.mubr.bf16.gmra.mxu0 %v1455
      %v1767 = vpop.f32.mrf.mxu0
      %v1768 = vadd.f32 0.0, %v1767
      %v1769 = vpop.f32.mrf.mxu0
      %v1770 = vpop.f32.mrf.mxu0
      %v1771 = vadd.f32 0.0, %v1770
      %v1772 = vpop.f32.mrf.mxu0
      %1773 = vmatprep.mubr.bf16.mxu0 0
      %1774 = vmatmul.mubr.bf16.gmra.mxu0 %v1457
      %v1775 = vpop.f32.mrf.mxu0
      %v1776 = vadd.f32 0.0, %v1775
      %v1777 = vpop.f32.mrf.mxu0
      %v1778 = vpop.f32.mrf.mxu0
      %v1779 = vadd.f32 0.0, %v1778
      %v1780 = vpop.f32.mrf.mxu0
      %1781 = vmatprep.mubr.bf16.mxu0 0
      %1782 = vmatmul.mubr.bf16.gmra.mxu0 %v1459
      %v1783 = vpop.f32.mrf.mxu0
      %v1784 = vadd.f32 0.0, %v1783
      %v1785 = vpop.f32.mrf.mxu0
      %v1786 = vpop.f32.mrf.mxu0
      %v1787 = vadd.f32 0.0, %v1786
      %v1788 = vpop.f32.mrf.mxu0
      %1789 = vmatprep.mubr.bf16.mxu0 0
      %1790 = vmatmul.mubr.bf16.gmra.mxu0 %v1461
      %v1791 = vpop.f32.mrf.mxu0
      %v1792 = vadd.f32 0.0, %v1791
      %v1793 = vpop.f32.mrf.mxu0
      %v1794 = vpop.f32.mrf.mxu0
      %v1795 = vadd.f32 0.0, %v1794
      %v1796 = vpop.f32.mrf.mxu0
      %1797 = vmatprep.mubr.bf16.mxu0 0
      %1798 = vmatmul.mubr.bf16.gmra.mxu0 %v1463
      %v1799 = vpop.f32.mrf.mxu0
      %v1800 = vadd.f32 0.0, %v1799
      %v1801 = vpop.f32.mrf.mxu0
      %v1802 = vpop.f32.mrf.mxu0
      %v1803 = vadd.f32 0.0, %v1802
      %v1804 = vpop.f32.mrf.mxu0
      %1805 = vmatprep.mubr.bf16.mxu0 0
      %1806 = vmatmul.mubr.bf16.gmra.mxu0 %v1465
      %v1807 = vpop.f32.mrf.mxu0
      %v1808 = vadd.f32 0.0, %v1807
      %v1809 = vpop.f32.mrf.mxu0
      %v1810 = vpop.f32.mrf.mxu0
      %v1811 = vadd.f32 0.0, %v1810
      %v1812 = vpop.f32.mrf.mxu0
      %1813 = vmatprep.mubr.bf16.mxu0 0
      %1814 = vmatmul.mubr.bf16.gmra.mxu0 %v1467
      %v1815 = vpop.f32.mrf.mxu0
      %v1816 = vadd.f32 0.0, %v1815
      %v1817 = vpop.f32.mrf.mxu0
      %v1818 = vpop.f32.mrf.mxu0
      %v1819 = vadd.f32 0.0, %v1818
      %v1820 = vpop.f32.mrf.mxu0
      %1821 = vmatprep.mubr.bf16.mxu0 0
      %1822 = vmatmul.mubr.bf16.gmra.mxu0 %v1469
      %v1823 = vpop.f32.mrf.mxu0
      %v1824 = vadd.f32 0.0, %v1823
      %v1825 = vpop.f32.mrf.mxu0
      %v1826 = vpop.f32.mrf.mxu0
      %v1827 = vadd.f32 0.0, %v1826
      %v1828 = vpop.f32.mrf.mxu0
      %1829 = vmatprep.mubr.bf16.mxu0 0
      %1830 = vmatmul.mubr.bf16.gmra.mxu0 %v1471
      %v1831 = vpop.f32.mrf.mxu0
      %v1832 = vadd.f32 0.0, %v1831
      %v1833 = vpop.f32.mrf.mxu0
      %v1834 = vpop.f32.mrf.mxu0
      %v1835 = vadd.f32 0.0, %v1834
      %v1836 = vpop.f32.mrf.mxu0
      %1837 = vmatprep.mubr.bf16.mxu0 0
      %1838 = vmatmul.mubr.bf16.gmra.mxu0 %v1473
      %v1839 = vpop.f32.mrf.mxu0
      %v1840 = vadd.f32 0.0, %v1839
      %v1841 = vpop.f32.mrf.mxu0
      %v1842 = vpop.f32.mrf.mxu0
      %v1843 = vadd.f32 0.0, %v1842
      %v1844 = vpop.f32.mrf.mxu0
      %1845 = vmatprep.mubr.bf16.mxu0 0
      %1846 = vmatmul.mubr.bf16.gmra.mxu0 %v1475
      %v1847 = vpop.f32.mrf.mxu0
      %v1848 = vadd.f32 0.0, %v1847
      %v1849 = vpop.f32.mrf.mxu0
      %v1850 = vpop.f32.mrf.mxu0
      %v1851 = vadd.f32 0.0, %v1850
      %v1852 = vpop.f32.mrf.mxu0
      %1853 = vmatprep.mubr.bf16.mxu0 0
      %1854 = vmatmul.mubr.bf16.gmra.mxu0 %v1477
      %v1855 = vpop.f32.mrf.mxu0
      %v1856 = vadd.f32 0.0, %v1855
      %v1857 = vpop.f32.mrf.mxu0
      %v1858 = vpop.f32.mrf.mxu0
      %v1859 = vadd.f32 0.0, %v1858
      %v1860 = vpop.f32.mrf.mxu0
      %1861 = vmatprep.mubr.bf16.mxu0 0
      %1862 = vmatmul.mubr.bf16.gmra.mxu0 %v1479
      %v1863 = vpop.f32.mrf.mxu0
      %v1864 = vadd.f32 0.0, %v1863
      %v1865 = vpop.f32.mrf.mxu0
      %v1866 = vpop.f32.mrf.mxu0
      %v1867 = vadd.f32 0.0, %v1866
      %v1868 = vpop.f32.mrf.mxu0
      %1869 = vmatprep.mubr.bf16.mxu0 0
      %1870 = vmatmul.mubr.bf16.gmra.mxu0 %v1720
      %v1871 = vpop.f32.mrf.mxu0
      %v1872 = vadd.f32 0.0, %v1871
      %v1873 = vpop.f32.mrf.mxu0
      %v1874 = vpop.f32.mrf.mxu0
      %v1875 = vadd.f32 0.0, %v1874
      %v1876 = vpop.f32.mrf.mxu0
      %1877 = vmatprep.mubr.bf16.mxu0 0
      %1878 = vmatmul.mubr.bf16.gmra.mxu0 %v1722
      %v1879 = vpop.f32.mrf.mxu0
      %v1880 = vadd.f32 0.0, %v1879
      %v1881 = vpop.f32.mrf.mxu0
      %v1882 = vpop.f32.mrf.mxu0
      %v1883 = vadd.f32 0.0, %v1882
      %v1884 = vpop.f32.mrf.mxu0
      %1885 = vdwg.mxu0
      %v1886 = vadd.f32 %v1659, %v1760
      %v1887 = vadd.f32 %v1660, %v1763
      %v1888 = vadd.f32 %v1661, %v1768
      %v1889 = vadd.f32 %v1662, %v1771
      %v1890 = vadd.f32 %v1663, %v1776
      %v1891 = vadd.f32 %v1664, %v1779
      %v1892 = vadd.f32 %v1665, %v1784
      %v1893 = vadd.f32 %v1666, %v1787
      %v1894 = vadd.f32 %v1667, %v1792
      %v1895 = vadd.f32 %v1668, %v1795
      %v1896 = vadd.f32 %v1669, %v1800
      %v1897 = vadd.f32 %v1670, %v1803
      %v1898 = vadd.f32 %v1671, %v1808
      %v1899 = vadd.f32 %v1672, %v1811
      %v1900 = vadd.f32 %v1673, %v1816
      %v1901 = vadd.f32 %v1674, %v1819
      %v1902 = vadd.f32 %v1675, %v1824
      %v1903 = vadd.f32 %v1676, %v1827
      %v1904 = vadd.f32 %v1677, %v1832
      %v1905 = vadd.f32 %v1678, %v1835
      %v1906 = vadd.f32 %v1679, %v1840
      %v1907 = vadd.f32 %v1680, %v1843
      %v1908 = vadd.f32 %v1681, %v1848
      %v1909 = vadd.f32 %v1682, %v1851
      %v1910 = vadd.f32 %v1683, %v1856
      %v1911 = vadd.f32 %v1684, %v1859
      %v1912 = vadd.f32 %v1685, %v1864
      %v1913 = vadd.f32 %v1686, %v1867
      %v1914 = vadd.f32 %v1687, %v1872
      %v1915 = vadd.f32 %v1688, %v1875
      %v1916 = vadd.f32 %v1689, %v1880
      %v1917 = vadd.f32 %v1690, %v1883
      %v1918 = vld [vmem:[%s5 + $0x200] sm:$0xff]
      %v1919 = vld [vmem:[%s5 + $0x208] sm:$0xff]
      %v1920 = vld [vmem:[%s5 + $0x210] sm:$0xff]
      %v1921 = vld [vmem:[%s5 + $0x218] sm:$0xff]
      %v1922 = vld [vmem:[%s5 + $0x220] sm:$0xff]
      %v1923 = vld [vmem:[%s5 + $0x228] sm:$0xff]
      %v1924 = vld [vmem:[%s5 + $0x230] sm:$0xff]
      %v1925 = vld [vmem:[%s5 + $0x238] sm:$0xff]
      %v1926 = vld [vmem:[%s5 + $0x240] sm:$0xff]
      %v1927 = vld [vmem:[%s5 + $0x248] sm:$0xff]
      %v1928 = vld [vmem:[%s5 + $0x250] sm:$0xff]
      %v1929 = vld [vmem:[%s5 + $0x258] sm:$0xff]
      %v1930 = vld [vmem:[%s5 + $0x260] sm:$0xff]
      %v1931 = vld [vmem:[%s5 + $0x268] sm:$0xff]
      %v1932 = vld [vmem:[%s5 + $0x270] sm:$0xff]
      %v1933 = vld [vmem:[%s5 + $0x278] sm:$0xff]
      %v1934 = vpack.c.bf16 %v1919, %v1918
      %v1935 = vpack.c.bf16 %v1921, %v1920
      %v1936 = vpack.c.bf16 %v1923, %v1922
      %v1937 = vpack.c.bf16 %v1925, %v1924
      %v1938 = vpack.c.bf16 %v1927, %v1926
      %v1939 = vpack.c.bf16 %v1929, %v1928
      %v1940 = vpack.c.bf16 %v1931, %v1930
      %v1941 = vpack.c.bf16 %v1933, %v1932
      %vm1942 = vsmask.f32 6400
      %v1943 = vrot.slane %v949, 1
      %v1944 = vrot.slane %v945, 2
      %v1945 = vor.u32 %v1943, %v1944
      %v1946 = vrot.slane %v957, 1
      %v1947 = vrot.slane %v953, 2
      %v1948 = vor.u32 %v1946, %v1947
      %v1949 = vsel %vm1942, %v1945, %v1948
      %v1950 = vrot.slane %v965, 1
      %v1951 = vrot.slane %v961, 2
      %v1952 = vor.u32 %v1950, %v1951
      %v1953 = vsel %vm1942, %v1948, %v1952
      %v1954 = vrot.slane %v973, 1
      %v1955 = vrot.slane %v969, 2
      %v1956 = vor.u32 %v1954, %v1955
      %v1957 = vsel %vm1942, %v1952, %v1956
      %v1958 = vrot.slane %v981, 1
      %v1959 = vrot.slane %v977, 2
      %v1960 = vor.u32 %v1958, %v1959
      %v1961 = vsel %vm1942, %v1956, %v1960
      %v1962 = vrot.slane %v989, 1
      %v1963 = vrot.slane %v985, 2
      %v1964 = vor.u32 %v1962, %v1963
      %v1965 = vsel %vm1942, %v1960, %v1964
      %v1966 = vrot.slane %v997, 1
      %v1967 = vrot.slane %v993, 2
      %v1968 = vor.u32 %v1966, %v1967
      %v1969 = vsel %vm1942, %v1964, %v1968
      %v1970 = vrot.slane %v1005, 1
      %v1971 = vrot.slane %v1001, 2
      %v1972 = vor.u32 %v1970, %v1971
      %v1973 = vsel %vm1942, %v1968, %v1972
      %v1974 = vrot.slane %v1013, 1
      %v1975 = vrot.slane %v1009, 2
      %v1976 = vor.u32 %v1974, %v1975
      %v1977 = vsel %vm1942, %v1972, %v1976
      %v1978 = vrot.slane %v1021, 1
      %v1979 = vrot.slane %v1017, 2
      %v1980 = vor.u32 %v1978, %v1979
      %v1981 = vsel %vm1942, %v1976, %v1980
      %v1982 = vrot.slane %v1029, 1
      %v1983 = vrot.slane %v1025, 2
      %v1984 = vor.u32 %v1982, %v1983
      %v1985 = vsel %vm1942, %v1980, %v1984
      %v1986 = vrot.slane %v1037, 1
      %v1987 = vrot.slane %v1033, 2
      %v1988 = vor.u32 %v1986, %v1987
      %v1989 = vsel %vm1942, %v1984, %v1988
      %v1990 = vrot.slane %v1045, 1
      %v1991 = vrot.slane %v1041, 2
      %v1992 = vor.u32 %v1990, %v1991
      %v1993 = vsel %vm1942, %v1988, %v1992
      %v1994 = vrot.slane %v1053, 1
      %v1995 = vrot.slane %v1049, 2
      %v1996 = vor.u32 %v1994, %v1995
      %v1997 = vsel %vm1942, %v1992, %v1996
      %v1998 = vrot.slane %v1061, 1
      %v1999 = vrot.slane %v1057, 2
      %v2000 = vor.u32 %v1998, %v1999
      %v2001 = vsel %vm1942, %v1996, %v2000
      %v2003 = vshrl.u32 %v1691, 16
      %v2005 = vrot.slane %v2003, 1
      %v2006 = vshll.u32 %v1691, 16
      %v2008 = vrot.slane %v2006, 2
      %v2009 = vor.u32 %v2005, %v2008
      %v2010 = vsel %vm1942, %v2000, %v2009
      %v2012 = vshrl.u32 %v1692, 16
      %v2014 = vrot.slane %v2012, 1
      %v2015 = vshll.u32 %v1692, 16
      %v2017 = vrot.slane %v2015, 2
      %v2018 = vor.u32 %v2014, %v2017
      %v2019 = vsel %vm1942, %v2009, %v2018
      %2036 = vmatprep.subr.bf16.mxu0 0
      %2037 = vmatpush1.bf16.msra.mxu0 %v1941
      %2038 = vmatprep.subr.bf16.mxu0 0
      %2039 = vmatpush1.bf16.msra.mxu0 %v1940
      %2040 = vmatprep.subr.bf16.mxu0 0
      %2041 = vmatpush1.bf16.msra.mxu0 %v1939
      %2042 = vmatprep.subr.bf16.mxu0 0
      %2043 = vmatpush1.bf16.msra.mxu0 %v1938
      %2044 = vmatprep.subr.bf16.mxu0 0
      %2045 = vmatpush1.bf16.msra.mxu0 %v1937
      %2046 = vmatprep.subr.bf16.mxu0 0
      %2047 = vmatpush1.bf16.msra.mxu0 %v1936
      %2048 = vmatprep.subr.bf16.mxu0 0
      %2049 = vmatpush1.bf16.msra.mxu0 %v1935
      %2050 = vmatprep.subr.bf16.mxu0 0
      %2051 = vmatpush1.bf16.msra.mxu0 %v1934
      %2052 = vmatprep.subr.bf16.mxu0 0
      %2053 = vmatpush2.bf16.msra.mxu0 0
      %2054 = vmatprep.subr.bf16.mxu0 0
      %2055 = vmatpush2.bf16.msra.mxu0 0
      %2056 = vmatprep.subr.bf16.mxu0 0
      %2057 = vmatpush2.bf16.msra.mxu0 0
      %2058 = vmatprep.subr.bf16.mxu0 0
      %2059 = vmatpush2.bf16.msra.mxu0 0
      %2060 = vmatprep.subr.bf16.mxu0 0
      %2061 = vmatpush2.bf16.msra.mxu0 0
      %2062 = vmatprep.subr.bf16.mxu0 0
      %2063 = vmatpush2.bf16.msra.mxu0 0
      %2064 = vmatprep.subr.bf16.mxu0 0
      %2065 = vmatpush2.bf16.msra.mxu0 0
      %2066 = vmatprep.subr.bf16.mxu0 0
      %2067 = vmatpush2.bf16.msra.mxu0 0
      %2068 = vmatprep.mubr.bf16.mxu0 0
      %2069 = vmatmul.mubr.bf16.gmra.mxu0 %v1949
      %v2070 = vpop.f32.mrf.mxu0
      %v2071 = vadd.f32 0.0, %v2070
      %v2072 = vpop.f32.mrf.mxu0
      %v2073 = vpop.f32.mrf.mxu0
      %v2074 = vadd.f32 0.0, %v2073
      %v2075 = vpop.f32.mrf.mxu0
      %2076 = vmatprep.mubr.bf16.mxu0 0
      %2077 = vmatmul.mubr.bf16.gmra.mxu0 %v1953
      %v2078 = vpop.f32.mrf.mxu0
      %v2079 = vadd.f32 0.0, %v2078
      %v2080 = vpop.f32.mrf.mxu0
      %v2081 = vpop.f32.mrf.mxu0
      %v2082 = vadd.f32 0.0, %v2081
      %v2083 = vpop.f32.mrf.mxu0
      %2084 = vmatprep.mubr.bf16.mxu0 0
      %2085 = vmatmul.mubr.bf16.gmra.mxu0 %v1957
      %v2086 = vpop.f32.mrf.mxu0
      %v2087 = vadd.f32 0.0, %v2086
      %v2088 = vpop.f32.mrf.mxu0
      %v2089 = vpop.f32.mrf.mxu0
      %v2090 = vadd.f32 0.0, %v2089
      %v2091 = vpop.f32.mrf.mxu0
      %2092 = vmatprep.mubr.bf16.mxu0 0
      %2093 = vmatmul.mubr.bf16.gmra.mxu0 %v1961
      %v2094 = vpop.f32.mrf.mxu0
      %v2095 = vadd.f32 0.0, %v2094
      %v2096 = vpop.f32.mrf.mxu0
      %v2097 = vpop.f32.mrf.mxu0
      %v2098 = vadd.f32 0.0, %v2097
      %v2099 = vpop.f32.mrf.mxu0
      %2100 = vmatprep.mubr.bf16.mxu0 0
      %2101 = vmatmul.mubr.bf16.gmra.mxu0 %v1965
      %v2102 = vpop.f32.mrf.mxu0
      %v2103 = vadd.f32 0.0, %v2102
      %v2104 = vpop.f32.mrf.mxu0
      %v2105 = vpop.f32.mrf.mxu0
      %v2106 = vadd.f32 0.0, %v2105
      %v2107 = vpop.f32.mrf.mxu0
      %2108 = vmatprep.mubr.bf16.mxu0 0
      %2109 = vmatmul.mubr.bf16.gmra.mxu0 %v1969
      %v2110 = vpop.f32.mrf.mxu0
      %v2111 = vadd.f32 0.0, %v2110
      %v2112 = vpop.f32.mrf.mxu0
      %v2113 = vpop.f32.mrf.mxu0
      %v2114 = vadd.f32 0.0, %v2113
      %v2115 = vpop.f32.mrf.mxu0
      %2116 = vmatprep.mubr.bf16.mxu0 0
      %2117 = vmatmul.mubr.bf16.gmra.mxu0 %v1973
      %v2118 = vpop.f32.mrf.mxu0
      %v2119 = vadd.f32 0.0, %v2118
      %v2120 = vpop.f32.mrf.mxu0
      %v2121 = vpop.f32.mrf.mxu0
      %v2122 = vadd.f32 0.0, %v2121
      %v2123 = vpop.f32.mrf.mxu0
      %2124 = vmatprep.mubr.bf16.mxu0 0
      %2125 = vmatmul.mubr.bf16.gmra.mxu0 %v1977
      %v2126 = vpop.f32.mrf.mxu0
      %v2127 = vadd.f32 0.0, %v2126
      %v2128 = vpop.f32.mrf.mxu0
      %v2129 = vpop.f32.mrf.mxu0
      %v2130 = vadd.f32 0.0, %v2129
      %v2131 = vpop.f32.mrf.mxu0
      %2132 = vmatprep.mubr.bf16.mxu0 0
      %2133 = vmatmul.mubr.bf16.gmra.mxu0 %v1981
      %v2134 = vpop.f32.mrf.mxu0
      %v2135 = vadd.f32 0.0, %v2134
      %v2136 = vpop.f32.mrf.mxu0
      %v2137 = vpop.f32.mrf.mxu0
      %v2138 = vadd.f32 0.0, %v2137
      %v2139 = vpop.f32.mrf.mxu0
      %2140 = vmatprep.mubr.bf16.mxu0 0
      %2141 = vmatmul.mubr.bf16.gmra.mxu0 %v1985
      %v2142 = vpop.f32.mrf.mxu0
      %v2143 = vadd.f32 0.0, %v2142
      %v2144 = vpop.f32.mrf.mxu0
      %v2145 = vpop.f32.mrf.mxu0
      %v2146 = vadd.f32 0.0, %v2145
      %v2147 = vpop.f32.mrf.mxu0
      %2148 = vmatprep.mubr.bf16.mxu0 0
      %2149 = vmatmul.mubr.bf16.gmra.mxu0 %v1989
      %v2150 = vpop.f32.mrf.mxu0
      %v2151 = vadd.f32 0.0, %v2150
      %v2152 = vpop.f32.mrf.mxu0
      %v2153 = vpop.f32.mrf.mxu0
      %v2154 = vadd.f32 0.0, %v2153
      %v2155 = vpop.f32.mrf.mxu0
      %2156 = vmatprep.mubr.bf16.mxu0 0
      %2157 = vmatmul.mubr.bf16.gmra.mxu0 %v1993
      %v2158 = vpop.f32.mrf.mxu0
      %v2159 = vadd.f32 0.0, %v2158
      %v2160 = vpop.f32.mrf.mxu0
      %v2161 = vpop.f32.mrf.mxu0
      %v2162 = vadd.f32 0.0, %v2161
      %v2163 = vpop.f32.mrf.mxu0
      %2164 = vmatprep.mubr.bf16.mxu0 0
      %2165 = vmatmul.mubr.bf16.gmra.mxu0 %v1997
      %v2166 = vpop.f32.mrf.mxu0
      %v2167 = vadd.f32 0.0, %v2166
      %v2168 = vpop.f32.mrf.mxu0
      %v2169 = vpop.f32.mrf.mxu0
      %v2170 = vadd.f32 0.0, %v2169
      %v2171 = vpop.f32.mrf.mxu0
      %2172 = vmatprep.mubr.bf16.mxu0 0
      %2173 = vmatmul.mubr.bf16.gmra.mxu0 %v2001
      %v2174 = vpop.f32.mrf.mxu0
      %v2175 = vadd.f32 0.0, %v2174
      %v2176 = vpop.f32.mrf.mxu0
      %v2177 = vpop.f32.mrf.mxu0
      %v2178 = vadd.f32 0.0, %v2177
      %v2179 = vpop.f32.mrf.mxu0
      %2180 = vmatprep.mubr.bf16.mxu0 0
      %2181 = vmatmul.mubr.bf16.gmra.mxu0 %v2010
      %v2182 = vpop.f32.mrf.mxu0
      %v2183 = vadd.f32 0.0, %v2182
      %v2184 = vpop.f32.mrf.mxu0
      %v2185 = vpop.f32.mrf.mxu0
      %v2186 = vadd.f32 0.0, %v2185
      %v2187 = vpop.f32.mrf.mxu0
      %2188 = vmatprep.mubr.bf16.mxu0 0
      %2189 = vmatmul.mubr.bf16.gmra.mxu0 %v2019
      %v2190 = vpop.f32.mrf.mxu0
      %v2191 = vadd.f32 0.0, %v2190
      %v2192 = vpop.f32.mrf.mxu0
      %v2193 = vpop.f32.mrf.mxu0
      %v2194 = vadd.f32 0.0, %v2193
      %v2195 = vpop.f32.mrf.mxu0
      %2196 = vdwg.mxu0
      %v2197 = vadd.f32 %v1886, %v2071
      %v2198 = vadd.f32 %v1887, %v2074
      %v2199 = vadd.f32 %v1888, %v2079
      %v2200 = vadd.f32 %v1889, %v2082
      %v2201 = vadd.f32 %v1890, %v2087
      %v2202 = vadd.f32 %v1891, %v2090
      %v2203 = vadd.f32 %v1892, %v2095
      %v2204 = vadd.f32 %v1893, %v2098
      %v2205 = vadd.f32 %v1894, %v2103
      %v2206 = vadd.f32 %v1895, %v2106
      %v2207 = vadd.f32 %v1896, %v2111
      %v2208 = vadd.f32 %v1897, %v2114
      %v2209 = vadd.f32 %v1898, %v2119
      %v2210 = vadd.f32 %v1899, %v2122
      %v2211 = vadd.f32 %v1900, %v2127
      %v2212 = vadd.f32 %v1901, %v2130
      %v2213 = vadd.f32 %v1902, %v2135
      %v2214 = vadd.f32 %v1903, %v2138
      %v2215 = vadd.f32 %v1904, %v2143
      %v2216 = vadd.f32 %v1905, %v2146
      %v2217 = vadd.f32 %v1906, %v2151
      %v2218 = vadd.f32 %v1907, %v2154
      %v2219 = vadd.f32 %v1908, %v2159
      %v2220 = vadd.f32 %v1909, %v2162
      %v2221 = vadd.f32 %v1910, %v2167
      %v2222 = vadd.f32 %v1911, %v2170
      %v2223 = vadd.f32 %v1912, %v2175
      %v2224 = vadd.f32 %v1913, %v2178
      %v2225 = vadd.f32 %v1914, %v2183
      %v2226 = vadd.f32 %v1915, %v2186
      %v2227 = vadd.f32 %v1916, %v2191
      %v2228 = vadd.f32 %v1917, %v2194
      %v2229 = vld [vmem:[%s5 + $0x280] sm:$0xff]
      %v2230 = vld [vmem:[%s5 + $0x288] sm:$0xff]
      %v2231 = vld [vmem:[%s5 + $0x290] sm:$0xff]
      %v2232 = vld [vmem:[%s5 + $0x298] sm:$0xff]
      %v2233 = vld [vmem:[%s5 + $0x2a0] sm:$0xff]
      %v2234 = vld [vmem:[%s5 + $0x2a8] sm:$0xff]
      %v2235 = vld [vmem:[%s5 + $0x2b0] sm:$0xff]
      %v2236 = vld [vmem:[%s5 + $0x2b8] sm:$0xff]
      %v2237 = vld [vmem:[%s5 + $0x2c0] sm:$0xff]
      %v2238 = vld [vmem:[%s5 + $0x2c8] sm:$0xff]
      %v2239 = vld [vmem:[%s5 + $0x2d0] sm:$0xff]
      %v2240 = vld [vmem:[%s5 + $0x2d8] sm:$0xff]
      %v2241 = vld [vmem:[%s5 + $0x2e0] sm:$0xff]
      %v2242 = vld [vmem:[%s5 + $0x2e8] sm:$0xff]
      %v2243 = vld [vmem:[%s5 + $0x2f0] sm:$0xff]
      %v2244 = vld [vmem:[%s5 + $0x2f8] sm:$0xff]
      %v2245 = vpack.c.bf16 %v2230, %v2229
      %v2246 = vpack.c.bf16 %v2232, %v2231
      %v2247 = vpack.c.bf16 %v2234, %v2233
      %v2248 = vpack.c.bf16 %v2236, %v2235
      %v2249 = vpack.c.bf16 %v2238, %v2237
      %v2250 = vpack.c.bf16 %v2240, %v2239
      %v2251 = vpack.c.bf16 %v2242, %v2241
      %v2252 = vpack.c.bf16 %v2244, %v2243
      %vm2253 = vcmask 1045504
      %v2254 = vrot.slane %v872, 2
      %v2255 = vrot.slane %v873, 2
      %v2256 = vsel %vm2253, %v2254, %v2255
      %v2257 = vrot.slane %v874, 2
      %v2258 = vsel %vm2253, %v2255, %v2257
      %v2259 = vrot.slane %v875, 2
      %v2260 = vsel %vm2253, %v2257, %v2259
      %v2261 = vrot.slane %v876, 2
      %v2262 = vsel %vm2253, %v2259, %v2261
      %v2263 = vrot.slane %v877, 2
      %v2264 = vsel %vm2253, %v2261, %v2263
      %v2265 = vrot.slane %v878, 2
      %v2266 = vsel %vm2253, %v2263, %v2265
      %v2267 = vrot.slane %v879, 2
      %v2268 = vsel %vm2253, %v2265, %v2267
      %v2269 = vrot.slane %v880, 2
      %v2270 = vsel %vm2253, %v2267, %v2269
      %v2271 = vrot.slane %v881, 2
      %v2272 = vsel %vm2253, %v2269, %v2271
      %v2273 = vrot.slane %v882, 2
      %v2274 = vsel %vm2253, %v2271, %v2273
      %v2275 = vrot.slane %v883, 2
      %v2276 = vsel %vm2253, %v2273, %v2275
      %v2277 = vrot.slane %v884, 2
      %v2278 = vsel %vm2253, %v2275, %v2277
      %v2279 = vrot.slane %v885, 2
      %v2280 = vsel %vm2253, %v2277, %v2279
      %v2281 = vrot.slane %v886, 2
      %v2282 = vsel %vm2253, %v2279, %v2281
      %v2283 = vrot.slane %v1691, 2
      %v2284 = vsel %vm2253, %v2281, %v2283
      %v2285 = vrot.slane %v1692, 2
      %v2286 = vsel %vm2253, %v2283, %v2285
      %2303 = vmatprep.subr.bf16.mxu0 0
      %2304 = vmatpush1.bf16.msra.mxu0 %v2252
      %2305 = vmatprep.subr.bf16.mxu0 0
      %2306 = vmatpush1.bf16.msra.mxu0 %v2251
      %2307 = vmatprep.subr.bf16.mxu0 0
      %2308 = vmatpush1.bf16.msra.mxu0 %v2250
      %2309 = vmatprep.subr.bf16.mxu0 0
      %2310 = vmatpush1.bf16.msra.mxu0 %v2249
      %2311 = vmatprep.subr.bf16.mxu0 0
      %2312 = vmatpush1.bf16.msra.mxu0 %v2248
      %2313 = vmatprep.subr.bf16.mxu0 0
      %2314 = vmatpush1.bf16.msra.mxu0 %v2247
      %2315 = vmatprep.subr.bf16.mxu0 0
      %2316 = vmatpush1.bf16.msra.mxu0 %v2246
      %2317 = vmatprep.subr.bf16.mxu0 0
      %2318 = vmatpush1.bf16.msra.mxu0 %v2245
      %2319 = vmatprep.subr.bf16.mxu0 0
      %2320 = vmatpush2.bf16.msra.mxu0 0
      %2321 = vmatprep.subr.bf16.mxu0 0
      %2322 = vmatpush2.bf16.msra.mxu0 0
      %2323 = vmatprep.subr.bf16.mxu0 0
      %2324 = vmatpush2.bf16.msra.mxu0 0
      %2325 = vmatprep.subr.bf16.mxu0 0
      %2326 = vmatpush2.bf16.msra.mxu0 0
      %2327 = vmatprep.subr.bf16.mxu0 0
      %2328 = vmatpush2.bf16.msra.mxu0 0
      %2329 = vmatprep.subr.bf16.mxu0 0
      %2330 = vmatpush2.bf16.msra.mxu0 0
      %2331 = vmatprep.subr.bf16.mxu0 0
      %2332 = vmatpush2.bf16.msra.mxu0 0
      %2333 = vmatprep.subr.bf16.mxu0 0
      %2334 = vmatpush2.bf16.msra.mxu0 0
      %2335 = vmatprep.mubr.bf16.mxu0 0
      %2336 = vmatmul.mubr.bf16.gmra.mxu0 %v2256
      %v2337 = vpop.f32.mrf.mxu0
      %v2338 = vadd.f32 0.0, %v2337
      %v2339 = vpop.f32.mrf.mxu0
      %v2340 = vpop.f32.mrf.mxu0
      %v2341 = vadd.f32 0.0, %v2340
      %v2342 = vpop.f32.mrf.mxu0
      %2343 = vmatprep.mubr.bf16.mxu0 0
      %2344 = vmatmul.mubr.bf16.gmra.mxu0 %v2258
      %v2345 = vpop.f32.mrf.mxu0
      %v2346 = vadd.f32 0.0, %v2345
      %v2347 = vpop.f32.mrf.mxu0
      %v2348 = vpop.f32.mrf.mxu0
      %v2349 = vadd.f32 0.0, %v2348
      %v2350 = vpop.f32.mrf.mxu0
      %2351 = vmatprep.mubr.bf16.mxu0 0
      %2352 = vmatmul.mubr.bf16.gmra.mxu0 %v2260
      %v2353 = vpop.f32.mrf.mxu0
      %v2354 = vadd.f32 0.0, %v2353
      %v2355 = vpop.f32.mrf.mxu0
      %v2356 = vpop.f32.mrf.mxu0
      %v2357 = vadd.f32 0.0, %v2356
      %v2358 = vpop.f32.mrf.mxu0
      %2359 = vmatprep.mubr.bf16.mxu0 0
      %2360 = vmatmul.mubr.bf16.gmra.mxu0 %v2262
      %v2361 = vpop.f32.mrf.mxu0
      %v2362 = vadd.f32 0.0, %v2361
      %v2363 = vpop.f32.mrf.mxu0
      %v2364 = vpop.f32.mrf.mxu0
      %v2365 = vadd.f32 0.0, %v2364
      %v2366 = vpop.f32.mrf.mxu0
      %2367 = vmatprep.mubr.bf16.mxu0 0
      %2368 = vmatmul.mubr.bf16.gmra.mxu0 %v2264
      %v2369 = vpop.f32.mrf.mxu0
      %v2370 = vadd.f32 0.0, %v2369
      %v2371 = vpop.f32.mrf.mxu0
      %v2372 = vpop.f32.mrf.mxu0
      %v2373 = vadd.f32 0.0, %v2372
      %v2374 = vpop.f32.mrf.mxu0
      %2375 = vmatprep.mubr.bf16.mxu0 0
      %2376 = vmatmul.mubr.bf16.gmra.mxu0 %v2266
      %v2377 = vpop.f32.mrf.mxu0
      %v2378 = vadd.f32 0.0, %v2377
      %v2379 = vpop.f32.mrf.mxu0
      %v2380 = vpop.f32.mrf.mxu0
      %v2381 = vadd.f32 0.0, %v2380
      %v2382 = vpop.f32.mrf.mxu0
      %2383 = vmatprep.mubr.bf16.mxu0 0
      %2384 = vmatmul.mubr.bf16.gmra.mxu0 %v2268
      %v2385 = vpop.f32.mrf.mxu0
      %v2386 = vadd.f32 0.0, %v2385
      %v2387 = vpop.f32.mrf.mxu0
      %v2388 = vpop.f32.mrf.mxu0
      %v2389 = vadd.f32 0.0, %v2388
      %v2390 = vpop.f32.mrf.mxu0
      %2391 = vmatprep.mubr.bf16.mxu0 0
      %2392 = vmatmul.mubr.bf16.gmra.mxu0 %v2270
      %v2393 = vpop.f32.mrf.mxu0
      %v2394 = vadd.f32 0.0, %v2393
      %v2395 = vpop.f32.mrf.mxu0
      %v2396 = vpop.f32.mrf.mxu0
      %v2397 = vadd.f32 0.0, %v2396
      %v2398 = vpop.f32.mrf.mxu0
      %2399 = vmatprep.mubr.bf16.mxu0 0
      %2400 = vmatmul.mubr.bf16.gmra.mxu0 %v2272
      %v2401 = vpop.f32.mrf.mxu0
      %v2402 = vadd.f32 0.0, %v2401
      %v2403 = vpop.f32.mrf.mxu0
      %v2404 = vpop.f32.mrf.mxu0
      %v2405 = vadd.f32 0.0, %v2404
      %v2406 = vpop.f32.mrf.mxu0
      %2407 = vmatprep.mubr.bf16.mxu0 0
      %2408 = vmatmul.mubr.bf16.gmra.mxu0 %v2274
      %v2409 = vpop.f32.mrf.mxu0
      %v2410 = vadd.f32 0.0, %v2409
      %v2411 = vpop.f32.mrf.mxu0
      %v2412 = vpop.f32.mrf.mxu0
      %v2413 = vadd.f32 0.0, %v2412
      %v2414 = vpop.f32.mrf.mxu0
      %2415 = vmatprep.mubr.bf16.mxu0 0
      %2416 = vmatmul.mubr.bf16.gmra.mxu0 %v2276
      %v2417 = vpop.f32.mrf.mxu0
      %v2418 = vadd.f32 0.0, %v2417
      %v2419 = vpop.f32.mrf.mxu0
      %v2420 = vpop.f32.mrf.mxu0
      %v2421 = vadd.f32 0.0, %v2420
      %v2422 = vpop.f32.mrf.mxu0
      %2423 = vmatprep.mubr.bf16.mxu0 0
      %2424 = vmatmul.mubr.bf16.gmra.mxu0 %v2278
      %v2425 = vpop.f32.mrf.mxu0
      %v2426 = vadd.f32 0.0, %v2425
      %v2427 = vpop.f32.mrf.mxu0
      %v2428 = vpop.f32.mrf.mxu0
      %v2429 = vadd.f32 0.0, %v2428
      %v2430 = vpop.f32.mrf.mxu0
      %2431 = vmatprep.mubr.bf16.mxu0 0
      %2432 = vmatmul.mubr.bf16.gmra.mxu0 %v2280
      %v2433 = vpop.f32.mrf.mxu0
      %v2434 = vadd.f32 0.0, %v2433
      %v2435 = vpop.f32.mrf.mxu0
      %v2436 = vpop.f32.mrf.mxu0
      %v2437 = vadd.f32 0.0, %v2436
      %v2438 = vpop.f32.mrf.mxu0
      %2439 = vmatprep.mubr.bf16.mxu0 0
      %2440 = vmatmul.mubr.bf16.gmra.mxu0 %v2282
      %v2441 = vpop.f32.mrf.mxu0
      %v2442 = vadd.f32 0.0, %v2441
      %v2443 = vpop.f32.mrf.mxu0
      %v2444 = vpop.f32.mrf.mxu0
      %v2445 = vadd.f32 0.0, %v2444
      %v2446 = vpop.f32.mrf.mxu0
      %2447 = vmatprep.mubr.bf16.mxu0 0
      %2448 = vmatmul.mubr.bf16.gmra.mxu0 %v2284
      %v2449 = vpop.f32.mrf.mxu0
      %v2450 = vadd.f32 0.0, %v2449
      %v2451 = vpop.f32.mrf.mxu0
      %v2452 = vpop.f32.mrf.mxu0
      %v2453 = vadd.f32 0.0, %v2452
      %v2454 = vpop.f32.mrf.mxu0
      %2455 = vmatprep.mubr.bf16.mxu0 0
      %2456 = vmatmul.mubr.bf16.gmra.mxu0 %v2286
      %v2457 = vpop.f32.mrf.mxu0
      %v2458 = vadd.f32 0.0, %v2457
      %v2459 = vpop.f32.mrf.mxu0
      %v2460 = vpop.f32.mrf.mxu0
      %v2461 = vadd.f32 0.0, %v2460
      %v2462 = vpop.f32.mrf.mxu0
      %2463 = vdwg.mxu0
      %v2464 = vadd.f32 %v2197, %v2338
      %v2465 = vadd.f32 %v2198, %v2341
      %v2466 = vadd.f32 %v2199, %v2346
      %v2467 = vadd.f32 %v2200, %v2349
      %v2468 = vadd.f32 %v2201, %v2354
      %v2469 = vadd.f32 %v2202, %v2357
      %v2470 = vadd.f32 %v2203, %v2362
      %v2471 = vadd.f32 %v2204, %v2365
      %v2472 = vadd.f32 %v2205, %v2370
      %v2473 = vadd.f32 %v2206, %v2373
      %v2474 = vadd.f32 %v2207, %v2378
      %v2475 = vadd.f32 %v2208, %v2381
      %v2476 = vadd.f32 %v2209, %v2386
      %v2477 = vadd.f32 %v2210, %v2389
      %v2478 = vadd.f32 %v2211, %v2394
      %v2479 = vadd.f32 %v2212, %v2397
      %v2480 = vadd.f32 %v2213, %v2402
      %v2481 = vadd.f32 %v2214, %v2405
      %v2482 = vadd.f32 %v2215, %v2410
      %v2483 = vadd.f32 %v2216, %v2413
      %v2484 = vadd.f32 %v2217, %v2418
      %v2485 = vadd.f32 %v2218, %v2421
      %v2486 = vadd.f32 %v2219, %v2426
      %v2487 = vadd.f32 %v2220, %v2429
      %v2488 = vadd.f32 %v2221, %v2434
      %v2489 = vadd.f32 %v2222, %v2437
      %v2490 = vadd.f32 %v2223, %v2442
      %v2491 = vadd.f32 %v2224, %v2445
      %v2492 = vadd.f32 %v2225, %v2450
      %v2493 = vadd.f32 %v2226, %v2453
      %v2494 = vadd.f32 %v2227, %v2458
      %v2495 = vadd.f32 %v2228, %v2461
      %v2496 = vpack.c.bf16 %v869, %v868
      %v2497 = vpack.c.bf16 %v870, %v870
      %v2498 = vld [vmem:[%s5 + $0x300] sm:$0xff]
      %v2499 = vld [vmem:[%s5 + $0x308] sm:$0xff]
      %v2500 = vld [vmem:[%s5 + $0x310] sm:$0xff]
      %v2501 = vld [vmem:[%s5 + $0x318] sm:$0xff]
      %v2502 = vld [vmem:[%s5 + $0x320] sm:$0xff]
      %v2503 = vld [vmem:[%s5 + $0x328] sm:$0xff]
      %v2504 = vld [vmem:[%s5 + $0x330] sm:$0xff]
      %v2505 = vld [vmem:[%s5 + $0x338] sm:$0xff]
      %v2506 = vld [vmem:[%s5 + $0x340] sm:$0xff]
      %v2507 = vld [vmem:[%s5 + $0x348] sm:$0xff]
      %v2508 = vld [vmem:[%s5 + $0x350] sm:$0xff]
      %v2509 = vld [vmem:[%s5 + $0x358] sm:$0xff]
      %v2510 = vld [vmem:[%s5 + $0x360] sm:$0xff]
      %v2511 = vld [vmem:[%s5 + $0x368] sm:$0xff]
      %v2512 = vld [vmem:[%s5 + $0x370] sm:$0xff]
      %v2513 = vld [vmem:[%s5 + $0x378] sm:$0xff]
      %v2514 = vpack.c.bf16 %v2499, %v2498
      %v2515 = vpack.c.bf16 %v2501, %v2500
      %v2516 = vpack.c.bf16 %v2503, %v2502
      %v2517 = vpack.c.bf16 %v2505, %v2504
      %v2518 = vpack.c.bf16 %v2507, %v2506
      %v2519 = vpack.c.bf16 %v2509, %v2508
      %v2520 = vpack.c.bf16 %v2511, %v2510
      %v2521 = vpack.c.bf16 %v2513, %v2512
      %v2524 = vrot.slane %v2496, 2
      %v2525 = vsel %vm2253, %v2283, %v2524
      %v2526 = vrot.slane %v2497, 2
      %v2527 = vsel %vm2253, %v2524, %v2526
      %2530 = vmatprep.subr.bf16.mxu0 0
      %2531 = vmatpush1.bf16.msra.mxu0 %v2521
      %2532 = vmatprep.subr.bf16.mxu0 0
      %2533 = vmatpush1.bf16.msra.mxu0 %v2520
      %2534 = vmatprep.subr.bf16.mxu0 0
      %2535 = vmatpush1.bf16.msra.mxu0 %v2519
      %2536 = vmatprep.subr.bf16.mxu0 0
      %2537 = vmatpush1.bf16.msra.mxu0 %v2518
      %2538 = vmatprep.subr.bf16.mxu0 0
      %2539 = vmatpush1.bf16.msra.mxu0 %v2517
      %2540 = vmatprep.subr.bf16.mxu0 0
      %2541 = vmatpush1.bf16.msra.mxu0 %v2516
      %2542 = vmatprep.subr.bf16.mxu0 0
      %2543 = vmatpush1.bf16.msra.mxu0 %v2515
      %2544 = vmatprep.subr.bf16.mxu0 0
      %2545 = vmatpush1.bf16.msra.mxu0 %v2514
      %2546 = vmatprep.subr.bf16.mxu0 0
      %2547 = vmatpush2.bf16.msra.mxu0 0
      %2548 = vmatprep.subr.bf16.mxu0 0
      %2549 = vmatpush2.bf16.msra.mxu0 0
      %2550 = vmatprep.subr.bf16.mxu0 0
      %2551 = vmatpush2.bf16.msra.mxu0 0
      %2552 = vmatprep.subr.bf16.mxu0 0
      %2553 = vmatpush2.bf16.msra.mxu0 0
      %2554 = vmatprep.subr.bf16.mxu0 0
      %2555 = vmatpush2.bf16.msra.mxu0 0
      %2556 = vmatprep.subr.bf16.mxu0 0
      %2557 = vmatpush2.bf16.msra.mxu0 0
      %2558 = vmatprep.subr.bf16.mxu0 0
      %2559 = vmatpush2.bf16.msra.mxu0 0
      %2560 = vmatprep.subr.bf16.mxu0 0
      %2561 = vmatpush2.bf16.msra.mxu0 0
      %2562 = vmatprep.mubr.bf16.mxu0 0
      %2563 = vmatmul.mubr.bf16.gmra.mxu0 %v2258
      %v2564 = vpop.f32.mrf.mxu0
      %v2565 = vadd.f32 0.0, %v2564
      %v2566 = vpop.f32.mrf.mxu0
      %v2567 = vpop.f32.mrf.mxu0
      %v2568 = vadd.f32 0.0, %v2567
      %v2569 = vpop.f32.mrf.mxu0
      %2570 = vmatprep.mubr.bf16.mxu0 0
      %2571 = vmatmul.mubr.bf16.gmra.mxu0 %v2260
      %v2572 = vpop.f32.mrf.mxu0
      %v2573 = vadd.f32 0.0, %v2572
      %v2574 = vpop.f32.mrf.mxu0
      %v2575 = vpop.f32.mrf.mxu0
      %v2576 = vadd.f32 0.0, %v2575
      %v2577 = vpop.f32.mrf.mxu0
      %2578 = vmatprep.mubr.bf16.mxu0 0
      %2579 = vmatmul.mubr.bf16.gmra.mxu0 %v2262
      %v2580 = vpop.f32.mrf.mxu0
      %v2581 = vadd.f32 0.0, %v2580
      %v2582 = vpop.f32.mrf.mxu0
      %v2583 = vpop.f32.mrf.mxu0
      %v2584 = vadd.f32 0.0, %v2583
      %v2585 = vpop.f32.mrf.mxu0
      %2586 = vmatprep.mubr.bf16.mxu0 0
      %2587 = vmatmul.mubr.bf16.gmra.mxu0 %v2264
      %v2588 = vpop.f32.mrf.mxu0
      %v2589 = vadd.f32 0.0, %v2588
      %v2590 = vpop.f32.mrf.mxu0
      %v2591 = vpop.f32.mrf.mxu0
      %v2592 = vadd.f32 0.0, %v2591
      %v2593 = vpop.f32.mrf.mxu0
      %2594 = vmatprep.mubr.bf16.mxu0 0
      %2595 = vmatmul.mubr.bf16.gmra.mxu0 %v2266
      %v2596 = vpop.f32.mrf.mxu0
      %v2597 = vadd.f32 0.0, %v2596
      %v2598 = vpop.f32.mrf.mxu0
      %v2599 = vpop.f32.mrf.mxu0
      %v2600 = vadd.f32 0.0, %v2599
      %v2601 = vpop.f32.mrf.mxu0
      %2602 = vmatprep.mubr.bf16.mxu0 0
      %2603 = vmatmul.mubr.bf16.gmra.mxu0 %v2268
      %v2604 = vpop.f32.mrf.mxu0
      %v2605 = vadd.f32 0.0, %v2604
      %v2606 = vpop.f32.mrf.mxu0
      %v2607 = vpop.f32.mrf.mxu0
      %v2608 = vadd.f32 0.0, %v2607
      %v2609 = vpop.f32.mrf.mxu0
      %2610 = vmatprep.mubr.bf16.mxu0 0
      %2611 = vmatmul.mubr.bf16.gmra.mxu0 %v2270
      %v2612 = vpop.f32.mrf.mxu0
      %v2613 = vadd.f32 0.0, %v2612
      %v2614 = vpop.f32.mrf.mxu0
      %v2615 = vpop.f32.mrf.mxu0
      %v2616 = vadd.f32 0.0, %v2615
      %v2617 = vpop.f32.mrf.mxu0
      %2618 = vmatprep.mubr.bf16.mxu0 0
      %2619 = vmatmul.mubr.bf16.gmra.mxu0 %v2272
      %v2620 = vpop.f32.mrf.mxu0
      %v2621 = vadd.f32 0.0, %v2620
      %v2622 = vpop.f32.mrf.mxu0
      %v2623 = vpop.f32.mrf.mxu0
      %v2624 = vadd.f32 0.0, %v2623
      %v2625 = vpop.f32.mrf.mxu0
      %2626 = vmatprep.mubr.bf16.mxu0 0
      %2627 = vmatmul.mubr.bf16.gmra.mxu0 %v2274
      %v2628 = vpop.f32.mrf.mxu0
      %v2629 = vadd.f32 0.0, %v2628
      %v2630 = vpop.f32.mrf.mxu0
      %v2631 = vpop.f32.mrf.mxu0
      %v2632 = vadd.f32 0.0, %v2631
      %v2633 = vpop.f32.mrf.mxu0
      %2634 = vmatprep.mubr.bf16.mxu0 0
      %2635 = vmatmul.mubr.bf16.gmra.mxu0 %v2276
      %v2636 = vpop.f32.mrf.mxu0
      %v2637 = vadd.f32 0.0, %v2636
      %v2638 = vpop.f32.mrf.mxu0
      %v2639 = vpop.f32.mrf.mxu0
      %v2640 = vadd.f32 0.0, %v2639
      %v2641 = vpop.f32.mrf.mxu0
      %2642 = vmatprep.mubr.bf16.mxu0 0
      %2643 = vmatmul.mubr.bf16.gmra.mxu0 %v2278
      %v2644 = vpop.f32.mrf.mxu0
      %v2645 = vadd.f32 0.0, %v2644
      %v2646 = vpop.f32.mrf.mxu0
      %v2647 = vpop.f32.mrf.mxu0
      %v2648 = vadd.f32 0.0, %v2647
      %v2649 = vpop.f32.mrf.mxu0
      %2650 = vmatprep.mubr.bf16.mxu0 0
      %2651 = vmatmul.mubr.bf16.gmra.mxu0 %v2280
      %v2652 = vpop.f32.mrf.mxu0
      %v2653 = vadd.f32 0.0, %v2652
      %v2654 = vpop.f32.mrf.mxu0
      %v2655 = vpop.f32.mrf.mxu0
      %v2656 = vadd.f32 0.0, %v2655
      %v2657 = vpop.f32.mrf.mxu0
      %2658 = vmatprep.mubr.bf16.mxu0 0
      %2659 = vmatmul.mubr.bf16.gmra.mxu0 %v2282
      %v2660 = vpop.f32.mrf.mxu0
      %v2661 = vadd.f32 0.0, %v2660
      %v2662 = vpop.f32.mrf.mxu0
      %v2663 = vpop.f32.mrf.mxu0
      %v2664 = vadd.f32 0.0, %v2663
      %v2665 = vpop.f32.mrf.mxu0
      %2666 = vmatprep.mubr.bf16.mxu0 0
      %2667 = vmatmul.mubr.bf16.gmra.mxu0 %v2284
      %v2668 = vpop.f32.mrf.mxu0
      %v2669 = vadd.f32 0.0, %v2668
      %v2670 = vpop.f32.mrf.mxu0
      %v2671 = vpop.f32.mrf.mxu0
      %v2672 = vadd.f32 0.0, %v2671
      %v2673 = vpop.f32.mrf.mxu0
      %2674 = vmatprep.mubr.bf16.mxu0 0
      %2675 = vmatmul.mubr.bf16.gmra.mxu0 %v2525
      %v2676 = vpop.f32.mrf.mxu0
      %v2677 = vadd.f32 0.0, %v2676
      %v2678 = vpop.f32.mrf.mxu0
      %v2679 = vpop.f32.mrf.mxu0
      %v2680 = vadd.f32 0.0, %v2679
      %v2681 = vpop.f32.mrf.mxu0
      %2682 = vmatprep.mubr.bf16.mxu0 0
      %2683 = vmatmul.mubr.bf16.gmra.mxu0 %v2527
      %v2684 = vpop.f32.mrf.mxu0
      %v2685 = vadd.f32 0.0, %v2684
      %v2686 = vpop.f32.mrf.mxu0
      %v2687 = vpop.f32.mrf.mxu0
      %v2688 = vadd.f32 0.0, %v2687
      %v2689 = vpop.f32.mrf.mxu0
      %2690 = vdwg.mxu0
      %v2691 = vadd.f32 %v2464, %v2565
      %v2692 = vadd.f32 %v2465, %v2568
      %v2693 = vadd.f32 %v2466, %v2573
      %v2694 = vadd.f32 %v2467, %v2576
      %v2695 = vadd.f32 %v2468, %v2581
      %v2696 = vadd.f32 %v2469, %v2584
      %v2697 = vadd.f32 %v2470, %v2589
      %v2698 = vadd.f32 %v2471, %v2592
      %v2699 = vadd.f32 %v2472, %v2597
      %v2700 = vadd.f32 %v2473, %v2600
      %v2701 = vadd.f32 %v2474, %v2605
      %v2702 = vadd.f32 %v2475, %v2608
      %v2703 = vadd.f32 %v2476, %v2613
      %v2704 = vadd.f32 %v2477, %v2616
      %v2705 = vadd.f32 %v2478, %v2621
      %v2706 = vadd.f32 %v2479, %v2624
      %v2707 = vadd.f32 %v2480, %v2629
      %v2708 = vadd.f32 %v2481, %v2632
      %v2709 = vadd.f32 %v2482, %v2637
      %v2710 = vadd.f32 %v2483, %v2640
      %v2711 = vadd.f32 %v2484, %v2645
      %v2712 = vadd.f32 %v2485, %v2648
      %v2713 = vadd.f32 %v2486, %v2653
      %v2714 = vadd.f32 %v2487, %v2656
      %v2715 = vadd.f32 %v2488, %v2661
      %v2716 = vadd.f32 %v2489, %v2664
      %v2717 = vadd.f32 %v2490, %v2669
      %v2718 = vadd.f32 %v2491, %v2672
      %v2719 = vadd.f32 %v2492, %v2677
      %v2720 = vadd.f32 %v2493, %v2680
      %v2721 = vadd.f32 %v2494, %v2685
      %v2722 = vadd.f32 %v2495, %v2688
      %v2723 = vld [vmem:[%s5 + $0x380] sm:$0xff]
      %v2724 = vld [vmem:[%s5 + $0x388] sm:$0xff]
      %v2725 = vld [vmem:[%s5 + $0x390] sm:$0xff]
      %v2726 = vld [vmem:[%s5 + $0x398] sm:$0xff]
      %v2727 = vld [vmem:[%s5 + $0x3a0] sm:$0xff]
      %v2728 = vld [vmem:[%s5 + $0x3a8] sm:$0xff]
      %v2729 = vld [vmem:[%s5 + $0x3b0] sm:$0xff]
      %v2730 = vld [vmem:[%s5 + $0x3b8] sm:$0xff]
      %v2731 = vld [vmem:[%s5 + $0x3c0] sm:$0xff]
      %v2732 = vld [vmem:[%s5 + $0x3c8] sm:$0xff]
      %v2733 = vld [vmem:[%s5 + $0x3d0] sm:$0xff]
      %v2734 = vld [vmem:[%s5 + $0x3d8] sm:$0xff]
      %v2735 = vld [vmem:[%s5 + $0x3e0] sm:$0xff]
      %v2736 = vld [vmem:[%s5 + $0x3e8] sm:$0xff]
      %v2737 = vld [vmem:[%s5 + $0x3f0] sm:$0xff]
      %v2738 = vld [vmem:[%s5 + $0x3f8] sm:$0xff]
      %v2739 = vpack.c.bf16 %v2724, %v2723
      %v2740 = vpack.c.bf16 %v2726, %v2725
      %v2741 = vpack.c.bf16 %v2728, %v2727
      %v2742 = vpack.c.bf16 %v2730, %v2729
      %v2743 = vpack.c.bf16 %v2732, %v2731
      %v2744 = vpack.c.bf16 %v2734, %v2733
      %v2745 = vpack.c.bf16 %v2736, %v2735
      %v2746 = vpack.c.bf16 %v2738, %v2737
      %vm2747 = vsmask.f32 5376
      %v2748 = vrot.slane %v957, 2
      %v2749 = vrot.slane %v953, 3
      %v2750 = vor.u32 %v2748, %v2749
      %v2751 = vrot.slane %v965, 2
      %v2752 = vrot.slane %v961, 3
      %v2753 = vor.u32 %v2751, %v2752
      %v2754 = vsel %vm2747, %v2750, %v2753
      %v2755 = vrot.slane %v973, 2
      %v2756 = vrot.slane %v969, 3
      %v2757 = vor.u32 %v2755, %v2756
      %v2758 = vsel %vm2747, %v2753, %v2757
      %v2759 = vrot.slane %v981, 2
      %v2760 = vrot.slane %v977, 3
      %v2761 = vor.u32 %v2759, %v2760
      %v2762 = vsel %vm2747, %v2757, %v2761
      %v2763 = vrot.slane %v989, 2
      %v2764 = vrot.slane %v985, 3
      %v2765 = vor.u32 %v2763, %v2764
      %v2766 = vsel %vm2747, %v2761, %v2765
      %v2767 = vrot.slane %v997, 2
      %v2768 = vrot.slane %v993, 3
      %v2769 = vor.u32 %v2767, %v2768
      %v2770 = vsel %vm2747, %v2765, %v2769
      %v2771 = vrot.slane %v1005, 2
      %v2772 = vrot.slane %v1001, 3
      %v2773 = vor.u32 %v2771, %v2772
      %v2774 = vsel %vm2747, %v2769, %v2773
      %v2775 = vrot.slane %v1013, 2
      %v2776 = vrot.slane %v1009, 3
      %v2777 = vor.u32 %v2775, %v2776
      %v2778 = vsel %vm2747, %v2773, %v2777
      %v2779 = vrot.slane %v1021, 2
      %v2780 = vrot.slane %v1017, 3
      %v2781 = vor.u32 %v2779, %v2780
      %v2782 = vsel %vm2747, %v2777, %v2781
      %v2783 = vrot.slane %v1029, 2
      %v2784 = vrot.slane %v1025, 3
      %v2785 = vor.u32 %v2783, %v2784
      %v2786 = vsel %vm2747, %v2781, %v2785
      %v2787 = vrot.slane %v1037, 2
      %v2788 = vrot.slane %v1033, 3
      %v2789 = vor.u32 %v2787, %v2788
      %v2790 = vsel %vm2747, %v2785, %v2789
      %v2791 = vrot.slane %v1045, 2
      %v2792 = vrot.slane %v1041, 3
      %v2793 = vor.u32 %v2791, %v2792
      %v2794 = vsel %vm2747, %v2789, %v2793
      %v2795 = vrot.slane %v1053, 2
      %v2796 = vrot.slane %v1049, 3
      %v2797 = vor.u32 %v2795, %v2796
      %v2798 = vsel %vm2747, %v2793, %v2797
      %v2799 = vrot.slane %v1061, 2
      %v2800 = vrot.slane %v1057, 3
      %v2801 = vor.u32 %v2799, %v2800
      %v2802 = vsel %vm2747, %v2797, %v2801
      %v2803 = vrot.slane %v2003, 2
      %v2804 = vrot.slane %v2006, 3
      %v2805 = vor.u32 %v2803, %v2804
      %v2806 = vsel %vm2747, %v2801, %v2805
      %v2808 = vshrl.u32 %v2496, 16
      %v2810 = vrot.slane %v2808, 2
      %v2811 = vshll.u32 %v2496, 16
      %v2813 = vrot.slane %v2811, 3
      %v2814 = vor.u32 %v2810, %v2813
      %v2815 = vsel %vm2747, %v2805, %v2814
      %v2817 = vshrl.u32 %v2497, 16
      %v2819 = vrot.slane %v2817, 2
      %v2820 = vshll.u32 %v2497, 16
      %v2822 = vrot.slane %v2820, 3
      %v2823 = vor.u32 %v2819, %v2822
      %v2824 = vsel %vm2747, %v2814, %v2823
      %2841 = vmatprep.subr.bf16.mxu0 0
      %2842 = vmatpush1.bf16.msra.mxu0 %v2746
      %2843 = vmatprep.subr.bf16.mxu0 0
      %2844 = vmatpush1.bf16.msra.mxu0 %v2745
      %2845 = vmatprep.subr.bf16.mxu0 0
      %2846 = vmatpush1.bf16.msra.mxu0 %v2744
      %2847 = vmatprep.subr.bf16.mxu0 0
      %2848 = vmatpush1.bf16.msra.mxu0 %v2743
      %2849 = vmatprep.subr.bf16.mxu0 0
      %2850 = vmatpush1.bf16.msra.mxu0 %v2742
      %2851 = vmatprep.subr.bf16.mxu0 0
      %2852 = vmatpush1.bf16.msra.mxu0 %v2741
      %2853 = vmatprep.subr.bf16.mxu0 0
      %2854 = vmatpush1.bf16.msra.mxu0 %v2740
      %2855 = vmatprep.subr.bf16.mxu0 0
      %2856 = vmatpush1.bf16.msra.mxu0 %v2739
      %2857 = vmatprep.subr.bf16.mxu0 0
      %2858 = vmatpush2.bf16.msra.mxu0 0
      %2859 = vmatprep.subr.bf16.mxu0 0
      %2860 = vmatpush2.bf16.msra.mxu0 0
      %2861 = vmatprep.subr.bf16.mxu0 0
      %2862 = vmatpush2.bf16.msra.mxu0 0
      %2863 = vmatprep.subr.bf16.mxu0 0
      %2864 = vmatpush2.bf16.msra.mxu0 0
      %2865 = vmatprep.subr.bf16.mxu0 0
      %2866 = vmatpush2.bf16.msra.mxu0 0
      %2867 = vmatprep.subr.bf16.mxu0 0
      %2868 = vmatpush2.bf16.msra.mxu0 0
      %2869 = vmatprep.subr.bf16.mxu0 0
      %2870 = vmatpush2.bf16.msra.mxu0 0
      %2871 = vmatprep.subr.bf16.mxu0 0
      %2872 = vmatpush2.bf16.msra.mxu0 0
      %2873 = vmatprep.mubr.bf16.mxu0 0
      %2874 = vmatmul.mubr.bf16.gmra.mxu0 %v2754
      %v2875 = vpop.f32.mrf.mxu0
      %v2876 = vadd.f32 0.0, %v2875
      %v2877 = vpop.f32.mrf.mxu0
      %v2878 = vpop.f32.mrf.mxu0
      %v2879 = vadd.f32 0.0, %v2878
      %v2880 = vpop.f32.mrf.mxu0
      %2881 = vmatprep.mubr.bf16.mxu0 0
      %2882 = vmatmul.mubr.bf16.gmra.mxu0 %v2758
      %v2883 = vpop.f32.mrf.mxu0
      %v2884 = vadd.f32 0.0, %v2883
      %v2885 = vpop.f32.mrf.mxu0
      %v2886 = vpop.f32.mrf.mxu0
      %v2887 = vadd.f32 0.0, %v2886
      %v2888 = vpop.f32.mrf.mxu0
      %2889 = vmatprep.mubr.bf16.mxu0 0
      %2890 = vmatmul.mubr.bf16.gmra.mxu0 %v2762
      %v2891 = vpop.f32.mrf.mxu0
      %v2892 = vadd.f32 0.0, %v2891
      %v2893 = vpop.f32.mrf.mxu0
      %v2894 = vpop.f32.mrf.mxu0
      %v2895 = vadd.f32 0.0, %v2894
      %v2896 = vpop.f32.mrf.mxu0
      %2897 = vmatprep.mubr.bf16.mxu0 0
      %2898 = vmatmul.mubr.bf16.gmra.mxu0 %v2766
      %v2899 = vpop.f32.mrf.mxu0
      %v2900 = vadd.f32 0.0, %v2899
      %v2901 = vpop.f32.mrf.mxu0
      %v2902 = vpop.f32.mrf.mxu0
      %v2903 = vadd.f32 0.0, %v2902
      %v2904 = vpop.f32.mrf.mxu0
      %2905 = vmatprep.mubr.bf16.mxu0 0
      %2906 = vmatmul.mubr.bf16.gmra.mxu0 %v2770
      %v2907 = vpop.f32.mrf.mxu0
      %v2908 = vadd.f32 0.0, %v2907
      %v2909 = vpop.f32.mrf.mxu0
      %v2910 = vpop.f32.mrf.mxu0
      %v2911 = vadd.f32 0.0, %v2910
      %v2912 = vpop.f32.mrf.mxu0
      %2913 = vmatprep.mubr.bf16.mxu0 0
      %2914 = vmatmul.mubr.bf16.gmra.mxu0 %v2774
      %v2915 = vpop.f32.mrf.mxu0
      %v2916 = vadd.f32 0.0, %v2915
      %v2917 = vpop.f32.mrf.mxu0
      %v2918 = vpop.f32.mrf.mxu0
      %v2919 = vadd.f32 0.0, %v2918
      %v2920 = vpop.f32.mrf.mxu0
      %2921 = vmatprep.mubr.bf16.mxu0 0
      %2922 = vmatmul.mubr.bf16.gmra.mxu0 %v2778
      %v2923 = vpop.f32.mrf.mxu0
      %v2924 = vadd.f32 0.0, %v2923
      %v2925 = vpop.f32.mrf.mxu0
      %v2926 = vpop.f32.mrf.mxu0
      %v2927 = vadd.f32 0.0, %v2926
      %v2928 = vpop.f32.mrf.mxu0
      %2929 = vmatprep.mubr.bf16.mxu0 0
      %2930 = vmatmul.mubr.bf16.gmra.mxu0 %v2782
      %v2931 = vpop.f32.mrf.mxu0
      %v2932 = vadd.f32 0.0, %v2931
      %v2933 = vpop.f32.mrf.mxu0
      %v2934 = vpop.f32.mrf.mxu0
      %v2935 = vadd.f32 0.0, %v2934
      %v2936 = vpop.f32.mrf.mxu0
      %2937 = vmatprep.mubr.bf16.mxu0 0
      %2938 = vmatmul.mubr.bf16.gmra.mxu0 %v2786
      %v2939 = vpop.f32.mrf.mxu0
      %v2940 = vadd.f32 0.0, %v2939
      %v2941 = vpop.f32.mrf.mxu0
      %v2942 = vpop.f32.mrf.mxu0
      %v2943 = vadd.f32 0.0, %v2942
      %v2944 = vpop.f32.mrf.mxu0
      %2945 = vmatprep.mubr.bf16.mxu0 0
      %2946 = vmatmul.mubr.bf16.gmra.mxu0 %v2790
      %v2947 = vpop.f32.mrf.mxu0
      %v2948 = vadd.f32 0.0, %v2947
      %v2949 = vpop.f32.mrf.mxu0
      %v2950 = vpop.f32.mrf.mxu0
      %v2951 = vadd.f32 0.0, %v2950
      %v2952 = vpop.f32.mrf.mxu0
      %2953 = vmatprep.mubr.bf16.mxu0 0
      %2954 = vmatmul.mubr.bf16.gmra.mxu0 %v2794
      %v2955 = vpop.f32.mrf.mxu0
      %v2956 = vadd.f32 0.0, %v2955
      %v2957 = vpop.f32.mrf.mxu0
      %v2958 = vpop.f32.mrf.mxu0
      %v2959 = vadd.f32 0.0, %v2958
      %v2960 = vpop.f32.mrf.mxu0
      %2961 = vmatprep.mubr.bf16.mxu0 0
      %2962 = vmatmul.mubr.bf16.gmra.mxu0 %v2798
      %v2963 = vpop.f32.mrf.mxu0
      %v2964 = vadd.f32 0.0, %v2963
      %v2965 = vpop.f32.mrf.mxu0
      %v2966 = vpop.f32.mrf.mxu0
      %v2967 = vadd.f32 0.0, %v2966
      %v2968 = vpop.f32.mrf.mxu0
      %2969 = vmatprep.mubr.bf16.mxu0 0
      %2970 = vmatmul.mubr.bf16.gmra.mxu0 %v2802
      %v2971 = vpop.f32.mrf.mxu0
      %v2972 = vadd.f32 0.0, %v2971
      %v2973 = vpop.f32.mrf.mxu0
      %v2974 = vpop.f32.mrf.mxu0
      %v2975 = vadd.f32 0.0, %v2974
      %v2976 = vpop.f32.mrf.mxu0
      %2977 = vmatprep.mubr.bf16.mxu0 0
      %2978 = vmatmul.mubr.bf16.gmra.mxu0 %v2806
      %v2979 = vpop.f32.mrf.mxu0
      %v2980 = vadd.f32 0.0, %v2979
      %v2981 = vpop.f32.mrf.mxu0
      %v2982 = vpop.f32.mrf.mxu0
      %v2983 = vadd.f32 0.0, %v2982
      %v2984 = vpop.f32.mrf.mxu0
      %2985 = vmatprep.mubr.bf16.mxu0 0
      %2986 = vmatmul.mubr.bf16.gmra.mxu0 %v2815
      %v2987 = vpop.f32.mrf.mxu0
      %v2988 = vadd.f32 0.0, %v2987
      %v2989 = vpop.f32.mrf.mxu0
      %v2990 = vpop.f32.mrf.mxu0
      %v2991 = vadd.f32 0.0, %v2990
      %v2992 = vpop.f32.mrf.mxu0
      %2993 = vmatprep.mubr.bf16.mxu0 0
      %2994 = vmatmul.mubr.bf16.gmra.mxu0 %v2824
      %v2995 = vpop.f32.mrf.mxu0
      %v2996 = vadd.f32 0.0, %v2995
      %v2997 = vpop.f32.mrf.mxu0
      %v2998 = vpop.f32.mrf.mxu0
      %v2999 = vadd.f32 0.0, %v2998
      %v3000 = vpop.f32.mrf.mxu0
      %3001 = vdwg.mxu0
      %v3002 = vadd.f32 %v2691, %v2876
      %v3003 = vadd.f32 %v2692, %v2879
      %v3004 = vadd.f32 %v2693, %v2884
      %v3005 = vadd.f32 %v2694, %v2887
      %v3006 = vadd.f32 %v2695, %v2892
      %v3007 = vadd.f32 %v2696, %v2895
      %v3008 = vadd.f32 %v2697, %v2900
      %v3009 = vadd.f32 %v2698, %v2903
      %v3010 = vadd.f32 %v2699, %v2908
      %v3011 = vadd.f32 %v2700, %v2911
      %v3012 = vadd.f32 %v2701, %v2916
      %v3013 = vadd.f32 %v2702, %v2919
      %v3014 = vadd.f32 %v2703, %v2924
      %v3015 = vadd.f32 %v2704, %v2927
      %v3016 = vadd.f32 %v2705, %v2932
      %v3017 = vadd.f32 %v2706, %v2935
      %v3018 = vadd.f32 %v2707, %v2940
      %v3019 = vadd.f32 %v2708, %v2943
      %v3020 = vadd.f32 %v2709, %v2948
      %v3021 = vadd.f32 %v2710, %v2951
      %v3022 = vadd.f32 %v2711, %v2956
      %v3023 = vadd.f32 %v2712, %v2959
      %v3024 = vadd.f32 %v2713, %v2964
      %v3025 = vadd.f32 %v2714, %v2967
      %v3026 = vadd.f32 %v2715, %v2972
      %v3027 = vadd.f32 %v2716, %v2975
      %v3028 = vadd.f32 %v2717, %v2980
      %v3029 = vadd.f32 %v2718, %v2983
      %v3030 = vadd.f32 %v2719, %v2988
      %v3031 = vadd.f32 %v2720, %v2991
      %v3032 = vadd.f32 %v2721, %v2996
      %v3033 = vadd.f32 %v2722, %v2999
      %v3034 = vld [vmem:[%s5 + $0x400] sm:$0xff]
      %v3035 = vld [vmem:[%s5 + $0x408] sm:$0xff]
      %v3036 = vld [vmem:[%s5 + $0x410] sm:$0xff]
      %v3037 = vld [vmem:[%s5 + $0x418] sm:$0xff]
      %v3038 = vld [vmem:[%s5 + $0x420] sm:$0xff]
      %v3039 = vld [vmem:[%s5 + $0x428] sm:$0xff]
      %v3040 = vld [vmem:[%s5 + $0x430] sm:$0xff]
      %v3041 = vld [vmem:[%s5 + $0x438] sm:$0xff]
      %v3042 = vld [vmem:[%s5 + $0x440] sm:$0xff]
      %v3043 = vld [vmem:[%s5 + $0x448] sm:$0xff]
      %v3044 = vld [vmem:[%s5 + $0x450] sm:$0xff]
      %v3045 = vld [vmem:[%s5 + $0x458] sm:$0xff]
      %v3046 = vld [vmem:[%s5 + $0x460] sm:$0xff]
      %v3047 = vld [vmem:[%s5 + $0x468] sm:$0xff]
      %v3048 = vld [vmem:[%s5 + $0x470] sm:$0xff]
      %v3049 = vld [vmem:[%s5 + $0x478] sm:$0xff]
      %v3050 = vpack.c.bf16 %v3035, %v3034
      %v3051 = vpack.c.bf16 %v3037, %v3036
      %v3052 = vpack.c.bf16 %v3039, %v3038
      %v3053 = vpack.c.bf16 %v3041, %v3040
      %v3054 = vpack.c.bf16 %v3043, %v3042
      %v3055 = vpack.c.bf16 %v3045, %v3044
      %v3056 = vpack.c.bf16 %v3047, %v3046
      %v3057 = vpack.c.bf16 %v3049, %v3048
      %vm3058 = vcmask 1044480
      %v3059 = vrot.slane %v873, 3
      %v3060 = vrot.slane %v874, 3
      %v3061 = vsel %vm3058, %v3059, %v3060
      %v3062 = vrot.slane %v875, 3
      %v3063 = vsel %vm3058, %v3060, %v3062
      %v3064 = vrot.slane %v876, 3
      %v3065 = vsel %vm3058, %v3062, %v3064
      %v3066 = vrot.slane %v877, 3
      %v3067 = vsel %vm3058, %v3064, %v3066
      %v3068 = vrot.slane %v878, 3
      %v3069 = vsel %vm3058, %v3066, %v3068
      %v3070 = vrot.slane %v879, 3
      %v3071 = vsel %vm3058, %v3068, %v3070
      %v3072 = vrot.slane %v880, 3
      %v3073 = vsel %vm3058, %v3070, %v3072
      %v3074 = vrot.slane %v881, 3
      %v3075 = vsel %vm3058, %v3072, %v3074
      %v3076 = vrot.slane %v882, 3
      %v3077 = vsel %vm3058, %v3074, %v3076
      %v3078 = vrot.slane %v883, 3
      %v3079 = vsel %vm3058, %v3076, %v3078
      %v3080 = vrot.slane %v884, 3
      %v3081 = vsel %vm3058, %v3078, %v3080
      %v3082 = vrot.slane %v885, 3
      %v3083 = vsel %vm3058, %v3080, %v3082
      %v3084 = vrot.slane %v886, 3
      %v3085 = vsel %vm3058, %v3082, %v3084
      %v3086 = vrot.slane %v1691, 3
      %v3087 = vsel %vm3058, %v3084, %v3086
      %v3088 = vrot.slane %v2496, 3
      %v3089 = vsel %vm3058, %v3086, %v3088
      %v3090 = vrot.slane %v2497, 3
      %v3091 = vsel %vm3058, %v3088, %v3090
      %3108 = vmatprep.subr.bf16.mxu0 0
      %3109 = vmatpush1.bf16.msra.mxu0 %v3057
      %3110 = vmatprep.subr.bf16.mxu0 0
      %3111 = vmatpush1.bf16.msra.mxu0 %v3056
      %3112 = vmatprep.subr.bf16.mxu0 0
      %3113 = vmatpush1.bf16.msra.mxu0 %v3055
      %3114 = vmatprep.subr.bf16.mxu0 0
      %3115 = vmatpush1.bf16.msra.mxu0 %v3054
      %3116 = vmatprep.subr.bf16.mxu0 0
      %3117 = vmatpush1.bf16.msra.mxu0 %v3053
      %3118 = vmatprep.subr.bf16.mxu0 0
      %3119 = vmatpush1.bf16.msra.mxu0 %v3052
      %3120 = vmatprep.subr.bf16.mxu0 0
      %3121 = vmatpush1.bf16.msra.mxu0 %v3051
      %3122 = vmatprep.subr.bf16.mxu0 0
      %3123 = vmatpush1.bf16.msra.mxu0 %v3050
      %3124 = vmatprep.subr.bf16.mxu0 0
      %3125 = vmatpush2.bf16.msra.mxu0 0
      %3126 = vmatprep.subr.bf16.mxu0 0
      %3127 = vmatpush2.bf16.msra.mxu0 0
      %3128 = vmatprep.subr.bf16.mxu0 0
      %3129 = vmatpush2.bf16.msra.mxu0 0
      %3130 = vmatprep.subr.bf16.mxu0 0
      %3131 = vmatpush2.bf16.msra.mxu0 0
      %3132 = vmatprep.subr.bf16.mxu0 0
      %3133 = vmatpush2.bf16.msra.mxu0 0
      %3134 = vmatprep.subr.bf16.mxu0 0
      %3135 = vmatpush2.bf16.msra.mxu0 0
      %3136 = vmatprep.subr.bf16.mxu0 0
      %3137 = vmatpush2.bf16.msra.mxu0 0
      %3138 = vmatprep.subr.bf16.mxu0 0
      %3139 = vmatpush2.bf16.msra.mxu0 0
      %3140 = vmatprep.mubr.bf16.mxu0 0
      %3141 = vmatmul.mubr.bf16.gmra.mxu0 %v3061
      %v3142 = vpop.f32.mrf.mxu0
      %v3143 = vadd.f32 0.0, %v3142
      %v3144 = vpop.f32.mrf.mxu0
      %v3145 = vpop.f32.mrf.mxu0
      %v3146 = vadd.f32 0.0, %v3145
      %v3147 = vpop.f32.mrf.mxu0
      %3148 = vmatprep.mubr.bf16.mxu0 0
      %3149 = vmatmul.mubr.bf16.gmra.mxu0 %v3063
      %v3150 = vpop.f32.mrf.mxu0
      %v3151 = vadd.f32 0.0, %v3150
      %v3152 = vpop.f32.mrf.mxu0
      %v3153 = vpop.f32.mrf.mxu0
      %v3154 = vadd.f32 0.0, %v3153
      %v3155 = vpop.f32.mrf.mxu0
      %3156 = vmatprep.mubr.bf16.mxu0 0
      %3157 = vmatmul.mubr.bf16.gmra.mxu0 %v3065
      %v3158 = vpop.f32.mrf.mxu0
      %v3159 = vadd.f32 0.0, %v3158
      %v3160 = vpop.f32.mrf.mxu0
      %v3161 = vpop.f32.mrf.mxu0
      %v3162 = vadd.f32 0.0, %v3161
      %v3163 = vpop.f32.mrf.mxu0
      %3164 = vmatprep.mubr.bf16.mxu0 0
      %3165 = vmatmul.mubr.bf16.gmra.mxu0 %v3067
      %v3166 = vpop.f32.mrf.mxu0
      %v3167 = vadd.f32 0.0, %v3166
      %v3168 = vpop.f32.mrf.mxu0
      %v3169 = vpop.f32.mrf.mxu0
      %v3170 = vadd.f32 0.0, %v3169
      %v3171 = vpop.f32.mrf.mxu0
      %3172 = vmatprep.mubr.bf16.mxu0 0
      %3173 = vmatmul.mubr.bf16.gmra.mxu0 %v3069
      %v3174 = vpop.f32.mrf.mxu0
      %v3175 = vadd.f32 0.0, %v3174
      %v3176 = vpop.f32.mrf.mxu0
      %v3177 = vpop.f32.mrf.mxu0
      %v3178 = vadd.f32 0.0, %v3177
      %v3179 = vpop.f32.mrf.mxu0
      %3180 = vmatprep.mubr.bf16.mxu0 0
      %3181 = vmatmul.mubr.bf16.gmra.mxu0 %v3071
      %v3182 = vpop.f32.mrf.mxu0
      %v3183 = vadd.f32 0.0, %v3182
      %v3184 = vpop.f32.mrf.mxu0
      %v3185 = vpop.f32.mrf.mxu0
      %v3186 = vadd.f32 0.0, %v3185
      %v3187 = vpop.f32.mrf.mxu0
      %3188 = vmatprep.mubr.bf16.mxu0 0
      %3189 = vmatmul.mubr.bf16.gmra.mxu0 %v3073
      %v3190 = vpop.f32.mrf.mxu0
      %v3191 = vadd.f32 0.0, %v3190
      %v3192 = vpop.f32.mrf.mxu0
      %v3193 = vpop.f32.mrf.mxu0
      %v3194 = vadd.f32 0.0, %v3193
      %v3195 = vpop.f32.mrf.mxu0
      %3196 = vmatprep.mubr.bf16.mxu0 0
      %3197 = vmatmul.mubr.bf16.gmra.mxu0 %v3075
      %v3198 = vpop.f32.mrf.mxu0
      %v3199 = vadd.f32 0.0, %v3198
      %v3200 = vpop.f32.mrf.mxu0
      %v3201 = vpop.f32.mrf.mxu0
      %v3202 = vadd.f32 0.0, %v3201
      %v3203 = vpop.f32.mrf.mxu0
      %3204 = vmatprep.mubr.bf16.mxu0 0
      %3205 = vmatmul.mubr.bf16.gmra.mxu0 %v3077
      %v3206 = vpop.f32.mrf.mxu0
      %v3207 = vadd.f32 0.0, %v3206
      %v3208 = vpop.f32.mrf.mxu0
      %v3209 = vpop.f32.mrf.mxu0
      %v3210 = vadd.f32 0.0, %v3209
      %v3211 = vpop.f32.mrf.mxu0
      %3212 = vmatprep.mubr.bf16.mxu0 0
      %3213 = vmatmul.mubr.bf16.gmra.mxu0 %v3079
      %v3214 = vpop.f32.mrf.mxu0
      %v3215 = vadd.f32 0.0, %v3214
      %v3216 = vpop.f32.mrf.mxu0
      %v3217 = vpop.f32.mrf.mxu0
      %v3218 = vadd.f32 0.0, %v3217
      %v3219 = vpop.f32.mrf.mxu0
      %3220 = vmatprep.mubr.bf16.mxu0 0
      %3221 = vmatmul.mubr.bf16.gmra.mxu0 %v3081
      %v3222 = vpop.f32.mrf.mxu0
      %v3223 = vadd.f32 0.0, %v3222
      %v3224 = vpop.f32.mrf.mxu0
      %v3225 = vpop.f32.mrf.mxu0
      %v3226 = vadd.f32 0.0, %v3225
      %v3227 = vpop.f32.mrf.mxu0
      %3228 = vmatprep.mubr.bf16.mxu0 0
      %3229 = vmatmul.mubr.bf16.gmra.mxu0 %v3083
      %v3230 = vpop.f32.mrf.mxu0
      %v3231 = vadd.f32 0.0, %v3230
      %v3232 = vpop.f32.mrf.mxu0
      %v3233 = vpop.f32.mrf.mxu0
      %v3234 = vadd.f32 0.0, %v3233
      %v3235 = vpop.f32.mrf.mxu0
      %3236 = vmatprep.mubr.bf16.mxu0 0
      %3237 = vmatmul.mubr.bf16.gmra.mxu0 %v3085
      %v3238 = vpop.f32.mrf.mxu0
      %v3239 = vadd.f32 0.0, %v3238
      %v3240 = vpop.f32.mrf.mxu0
      %v3241 = vpop.f32.mrf.mxu0
      %v3242 = vadd.f32 0.0, %v3241
      %v3243 = vpop.f32.mrf.mxu0
      %3244 = vmatprep.mubr.bf16.mxu0 0
      %3245 = vmatmul.mubr.bf16.gmra.mxu0 %v3087
      %v3246 = vpop.f32.mrf.mxu0
      %v3247 = vadd.f32 0.0, %v3246
      %v3248 = vpop.f32.mrf.mxu0
      %v3249 = vpop.f32.mrf.mxu0
      %v3250 = vadd.f32 0.0, %v3249
      %v3251 = vpop.f32.mrf.mxu0
      %3252 = vmatprep.mubr.bf16.mxu0 0
      %3253 = vmatmul.mubr.bf16.gmra.mxu0 %v3089
      %v3254 = vpop.f32.mrf.mxu0
      %v3255 = vadd.f32 0.0, %v3254
      %v3256 = vpop.f32.mrf.mxu0
      %v3257 = vpop.f32.mrf.mxu0
      %v3258 = vadd.f32 0.0, %v3257
      %v3259 = vpop.f32.mrf.mxu0
      %3260 = vmatprep.mubr.bf16.mxu0 0
      %3261 = vmatmul.mubr.bf16.gmra.mxu0 %v3091
      %v3262 = vpop.f32.mrf.mxu0
      %v3263 = vadd.f32 0.0, %v3262
      %v3264 = vpop.f32.mrf.mxu0
      %v3265 = vpop.f32.mrf.mxu0
      %v3266 = vadd.f32 0.0, %v3265
      %v3267 = vpop.f32.mrf.mxu0
      %3268 = vdwg.mxu0
      %v3269 = vadd.f32 %v3002, %v3143
      %v3270 = vadd.f32 %v3003, %v3146
      %v3271 = vadd.f32 %v3004, %v3151
      %v3272 = vadd.f32 %v3005, %v3154
      %v3273 = vadd.f32 %v3006, %v3159
      %v3274 = vadd.f32 %v3007, %v3162
      %v3275 = vadd.f32 %v3008, %v3167
      %v3276 = vadd.f32 %v3009, %v3170
      %v3277 = vadd.f32 %v3010, %v3175
      %v3278 = vadd.f32 %v3011, %v3178
      %v3279 = vadd.f32 %v3012, %v3183
      %v3280 = vadd.f32 %v3013, %v3186
      %v3281 = vadd.f32 %v3014, %v3191
      %v3282 = vadd.f32 %v3015, %v3194
      %v3283 = vadd.f32 %v3016, %v3199
      %v3284 = vadd.f32 %v3017, %v3202
      %v3285 = vadd.f32 %v3018, %v3207
      %v3286 = vadd.f32 %v3019, %v3210
      %v3287 = vadd.f32 %v3020, %v3215
      %v3288 = vadd.f32 %v3021, %v3218
      %v3289 = vadd.f32 %v3022, %v3223
      %v3290 = vadd.f32 %v3023, %v3226
      %v3291 = vadd.f32 %v3024, %v3231
      %v3292 = vadd.f32 %v3025, %v3234
      %v3293 = vadd.f32 %v3026, %v3239
      %v3294 = vadd.f32 %v3027, %v3242
      %v3295 = vadd.f32 %v3028, %v3247
      %v3296 = vadd.f32 %v3029, %v3250
      %v3297 = vadd.f32 %v3030, %v3255
      %v3298 = vadd.f32 %v3031, %v3258
      %v3299 = vadd.f32 %v3032, %v3263
      %v3300 = vadd.f32 %v3033, %v3266
      %3301 = vst [vmem:[%s443] sm:$0xff] %v3269
      %3302 = vst [vmem:[%s443 + $0x8] sm:$0xff] %v3270
      %3303 = vst [vmem:[%s443 + $0x10] sm:$0xff] %v3271
      %3304 = vst [vmem:[%s443 + $0x18] sm:$0xff] %v3272
      %3305 = vst [vmem:[%s443 + $0x20] sm:$0xff] %v3273
      %3306 = vst [vmem:[%s443 + $0x28] sm:$0xff] %v3274
      %3307 = vst [vmem:[%s443 + $0x30] sm:$0xff] %v3275
      %3308 = vst [vmem:[%s443 + $0x38] sm:$0xff] %v3276
      %3309 = vst [vmem:[%s443 + $0x40] sm:$0xff] %v3277
      %3310 = vst [vmem:[%s443 + $0x48] sm:$0xff] %v3278
      %3311 = vst [vmem:[%s443 + $0x50] sm:$0xff] %v3279
      %3312 = vst [vmem:[%s443 + $0x58] sm:$0xff] %v3280
      %3313 = vst [vmem:[%s443 + $0x60] sm:$0xff] %v3281
      %3314 = vst [vmem:[%s443 + $0x68] sm:$0xff] %v3282
      %3315 = vst [vmem:[%s443 + $0x70] sm:$0xff] %v3283
      %3316 = vst [vmem:[%s443 + $0x78] sm:$0xff] %v3284
      %3317 = vst [vmem:[%s443 + $0x80] sm:$0xff] %v3285
      %3318 = vst [vmem:[%s443 + $0x88] sm:$0xff] %v3286
      %3319 = vst [vmem:[%s443 + $0x90] sm:$0xff] %v3287
      %3320 = vst [vmem:[%s443 + $0x98] sm:$0xff] %v3288
      %3321 = vst [vmem:[%s443 + $0xa0] sm:$0xff] %v3289
      %3322 = vst [vmem:[%s443 + $0xa8] sm:$0xff] %v3290
      %3323 = vst [vmem:[%s443 + $0xb0] sm:$0xff] %v3291
      %3324 = vst [vmem:[%s443 + $0xb8] sm:$0xff] %v3292
      %3325 = vst [vmem:[%s443 + $0xc0] sm:$0xff] %v3293
      %3326 = vst [vmem:[%s443 + $0xc8] sm:$0xff] %v3294
      %3327 = vst [vmem:[%s443 + $0xd0] sm:$0xff] %v3295
      %3328 = vst [vmem:[%s443 + $0xd8] sm:$0xff] %v3296
      %3329 = vst [vmem:[%s443 + $0xe0] sm:$0xff] %v3297
      %3330 = vst [vmem:[%s443 + $0xe8] sm:$0xff] %v3298
      %3331 = vst [vmem:[%s443 + $0xf0] sm:$0xff] %v3299
      %3332 = vst [vmem:[%s443 + $0xf8] sm:$0xff] %v3300
      %v3333 = vld [vmem:[%s437] sm:$0xff]
      %v3334 = vld [vmem:[%s437 + $0x8] sm:$0xff]
      %v3335 = vld [vmem:[%s437 + $0x10] sm:$0xff]
      %v3336 = vld [vmem:[%s437 + $0x18] sm:$0xff]
      %v3337 = vld [vmem:[%s437 + $0x20] sm:$0xff]
      %v3338 = vld [vmem:[%s437 + $0x28] sm:$0xff]
      %v3339 = vld [vmem:[%s437 + $0x30] sm:$0xff]
      %v3340 = vld [vmem:[%s437 + $0x38] sm:$0xff]
      %v3341 = vld [vmem:[%s437 + $0x40] sm:$0xff]
      %v3342 = vld [vmem:[%s437 + $0x48] sm:$0xff]
      %v3343 = vld [vmem:[%s437 + $0x50] sm:$0xff]
      %v3344 = vld [vmem:[%s437 + $0x58] sm:$0xff]
      %v3345 = vld [vmem:[%s437 + $0x60] sm:$0xff]
      %v3346 = vld [vmem:[%s437 + $0x68] sm:$0xff]
      %v3347 = vld [vmem:[%s437 + $0x70] sm:$0xff]
      %v3348 = vld [vmem:[%s437 + $0x78] sm:$0xff]
      %v3349 = vld [vmem:[%s437 + $0x80] sm:$0xff]
      %v3350 = vld [vmem:[%s437 + $0x88] sm:$0xff]
      %v3351 = vld [vmem:[%s437 + $0x90] sm:$0xff]
      %v3352 = vld [vmem:[%s437 + $0x98] sm:$0xff]
      %v3353 = vld [vmem:[%s437 + $0xa0] sm:$0xff]
      %v3354 = vld [vmem:[%s437 + $0xa8] sm:$0xff]
      %v3355 = vld [vmem:[%s437 + $0xb0] sm:$0xff]
      %v3356 = vld [vmem:[%s437 + $0xb8] sm:$0xff]
      %v3357 = vld [vmem:[%s437 + $0xc0] sm:$0xff]
      %v3358 = vld [vmem:[%s437 + $0xc8] sm:$0xff]
      %v3359 = vld [vmem:[%s437 + $0xd0] sm:$0xff]
      %v3360 = vld [vmem:[%s437 + $0xd8] sm:$0xff]
      %v3361 = vld [vmem:[%s437 + $0xe0] sm:$0xff]
      %v3362 = vld [vmem:[%s437 + $0xe8] sm:$0xff]
      %v3363 = vld [vmem:[%s437 + $0xf0] sm:$0xff]
      %v3364 = vld [vmem:[%s437 + $0xf8] sm:$0xff]
      %3366 = vset.pattern.permute.xlu0 0
      %3367 = vperm.xlu0 %3366, %v3333
      %v3368 = vpop.permute.xlu0 %3367
      %3371 = vset.pattern.permute.xlu0 0
      %3372 = vperm.xlu0 %3371, %v3334
      %v3373 = vpop.permute.xlu0 %3372
      %3376 = vset.pattern.permute.xlu0 0
      %3377 = vperm.xlu0 %3376, %v3335
      %v3378 = vpop.permute.xlu0 %3377
      %3381 = vset.pattern.permute.xlu0 0
      %3382 = vperm.xlu0 %3381, %v3336
      %v3383 = vpop.permute.xlu0 %3382
      %3386 = vset.pattern.permute.xlu0 0
      %3387 = vperm.xlu0 %3386, %v3337
      %v3388 = vpop.permute.xlu0 %3387
      %3391 = vset.pattern.permute.xlu0 0
      %3392 = vperm.xlu0 %3391, %v3338
      %v3393 = vpop.permute.xlu0 %3392
      %3396 = vset.pattern.permute.xlu0 0
      %3397 = vperm.xlu0 %3396, %v3339
      %v3398 = vpop.permute.xlu0 %3397
      %3401 = vset.pattern.permute.xlu0 0
      %3402 = vperm.xlu0 %3401, %v3340
      %v3403 = vpop.permute.xlu0 %3402
      %3406 = vset.pattern.permute.xlu0 0
      %3407 = vperm.xlu0 %3406, %v3341
      %v3408 = vpop.permute.xlu0 %3407
      %3411 = vset.pattern.permute.xlu0 0
      %3412 = vperm.xlu0 %3411, %v3342
      %v3413 = vpop.permute.xlu0 %3412
      %3416 = vset.pattern.permute.xlu0 0
      %3417 = vperm.xlu0 %3416, %v3343
      %v3418 = vpop.permute.xlu0 %3417
      %3421 = vset.pattern.permute.xlu0 0
      %3422 = vperm.xlu0 %3421, %v3344
      %v3423 = vpop.permute.xlu0 %3422
      %3426 = vset.pattern.permute.xlu0 0
      %3427 = vperm.xlu0 %3426, %v3345
      %v3428 = vpop.permute.xlu0 %3427
      %3431 = vset.pattern.permute.xlu0 0
      %3432 = vperm.xlu0 %3431, %v3346
      %v3433 = vpop.permute.xlu0 %3432
      %3436 = vset.pattern.permute.xlu0 0
      %3437 = vperm.xlu0 %3436, %v3347
      %v3438 = vpop.permute.xlu0 %3437
      %3441 = vset.pattern.permute.xlu0 0
      %3442 = vperm.xlu0 %3441, %v3348
      %v3443 = vpop.permute.xlu0 %3442
      %3446 = vset.pattern.permute.xlu0 0
      %3447 = vperm.xlu0 %3446, %v3349
      %v3448 = vpop.permute.xlu0 %3447
      %3451 = vset.pattern.permute.xlu0 0
      %3452 = vperm.xlu0 %3451, %v3350
      %v3453 = vpop.permute.xlu0 %3452
      %3456 = vset.pattern.permute.xlu0 0
      %3457 = vperm.xlu0 %3456, %v3351
      %v3458 = vpop.permute.xlu0 %3457
      %3461 = vset.pattern.permute.xlu0 0
      %3462 = vperm.xlu0 %3461, %v3352
      %v3463 = vpop.permute.xlu0 %3462
      %3466 = vset.pattern.permute.xlu0 0
      %3467 = vperm.xlu0 %3466, %v3353
      %v3468 = vpop.permute.xlu0 %3467
      %3471 = vset.pattern.permute.xlu0 0
      %3472 = vperm.xlu0 %3471, %v3354
      %v3473 = vpop.permute.xlu0 %3472
      %3476 = vset.pattern.permute.xlu0 0
      %3477 = vperm.xlu0 %3476, %v3355
      %v3478 = vpop.permute.xlu0 %3477
      %3481 = vset.pattern.permute.xlu0 0
      %3482 = vperm.xlu0 %3481, %v3356
      %v3483 = vpop.permute.xlu0 %3482
      %3486 = vset.pattern.permute.xlu0 0
      %3487 = vperm.xlu0 %3486, %v3357
      %v3488 = vpop.permute.xlu0 %3487
      %3491 = vset.pattern.permute.xlu0 0
      %3492 = vperm.xlu0 %3491, %v3358
      %v3493 = vpop.permute.xlu0 %3492
      %3496 = vset.pattern.permute.xlu0 0
      %3497 = vperm.xlu0 %3496, %v3359
      %v3498 = vpop.permute.xlu0 %3497
      %3501 = vset.pattern.permute.xlu0 0
      %3502 = vperm.xlu0 %3501, %v3360
      %v3503 = vpop.permute.xlu0 %3502
      %3506 = vset.pattern.permute.xlu0 0
      %3507 = vperm.xlu0 %3506, %v3361
      %v3508 = vpop.permute.xlu0 %3507
      %3511 = vset.pattern.permute.xlu0 0
      %3512 = vperm.xlu0 %3511, %v3362
      %v3513 = vpop.permute.xlu0 %3512
      %3516 = vset.pattern.permute.xlu0 0
      %3517 = vperm.xlu0 %3516, %v3363
      %v3518 = vpop.permute.xlu0 %3517
      %3521 = vset.pattern.permute.xlu0 0
      %3522 = vperm.xlu0 %3521, %v3364
      %v3523 = vpop.permute.xlu0 %3522
      %v3525 = vmul.f32 %v3269, %v3368
      %v3526 = vmul.f32 %v3270, %v3373
      %v3527 = vmul.f32 %v3271, %v3378
      %v3528 = vmul.f32 %v3272, %v3383
      %v3529 = vmul.f32 %v3273, %v3388
      %v3530 = vmul.f32 %v3274, %v3393
      %v3531 = vmul.f32 %v3275, %v3398
      %v3532 = vmul.f32 %v3276, %v3403
      %v3533 = vmul.f32 %v3277, %v3408
      %v3534 = vmul.f32 %v3278, %v3413
      %v3535 = vmul.f32 %v3279, %v3418
      %v3536 = vmul.f32 %v3280, %v3423
      %v3537 = vmul.f32 %v3281, %v3428
      %v3538 = vmul.f32 %v3282, %v3433
      %v3539 = vmul.f32 %v3283, %v3438
      %v3540 = vmul.f32 %v3284, %v3443
      %v3541 = vmul.f32 %v3285, %v3448
      %v3542 = vmul.f32 %v3286, %v3453
      %v3543 = vmul.f32 %v3287, %v3458
      %v3544 = vmul.f32 %v3288, %v3463
      %v3545 = vmul.f32 %v3289, %v3468
      %v3546 = vmul.f32 %v3290, %v3473
      %v3547 = vmul.f32 %v3291, %v3478
      %v3548 = vmul.f32 %v3292, %v3483
      %v3549 = vmul.f32 %v3293, %v3488
      %v3550 = vmul.f32 %v3294, %v3493
      %v3551 = vmul.f32 %v3295, %v3498
      %v3552 = vmul.f32 %v3296, %v3503
      %v3553 = vmul.f32 %v3297, %v3508
      %v3554 = vmul.f32 %v3298, %v3513
      %v3555 = vmul.f32 %v3299, %v3518
      %v3556 = vmul.f32 %v3300, %v3523
      %v3557 = vadd.f32 %v3525, %v3526
      %v3558 = vadd.f32 %v3557, %v3527
      %v3559 = vadd.f32 %v3558, %v3528
      %v3560 = vadd.f32 %v3559, %v3529
      %v3561 = vadd.f32 %v3560, %v3530
      %v3562 = vadd.f32 %v3561, %v3531
      %v3563 = vadd.f32 %v3562, %v3532
      %v3564 = vadd.f32 %v3563, %v3533
      %v3565 = vadd.f32 %v3564, %v3534
      %v3566 = vadd.f32 %v3565, %v3535
      %v3567 = vadd.f32 %v3566, %v3536
      %v3568 = vadd.f32 %v3567, %v3537
      %v3569 = vadd.f32 %v3568, %v3538
      %v3570 = vadd.f32 %v3569, %v3539
      %v3571 = vadd.f32 %v3570, %v3540
      %v3572 = vadd.f32 %v3571, %v3541
      %v3573 = vadd.f32 %v3572, %v3542
      %v3574 = vadd.f32 %v3573, %v3543
      %v3575 = vadd.f32 %v3574, %v3544
      %v3576 = vadd.f32 %v3575, %v3545
      %v3577 = vadd.f32 %v3576, %v3546
      %v3578 = vadd.f32 %v3577, %v3547
      %v3579 = vadd.f32 %v3578, %v3548
      %v3580 = vadd.f32 %v3579, %v3549
      %v3581 = vadd.f32 %v3580, %v3550
      %v3582 = vadd.f32 %v3581, %v3551
      %v3583 = vadd.f32 %v3582, %v3552
      %v3584 = vadd.f32 %v3583, %v3553
      %v3585 = vadd.f32 %v3584, %v3554
      %v3586 = vadd.f32 %v3585, %v3555
      %v3587 = vadd.f32 %v3586, %v3556
      %v3588 = vrot.slane %v3587, 4
      %v3589 = vadd.f32 %v3587, %v3588
      %v3590 = vrot.slane %v3589, 2
      %v3591 = vadd.f32 %v3589, %v3590
      %v3592 = vrot.slane %v3591, 1
      %v3593 = vadd.f32 %v3591, %v3592
      %v3594 = vmul.f32 %v3269, %v3269
      %v3595 = vmul.f32 %v3270, %v3270
      %v3596 = vmul.f32 %v3271, %v3271
      %v3597 = vmul.f32 %v3272, %v3272
      %v3598 = vmul.f32 %v3273, %v3273
      %v3599 = vmul.f32 %v3274, %v3274
      %v3600 = vmul.f32 %v3275, %v3275
      %v3601 = vmul.f32 %v3276, %v3276
      %v3602 = vmul.f32 %v3277, %v3277
      %v3603 = vmul.f32 %v3278, %v3278
      %v3604 = vmul.f32 %v3279, %v3279
      %v3605 = vmul.f32 %v3280, %v3280
      %v3606 = vmul.f32 %v3281, %v3281
      %v3607 = vmul.f32 %v3282, %v3282
      %v3608 = vmul.f32 %v3283, %v3283
      %v3609 = vmul.f32 %v3284, %v3284
      %v3610 = vmul.f32 %v3285, %v3285
      %v3611 = vmul.f32 %v3286, %v3286
      %v3612 = vmul.f32 %v3287, %v3287
      %v3613 = vmul.f32 %v3288, %v3288
      %v3614 = vmul.f32 %v3289, %v3289
      %v3615 = vmul.f32 %v3290, %v3290
      %v3616 = vmul.f32 %v3291, %v3291
      %v3617 = vmul.f32 %v3292, %v3292
      %v3618 = vmul.f32 %v3293, %v3293
      %v3619 = vmul.f32 %v3294, %v3294
      %v3620 = vmul.f32 %v3295, %v3295
      %v3621 = vmul.f32 %v3296, %v3296
      %v3622 = vmul.f32 %v3297, %v3297
      %v3623 = vmul.f32 %v3298, %v3298
      %v3624 = vmul.f32 %v3299, %v3299
      %v3625 = vmul.f32 %v3300, %v3300
      %v3626 = vmul.f32 %v3594, %v3368
      %v3627 = vmul.f32 %v3595, %v3373
      %v3628 = vmul.f32 %v3596, %v3378
      %v3629 = vmul.f32 %v3597, %v3383
      %v3630 = vmul.f32 %v3598, %v3388
      %v3631 = vmul.f32 %v3599, %v3393
      %v3632 = vmul.f32 %v3600, %v3398
      %v3633 = vmul.f32 %v3601, %v3403
      %v3634 = vmul.f32 %v3602, %v3408
      %v3635 = vmul.f32 %v3603, %v3413
      %v3636 = vmul.f32 %v3604, %v3418
      %v3637 = vmul.f32 %v3605, %v3423
      %v3638 = vmul.f32 %v3606, %v3428
      %v3639 = vmul.f32 %v3607, %v3433
      %v3640 = vmul.f32 %v3608, %v3438
      %v3641 = vmul.f32 %v3609, %v3443
      %v3642 = vmul.f32 %v3610, %v3448
      %v3643 = vmul.f32 %v3611, %v3453
      %v3644 = vmul.f32 %v3612, %v3458
      %v3645 = vmul.f32 %v3613, %v3463
      %v3646 = vmul.f32 %v3614, %v3468
      %v3647 = vmul.f32 %v3615, %v3473
      %v3648 = vmul.f32 %v3616, %v3478
      %v3649 = vmul.f32 %v3617, %v3483
      %v3650 = vmul.f32 %v3618, %v3488
      %v3651 = vmul.f32 %v3619, %v3493
      %v3652 = vmul.f32 %v3620, %v3498
      %v3653 = vmul.f32 %v3621, %v3503
      %v3654 = vmul.f32 %v3622, %v3508
      %v3655 = vmul.f32 %v3623, %v3513
      %v3656 = vmul.f32 %v3624, %v3518
      %v3657 = vmul.f32 %v3625, %v3523
      %v3658 = vadd.f32 %v3626, %v3627
      %v3659 = vadd.f32 %v3658, %v3628
      %v3660 = vadd.f32 %v3659, %v3629
      %v3661 = vadd.f32 %v3660, %v3630
      %v3662 = vadd.f32 %v3661, %v3631
      %v3663 = vadd.f32 %v3662, %v3632
      %v3664 = vadd.f32 %v3663, %v3633
      %v3665 = vadd.f32 %v3664, %v3634
      %v3666 = vadd.f32 %v3665, %v3635
      %v3667 = vadd.f32 %v3666, %v3636
      %v3668 = vadd.f32 %v3667, %v3637
      %v3669 = vadd.f32 %v3668, %v3638
      %v3670 = vadd.f32 %v3669, %v3639
      %v3671 = vadd.f32 %v3670, %v3640
      %v3672 = vadd.f32 %v3671, %v3641
      %v3673 = vadd.f32 %v3672, %v3642
      %v3674 = vadd.f32 %v3673, %v3643
      %v3675 = vadd.f32 %v3674, %v3644
      %v3676 = vadd.f32 %v3675, %v3645
      %v3677 = vadd.f32 %v3676, %v3646
      %v3678 = vadd.f32 %v3677, %v3647
      %v3679 = vadd.f32 %v3678, %v3648
      %v3680 = vadd.f32 %v3679, %v3649
      %v3681 = vadd.f32 %v3680, %v3650
      %v3682 = vadd.f32 %v3681, %v3651
      %v3683 = vadd.f32 %v3682, %v3652
      %v3684 = vadd.f32 %v3683, %v3653
      %v3685 = vadd.f32 %v3684, %v3654
      %v3686 = vadd.f32 %v3685, %v3655
      %v3687 = vadd.f32 %v3686, %v3656
      %v3688 = vadd.f32 %v3687, %v3657
      %v3689 = vrot.slane %v3688, 4
      %v3690 = vadd.f32 %v3688, %v3689
      %v3691 = vrot.slane %v3690, 2
      %v3692 = vadd.f32 %v3690, %v3691
      %v3693 = vrot.slane %v3692, 1
      %v3694 = vadd.f32 %v3692, %v3693
      %vm3695 = vcmask 1040384
      %v3696 = vsel %vm3695, %v3593, %v3694
      %3697 = vst [vmem:[%s448] sm:$0x3] %v3696
      %s3698 = smul.u32 32, %s21
      %p3699 = scmp.lt.s32.totalorder %s3698, 95
      %s3700 = scalar_select %p3699, %s3698, 95
      %s3701 = smul.addr %s3700, 8
      %s3702 = scalar_lea.vmem %s8, %s3701
      %p3703 = scmp.lt.s32.totalorder %s21, 2
      %s3704 = scalar_select %p3703, %s21, 2
      %s3705 = smul.addr %s3704, 2
      %s3706 = scalar_lea.vmem %s9, %s3705
      // Predicated region
      $region53: #{bottleneck_forward.5} parent=51 // pred_check
        %p3707 = pneg %p236
      $region54: #{bottleneck_forward.5} parent=51 // pred_check_branch
        %3709 = sbr.rel (%p3707) target = $region56
      $region55: #{bottleneck_forward.5} parent=51 // pred_region
        %s3710 = smul.u32 32, %s21
      $region56: #{bottleneck_forward.5} parent=51 // pred_fallthru
        _
      // Predicated region
      $region57: #{bottleneck_forward.5} parent=51 // pred_check
        %p3711 = pneg %p262
      $region58: #{bottleneck_forward.5} parent=51 // pred_check_branch
        %3713 = sbr.rel (%p3711) target = $region60
      $region59: #{bottleneck_forward.5} parent=51 // pred_region
        _
      $region60: #{bottleneck_forward.5} parent=51 // pred_fallthru
        _
    $region52: #{bottleneck_forward.5} parent=5 // pred_fallthru
      _
    %p3714 = scmp.le.s32.totalorder 2, %s16
    // Predicated region
    $region61: #{bottleneck_forward.5} parent=5 // pred_check
      %p3715 = pneg %p3714
    $region62: #{bottleneck_forward.5} parent=5 // pred_check_branch
      %3717 = sbr.rel (%p3715) target = $region64
    $region63: #{bottleneck_forward.5} parent=5 // pred_region
      %s3718 = ssub.s32 %s16, 2
      // Predicated region
      $region65: #{bottleneck_forward.5} parent=63 // pred_check
        %p3719 = pneg %p242
      $region66: #{bottleneck_forward.5} parent=63 // pred_check_branch
        %3721 = sbr.rel (%p3719) target = $region68
      $region67: #{bottleneck_forward.5} parent=63 // pred_region
        %s3722 = smul.u32 32, %s22
        %p3723 = scmp.lt.s32.totalorder %s3722, 95
        %s3724 = scalar_select %p3723, %s3722, 95
        %s3725 = smul.addr %s3724, 8
        %s3726 = scalar_lea.vmem %s8, %s3725
      $region68: #{bottleneck_forward.5} parent=63 // pred_fallthru
        _
      // Predicated region
      $region69: #{bottleneck_forward.5} parent=63 // pred_check
        %p3727 = pneg %p268
      $region70: #{bottleneck_forward.5} parent=63 // pred_check_branch
        %3729 = sbr.rel (%p3727) target = $region72
      $region71: #{bottleneck_forward.5} parent=63 // pred_region
        %p3730 = scmp.lt.s32.totalorder %s22, 2
        %s3731 = scalar_select %p3730, %s22, 2
        %s3732 = smul.addr %s3731, 2
        %s3733 = scalar_lea.vmem %s9, %s3732
      $region72: #{bottleneck_forward.5} parent=63 // pred_fallthru
        _
    $region64: #{bottleneck_forward.5} parent=5 // pred_fallthru
      _
  $region6: #{bottleneck_forward.5} parent=0 // loop_footer
    %s20 = sadd.s32 1, %s16
  $region7: #{bottleneck_forward.5} parent=0 // loop_footer_branch
    %15 = sbr.rel target = $region3
  $region8: #{bottleneck_forward.5} parent=0 // loop_exit
    _

// kernel: bottleneck_forward.7
$region0: #{bottleneck_forward.7}
  #allocation0 [shape = 'u32[]', space=smem, size = 0x4, offset = 0x4, fixed_abs, tag = 'smem constant byte address 0x4 - core index']
  #allocation1 [shape = 'u32[144,128]{1,0:T(1,128)}', space=vmem, size = 0x12000, scoped, tag = 'internal scratch']
  %s0 = inlined_call_operand.vmem [shape: f32[512,128], index: 0, kind: input, shape index: {}]
  %s1 = inlined_call_operand.vmem [shape: f32[512,128], index: 1, kind: input, shape index: {}]
  %s2 = inlined_call_operand.vmem [shape: f32[1,128], index: 2, kind: input, shape index: {}]
  %s3 = inlined_call_operand.vmem [shape: f32[1,128], index: 3, kind: input, shape index: {}]
  %s4 = inlined_call_operand.hbm [shape: f32[512,128], index: 4, kind: output, shape index: {}]
  %s5 = sld [smem:[#allocation0]]
  $region49: #{bottleneck_forward.7} parent=0
    _
  %s7 = ssub.s32 1, %s5
  %s8 = scalar_select 0, %s7, %s5
  $region1: #{bottleneck_forward.7} parent=0
    #allocation2 [shape = 'u8[262144]{0}', space=vmem, size = 0x40000, scoped, tag = 'output window, operand 0']
    #allocation3 [shape = 's32[2]{0}', space=sflag, size = 0x8, scoped, tag = 'scoped memory for bottleneck_forward.7']
    %9 = vsyncpa [#allocation3], 0
    %s10 = scalar_lea.sflag [#allocation3], 1
    %11 = vsyncpa %s10, 0
    loop: start=0, step=1, limit=4
    $region2: #{bottleneck_forward.7} parent=1 // loop_pre_header
      _
    $region3: #{bottleneck_forward.7} parent=1 // loop_header
      %s13 = sphi 0, %s17
      %p14 = scmp.ge.s32.totalorder %s13, 4
      %s23 = sphi 0, %s25
      %s26 = sphi 0, %s23
      %s27 = sphi 0, %s26
      %s43 = sphi 0, %s27
      %s49 = sphi 0, %s51
      %s52 = sphi 0, %s49
      %s53 = sphi 0, %s52
      %s69 = sphi 0, %s53
      %s73 = sphi 0, %s73
      %s75 = sphi 0, %s73
      %s76 = sphi 0, %s75
      %s90 = sphi 0, %s76
      %s94 = sphi 0, %s94
      %s96 = sphi 0, %s94
      %s97 = sphi 0, %s96
      %s111 = sphi 0, %s97
      %s117 = sphi 0, %s119
      %s120 = sphi 0, %s117
      %s121 = sphi 0, %s120
      %s137 = sphi 0, %s121
    $region4: #{bottleneck_forward.7} parent=1 // loop_header_branch
      %16 = sbr.rel (%p14) target = $region8
    $region5: #{bottleneck_forward.7} parent=1 // loop_body
      %s18 = ssub.s32 %s13, 1
      %s19 = ssub.s32 %s13, 2
      %s20 = sadd.s32 %s13, 1
      %s21 = ssub.s32 %s13, %s20
      %p22 = scmp.eq.s32.totalorder %s21, 0
      %s24 = sadd.s32 %s23, 1
      %s25 = scalar_select %p22, %s23, %s24
      %p28 = pneg %p22
      %p29 = scmp.eq.s32.totalorder %s13, 1
      %p30 = por %p28, %p29
      %p31 = scmp.ne.s32.totalorder %s23, %s26
      %p32 = scmp.eq.s32.totalorder %s13, 0
      %p33 = por %p31, %p32
      %p34 = scmp.ne.s32.totalorder %s23, %s26
      %p35 = scmp.eq.s32.totalorder %s18, 1
      %p36 = por %p34, %p35
      %p37 = scmp.ne.s32.totalorder %s26, %s27
      %p38 = scmp.eq.s32.totalorder %s18, 0
      %p39 = por %p37, %p38
      %p40 = scmp.ne.s32.totalorder %s26, %s27
      %p41 = scmp.eq.s32.totalorder %s19, 1
      %p42 = por %p40, %p41
      %p44 = scmp.ne.s32.totalorder %s27, %s43
      %p45 = scmp.eq.s32.totalorder %s19, 0
      %p46 = por %p44, %p45
      %s47 = ssub.s32 %s13, %s20
      %p48 = scmp.eq.s32.totalorder %s47, 0
      %s50 = sadd.s32 %s49, 1
      %s51 = scalar_select %p48, %s49, %s50
      %p54 = pneg %p48
      %p55 = scmp.eq.s32.totalorder %s13, 1
      %p56 = por %p54, %p55
      %p57 = scmp.ne.s32.totalorder %s49, %s52
      %p58 = scmp.eq.s32.totalorder %s13, 0
      %p59 = por %p57, %p58
      %p60 = scmp.ne.s32.totalorder %s49, %s52
      %p61 = scmp.eq.s32.totalorder %s18, 1
      %p62 = por %p60, %p61
      %p63 = scmp.ne.s32.totalorder %s52, %s53
      %p64 = scmp.eq.s32.totalorder %s18, 0
      %p65 = por %p63, %p64
      %p66 = scmp.ne.s32.totalorder %s52, %s53
      %p67 = scmp.eq.s32.totalorder %s19, 1
      %p68 = por %p66, %p67
      %p70 = scmp.ne.s32.totalorder %s53, %s69
      %p71 = scmp.eq.s32.totalorder %s19, 0
      %p72 = por %p70, %p71
      %s74 = sadd.s32 %s73, 1
      %p77 = scmp.eq.s32.totalorder %s13, 1
      %p78 = scmp.ne.s32.totalorder %s73, %s75
      %p79 = scmp.eq.s32.totalorder %s13, 0
      %p80 = por %p78, %p79
      %p81 = scmp.ne.s32.totalorder %s73, %s75
      %p82 = scmp.eq.s32.totalorder %s18, 1
      %p83 = por %p81, %p82
      %p84 = scmp.ne.s32.totalorder %s75, %s76
      %p85 = scmp.eq.s32.totalorder %s18, 0
      %p86 = por %p84, %p85
      %p87 = scmp.ne.s32.totalorder %s75, %s76
      %p88 = scmp.eq.s32.totalorder %s19, 1
      %p89 = por %p87, %p88
      %p91 = scmp.ne.s32.totalorder %s76, %s90
      %p92 = scmp.eq.s32.totalorder %s19, 0
      %p93 = por %p91, %p92
      %s95 = sadd.s32 %s94, 1
      %p98 = scmp.eq.s32.totalorder %s13, 1
      %p99 = scmp.ne.s32.totalorder %s94, %s96
      %p100 = scmp.eq.s32.totalorder %s13, 0
      %p101 = por %p99, %p100
      %p102 = scmp.ne.s32.totalorder %s94, %s96
      %p103 = scmp.eq.s32.totalorder %s18, 1
      %p104 = por %p102, %p103
      %p105 = scmp.ne.s32.totalorder %s96, %s97
      %p106 = scmp.eq.s32.totalorder %s18, 0
      %p107 = por %p105, %p106
      %p108 = scmp.ne.s32.totalorder %s96, %s97
      %p109 = scmp.eq.s32.totalorder %s19, 1
      %p110 = por %p108, %p109
      %p112 = scmp.ne.s32.totalorder %s97, %s111
      %p113 = scmp.eq.s32.totalorder %s19, 0
      %p114 = por %p112, %p113
      %s115 = ssub.s32 %s13, %s20
      %p116 = scmp.eq.s32.totalorder %s115, 0
      %s118 = sadd.s32 %s117, 1
      %s119 = scalar_select %p116, %s117, %s118
      %p122 = pneg %p116
      %p123 = scmp.eq.s32.totalorder %s13, 1
      %p124 = por %p122, %p123
      %p125 = scmp.ne.s32.totalorder %s117, %s120
      %p126 = scmp.eq.s32.totalorder %s13, 0
      %p127 = por %p125, %p126
      %p128 = scmp.ne.s32.totalorder %s117, %s120
      %p129 = scmp.eq.s32.totalorder %s18, 1
      %p130 = por %p128, %p129
      %p131 = scmp.ne.s32.totalorder %s120, %s121
      %p132 = scmp.eq.s32.totalorder %s18, 0
      %p133 = por %p131, %p132
      %p134 = scmp.ne.s32.totalorder %s120, %s121
      %p135 = scmp.eq.s32.totalorder %s19, 1
      %p136 = por %p134, %p135
      %p138 = scmp.ne.s32.totalorder %s121, %s137
      %p139 = scmp.eq.s32.totalorder %s19, 0
      %p140 = por %p138, %p139
      %p141 = scmp.le.s32.totalorder 1, %s13
      %p142 = scmp.lt.s32.totalorder %s13, 3
      %p143 = pnand %p141, %p142
      %p144 = pneg %p143
      // Predicated region
      $region9: #{bottleneck_forward.7} parent=5 // pred_check
        _
      $region10: #{bottleneck_forward.7} parent=5 // pred_check_branch
        %146 = sbr.rel (%p143) target = $region12
      $region11: #{bottleneck_forward.7} parent=5 // pred_region
        %s147 = ssub.s32 %s13, 1
        // Predicated region
        $region13: #{bottleneck_forward.7} parent=11 // pred_check
          %p148 = pneg %p86
        $region14: #{bottleneck_forward.7} parent=11 // pred_check_branch
          %150 = sbr.rel (%p148) target = $region16
        $region15: #{bottleneck_forward.7} parent=11 // pred_region
          _
        $region16: #{bottleneck_forward.7} parent=11 // pred_fallthru
          _
        // Predicated region
        $region17: #{bottleneck_forward.7} parent=11 // pred_check
          %p151 = pneg %p107
        $region18: #{bottleneck_forward.7} parent=11 // pred_check_branch
          %153 = sbr.rel (%p151) target = $region20
        $region19: #{bottleneck_forward.7} parent=11 // pred_region
          _
        $region20: #{bottleneck_forward.7} parent=11 // pred_fallthru
          _
      $region12: #{bottleneck_forward.7} parent=5 // pred_fallthru
        _
      %p154 = scmp.lt.s32.totalorder %s13, 2
      // Predicated region
      $region21: #{bottleneck_forward.7} parent=5 // pred_check
        %p155 = pneg %p154
      $region22: #{bottleneck_forward.7} parent=5 // pred_check_branch
        %157 = sbr.rel (%p155) target = $region24
      $region23: #{bottleneck_forward.7} parent=5 // pred_region
        // Predicated region
        $region25: #{bottleneck_forward.7} parent=23 // pred_check
          %p158 = pneg %p33
        $region26: #{bottleneck_forward.7} parent=23 // pred_check_branch
          %160 = sbr.rel (%p158) target = $region28
        $region27: #{bottleneck_forward.7} parent=23 // pred_region
          %s161 = smul.u32 32, %s13
          %p162 = scmp.lt.s32.totalorder %s161, 63
          %s163 = scalar_select %p162, %s161, 63
          %s164 = smul.addr %s163, 8
          %s165 = scalar_lea.vmem %s0, %s164
          %s166 = smul.u32 32, %s13
        $region28: #{bottleneck_forward.7} parent=23 // pred_fallthru
          _
        // Predicated region
        $region29: #{bottleneck_forward.7} parent=23 // pred_check
          %p167 = pneg %p59
        $region30: #{bottleneck_forward.7} parent=23 // pred_check_branch
          %169 = sbr.rel (%p167) target = $region32
        $region31: #{bottleneck_forward.7} parent=23 // pred_region
          %s170 = smul.u32 32, %s13
          %p171 = scmp.lt.s32.totalorder %s170, 63
          %s172 = scalar_select %p171, %s170, 63
          %s173 = smul.addr %s172, 8
          %s174 = scalar_lea.vmem %s1, %s173
          %s175 = smul.u32 32, %s13
        $region32: #{bottleneck_forward.7} parent=23 // pred_fallthru
          _
      $region24: #{bottleneck_forward.7} parent=5 // pred_fallthru
        _
      %p176 = scmp.le.s32.totalorder 1, %s13
      %p177 = scmp.lt.s32.totalorder %s13, 3
      %p178 = pnand %p176, %p177
      %p179 = pneg %p178
      // Predicated region
      $region33: #{bottleneck_forward.7} parent=5 // pred_check
        _
      $region34: #{bottleneck_forward.7} parent=5 // pred_check_branch
        %181 = sbr.rel (%p178) target = $region36
      $region35: #{bottleneck_forward.7} parent=5 // pred_region
        %s182 = ssub.s32 %s13, 1
        %s183 = smul.u32 32, %s18
        %p184 = scmp.lt.s32.totalorder %s183, 63
        %s185 = scalar_select %p184, %s183, 63
        %s186 = smul.addr %s185, 8
        %s187 = scalar_lea.vmem %s0, %s186
        %p188 = pneg %p39
        %p189 = pneg %p36
        %s190 = smul.u32 32, %s18
        %p191 = scmp.lt.s32.totalorder %s190, 63
        %s192 = scalar_select %p191, %s190, 63
        %s193 = smul.addr %s192, 8
        %s194 = scalar_lea.vmem %s1, %s193
        %p195 = pneg %p65
        %p196 = pneg %p62
        %p197 = pneg %p86
        %p198 = pneg %p83
        %p199 = pneg %p107
        %p200 = pneg %p104
        %p201 = pneg %p133
        %p202 = pneg %p130
        %s203 = sand.u32 %s120, 1
        %s204 = scalar_lea.sflag [#allocation3], %s203
        %s205 = sand.u32 %s120, 1
        %s206 = smul.addr %s205, 256
        %s207 = scalar_lea.vmem [#allocation2], %s206
        %s208 = smul.u32 32, %s18
        %p209 = scmp.lt.s32.totalorder %s208, 63
        %s210 = scalar_select %p209, %s208, 63
        %s211 = smul.addr %s210, 8
        %s212 = scalar_lea.vmem %s0, %s211
        %s213 = smul.u32 32, %s18
        %s214 = smul.u32 32, %s18
        %p215 = scmp.lt.s32.totalorder %s214, 63
        %s216 = scalar_select %p215, %s214, 63
        %s217 = smul.addr %s216, 8
        %s218 = scalar_lea.vmem %s1, %s217
        %s219 = smul.u32 32, %s18
        %s220 = smul.u32 32, %s18
        %v221 = vld [vmem:[%s212] sm:$0xff]
        %v222 = vld [vmem:[%s212 + $0x8] sm:$0xff]
        %v223 = vld [vmem:[%s212 + $0x10] sm:$0xff]
        %v224 = vld [vmem:[%s212 + $0x18] sm:$0xff]
        %v225 = vld [vmem:[%s212 + $0x20] sm:$0xff]
        %v226 = vld [vmem:[%s212 + $0x28] sm:$0xff]
        %v227 = vld [vmem:[%s212 + $0x30] sm:$0xff]
        %v228 = vld [vmem:[%s212 + $0x38] sm:$0xff]
        %v229 = vld [vmem:[%s212 + $0x40] sm:$0xff]
        %v230 = vld [vmem:[%s212 + $0x48] sm:$0xff]
        %v231 = vld [vmem:[%s212 + $0x50] sm:$0xff]
        %v232 = vld [vmem:[%s212 + $0x58] sm:$0xff]
        %v233 = vld [vmem:[%s212 + $0x60] sm:$0xff]
        %v234 = vld [vmem:[%s212 + $0x68] sm:$0xff]
        %v235 = vld [vmem:[%s212 + $0x70] sm:$0xff]
        %v236 = vld [vmem:[%s212 + $0x78] sm:$0xff]
        %v237 = vld [vmem:[%s212 + $0x80] sm:$0xff]
        %v238 = vld [vmem:[%s212 + $0x88] sm:$0xff]
        %v239 = vld [vmem:[%s212 + $0x90] sm:$0xff]
        %v240 = vld [vmem:[%s212 + $0x98] sm:$0xff]
        %v241 = vld [vmem:[%s212 + $0xa0] sm:$0xff]
        %v242 = vld [vmem:[%s212 + $0xa8] sm:$0xff]
        %v243 = vld [vmem:[%s212 + $0xb0] sm:$0xff]
        %v244 = vld [vmem:[%s212 + $0xb8] sm:$0xff]
        %v245 = vld [vmem:[%s212 + $0xc0] sm:$0xff]
        %v246 = vld [vmem:[%s212 + $0xc8] sm:$0xff]
        %v247 = vld [vmem:[%s212 + $0xd0] sm:$0xff]
        %v248 = vld [vmem:[%s212 + $0xd8] sm:$0xff]
        %v249 = vld [vmem:[%s212 + $0xe0] sm:$0xff]
        %v250 = vld [vmem:[%s212 + $0xe8] sm:$0xff]
        %v251 = vld [vmem:[%s212 + $0xf0] sm:$0xff]
        %v252 = vld [vmem:[%s212 + $0xf8] sm:$0xff]
        %v253 = vld [vmem:[%s2] sm:$0x1]
        %v255 = vlaneseq
        %v256 = vshrl.u32 %v255, 7
        %v257 = vsub.s32 0, %v256
        %v258 = vrot.slane %v253, %v257
        %v260 = vmul.f32 %v221, %v258
        %v261 = vmul.f32 %v222, %v258
        %v262 = vmul.f32 %v223, %v258
        %v263 = vmul.f32 %v224, %v258
        %v264 = vmul.f32 %v225, %v258
        %v265 = vmul.f32 %v226, %v258
        %v266 = vmul.f32 %v227, %v258
        %v267 = vmul.f32 %v228, %v258
        %v268 = vmul.f32 %v229, %v258
        %v269 = vmul.f32 %v230, %v258
        %v270 = vmul.f32 %v231, %v258
        %v271 = vmul.f32 %v232, %v258
        %v272 = vmul.f32 %v233, %v258
        %v273 = vmul.f32 %v234, %v258
        %v274 = vmul.f32 %v235, %v258
        %v275 = vmul.f32 %v236, %v258
        %v276 = vmul.f32 %v237, %v258
        %v277 = vmul.f32 %v238, %v258
        %v278 = vmul.f32 %v239, %v258
        %v279 = vmul.f32 %v240, %v258
        %v280 = vmul.f32 %v241, %v258
        %v281 = vmul.f32 %v242, %v258
        %v282 = vmul.f32 %v243, %v258
        %v283 = vmul.f32 %v244, %v258
        %v284 = vmul.f32 %v245, %v258
        %v285 = vmul.f32 %v246, %v258
        %v286 = vmul.f32 %v247, %v258
        %v287 = vmul.f32 %v248, %v258
        %v288 = vmul.f32 %v249, %v258
        %v289 = vmul.f32 %v250, %v258
        %v290 = vmul.f32 %v251, %v258
        %v291 = vmul.f32 %v252, %v258
        %v292 = vld [vmem:[%s3] sm:$0x1]
        %v294 = vlaneseq
        %v295 = vshrl.u32 %v294, 7
        %v296 = vsub.s32 0, %v295
        %v297 = vrot.slane %v292, %v296
        %v299 = vadd.f32 %v260, %v297
        %v300 = vadd.f32 %v261, %v297
        %v301 = vadd.f32 %v262, %v297
        %v302 = vadd.f32 %v263, %v297
        %v303 = vadd.f32 %v264, %v297
        %v304 = vadd.f32 %v265, %v297
        %v305 = vadd.f32 %v266, %v297
        %v306 = vadd.f32 %v267, %v297
        %v307 = vadd.f32 %v268, %v297
        %v308 = vadd.f32 %v269, %v297
        %v309 = vadd.f32 %v270, %v297
        %v310 = vadd.f32 %v271, %v297
        %v311 = vadd.f32 %v272, %v297
        %v312 = vadd.f32 %v273, %v297
        %v313 = vadd.f32 %v274, %v297
        %v314 = vadd.f32 %v275, %v297
        %v315 = vadd.f32 %v276, %v297
        %v316 = vadd.f32 %v277, %v297
        %v317 = vadd.f32 %v278, %v297
        %v318 = vadd.f32 %v279, %v297
        %v319 = vadd.f32 %v280, %v297
        %v320 = vadd.f32 %v281, %v297
        %v321 = vadd.f32 %v282, %v297
        %v322 = vadd.f32 %v283, %v297
        %v323 = vadd.f32 %v284, %v297
        %v324 = vadd.f32 %v285, %v297
        %v325 = vadd.f32 %v286, %v297
        %v326 = vadd.f32 %v287, %v297
        %v327 = vadd.f32 %v288, %v297
        %v328 = vadd.f32 %v289, %v297
        %v329 = vadd.f32 %v290, %v297
        %v330 = vadd.f32 %v291, %v297
        %v331 = vld [vmem:[%s218] sm:$0xff]
        %v332 = vld [vmem:[%s218 + $0x8] sm:$0xff]
        %v333 = vld [vmem:[%s218 + $0x10] sm:$0xff]
        %v334 = vld [vmem:[%s218 + $0x18] sm:$0xff]
        %v335 = vld [vmem:[%s218 + $0x20] sm:$0xff]
        %v336 = vld [vmem:[%s218 + $0x28] sm:$0xff]
        %v337 = vld [vmem:[%s218 + $0x30] sm:$0xff]
        %v338 = vld [vmem:[%s218 + $0x38] sm:$0xff]
        %v339 = vld [vmem:[%s218 + $0x40] sm:$0xff]
        %v340 = vld [vmem:[%s218 + $0x48] sm:$0xff]
        %v341 = vld [vmem:[%s218 + $0x50] sm:$0xff]
        %v342 = vld [vmem:[%s218 + $0x58] sm:$0xff]
        %v343 = vld [vmem:[%s218 + $0x60] sm:$0xff]
        %v344 = vld [vmem:[%s218 + $0x68] sm:$0xff]
        %v345 = vld [vmem:[%s218 + $0x70] sm:$0xff]
        %v346 = vld [vmem:[%s218 + $0x78] sm:$0xff]
        %v347 = vld [vmem:[%s218 + $0x80] sm:$0xff]
        %v348 = vld [vmem:[%s218 + $0x88] sm:$0xff]
        %v349 = vld [vmem:[%s218 + $0x90] sm:$0xff]
        %v350 = vld [vmem:[%s218 + $0x98] sm:$0xff]
        %v351 = vld [vmem:[%s218 + $0xa0] sm:$0xff]
        %v352 = vld [vmem:[%s218 + $0xa8] sm:$0xff]
        %v353 = vld [vmem:[%s218 + $0xb0] sm:$0xff]
        %v354 = vld [vmem:[%s218 + $0xb8] sm:$0xff]
        %v355 = vld [vmem:[%s218 + $0xc0] sm:$0xff]
        %v356 = vld [vmem:[%s218 + $0xc8] sm:$0xff]
        %v357 = vld [vmem:[%s218 + $0xd0] sm:$0xff]
        %v358 = vld [vmem:[%s218 + $0xd8] sm:$0xff]
        %v359 = vld [vmem:[%s218 + $0xe0] sm:$0xff]
        %v360 = vld [vmem:[%s218 + $0xe8] sm:$0xff]
        %v361 = vld [vmem:[%s218 + $0xf0] sm:$0xff]
        %v362 = vld [vmem:[%s218 + $0xf8] sm:$0xff]
        %v363 = vadd.f32 %v299, %v331
        %v364 = vadd.f32 %v300, %v332
        %v365 = vadd.f32 %v301, %v333
        %v366 = vadd.f32 %v302, %v334
        %v367 = vadd.f32 %v303, %v335
        %v368 = vadd.f32 %v304, %v336
        %v369 = vadd.f32 %v305, %v337
        %v370 = vadd.f32 %v306, %v338
        %v371 = vadd.f32 %v307, %v339
        %v372 = vadd.f32 %v308, %v340
        %v373 = vadd.f32 %v309, %v341
        %v374 = vadd.f32 %v310, %v342
        %v375 = vadd.f32 %v311, %v343
        %v376 = vadd.f32 %v312, %v344
        %v377 = vadd.f32 %v313, %v345
        %v378 = vadd.f32 %v314, %v346
        %v379 = vadd.f32 %v315, %v347
        %v380 = vadd.f32 %v316, %v348
        %v381 = vadd.f32 %v317, %v349
        %v382 = vadd.f32 %v318, %v350
        %v383 = vadd.f32 %v319, %v351
        %v384 = vadd.f32 %v320, %v352
        %v385 = vadd.f32 %v321, %v353
        %v386 = vadd.f32 %v322, %v354
        %v387 = vadd.f32 %v323, %v355
        %v388 = vadd.f32 %v324, %v356
        %v389 = vadd.f32 %v325, %v357
        %v390 = vadd.f32 %v326, %v358
        %v391 = vadd.f32 %v327, %v359
        %v392 = vadd.f32 %v328, %v360
        %v393 = vadd.f32 %v329, %v361
        %v394 = vadd.f32 %v330, %v362
        %v395 = vmax.f32 %v363, 0.0
        %v396 = vmax.f32 %v364, 0.0
        %v397 = vmax.f32 %v365, 0.0
        %v398 = vmax.f32 %v366, 0.0
        %v399 = vmax.f32 %v367, 0.0
        %v400 = vmax.f32 %v368, 0.0
        %v401 = vmax.f32 %v369, 0.0
        %v402 = vmax.f32 %v370, 0.0
        %v403 = vmax.f32 %v371, 0.0
        %v404 = vmax.f32 %v372, 0.0
        %v405 = vmax.f32 %v373, 0.0
        %v406 = vmax.f32 %v374, 0.0
        %v407 = vmax.f32 %v375, 0.0
        %v408 = vmax.f32 %v376, 0.0
        %v409 = vmax.f32 %v377, 0.0
        %v410 = vmax.f32 %v378, 0.0
        %v411 = vmax.f32 %v379, 0.0
        %v412 = vmax.f32 %v380, 0.0
        %v413 = vmax.f32 %v381, 0.0
        %v414 = vmax.f32 %v382, 0.0
        %v415 = vmax.f32 %v383, 0.0
        %v416 = vmax.f32 %v384, 0.0
        %v417 = vmax.f32 %v385, 0.0
        %v418 = vmax.f32 %v386, 0.0
        %v419 = vmax.f32 %v387, 0.0
        %v420 = vmax.f32 %v388, 0.0
        %v421 = vmax.f32 %v389, 0.0
        %v422 = vmax.f32 %v390, 0.0
        %v423 = vmax.f32 %v391, 0.0
        %v424 = vmax.f32 %v392, 0.0
        %v425 = vmax.f32 %v393, 0.0
        %v426 = vmax.f32 %v394, 0.0
        %427 = vst [vmem:[%s207] sm:$0xff] %v395
        %428 = vst [vmem:[%s207 + $0x8] sm:$0xff] %v396
        %429 = vst [vmem:[%s207 + $0x10] sm:$0xff] %v397
        %430 = vst [vmem:[%s207 + $0x18] sm:$0xff] %v398
        %431 = vst [vmem:[%s207 + $0x20] sm:$0xff] %v399
        %432 = vst [vmem:[%s207 + $0x28] sm:$0xff] %v400
        %433 = vst [vmem:[%s207 + $0x30] sm:$0xff] %v401
        %434 = vst [vmem:[%s207 + $0x38] sm:$0xff] %v402
        %435 = vst [vmem:[%s207 + $0x40] sm:$0xff] %v403
        %436 = vst [vmem:[%s207 + $0x48] sm:$0xff] %v404
        %437 = vst [vmem:[%s207 + $0x50] sm:$0xff] %v405
        %438 = vst [vmem:[%s207 + $0x58] sm:$0xff] %v406
        %439 = vst [vmem:[%s207 + $0x60] sm:$0xff] %v407
        %440 = vst [vmem:[%s207 + $0x68] sm:$0xff] %v408
        %441 = vst [vmem:[%s207 + $0x70] sm:$0xff] %v409
        %442 = vst [vmem:[%s207 + $0x78] sm:$0xff] %v410
        %443 = vst [vmem:[%s207 + $0x80] sm:$0xff] %v411
        %444 = vst [vmem:[%s207 + $0x88] sm:$0xff] %v412
        %445 = vst [vmem:[%s207 + $0x90] sm:$0xff] %v413
        %446 = vst [vmem:[%s207 + $0x98] sm:$0xff] %v414
        %447 = vst [vmem:[%s207 + $0xa0] sm:$0xff] %v415
        %448 = vst [vmem:[%s207 + $0xa8] sm:$0xff] %v416
        %449 = vst [vmem:[%s207 + $0xb0] sm:$0xff] %v417
        %450 = vst [vmem:[%s207 + $0xb8] sm:$0xff] %v418
        %451 = vst [vmem:[%s207 + $0xc0] sm:$0xff] %v419
        %452 = vst [vmem:[%s207 + $0xc8] sm:$0xff] %v420
        %453 = vst [vmem:[%s207 + $0xd0] sm:$0xff] %v421
        %454 = vst [vmem:[%s207 + $0xd8] sm:$0xff] %v422
        %455 = vst [vmem:[%s207 + $0xe0] sm:$0xff] %v423
        %456 = vst [vmem:[%s207 + $0xe8] sm:$0xff] %v424
        %457 = vst [vmem:[%s207 + $0xf0] sm:$0xff] %v425
        %458 = vst [vmem:[%s207 + $0xf8] sm:$0xff] %v426
        %s459 = sand.u32 %s120, 1
        %s460 = scalar_lea.sflag [#allocation3], %s459
        %s461 = sand.u32 %s120, 1
        %s462 = smul.addr %s461, 256
        %s463 = scalar_lea.vmem [#allocation2], %s462
        // Predicated region
        $region37: #{bottleneck_forward.7} parent=35 // pred_check
          %p464 = pneg %p130
        $region38: #{bottleneck_forward.7} parent=35 // pred_check_branch
          %466 = sbr.rel (%p464) target = $region40
        $region39: #{bottleneck_forward.7} parent=35 // pred_region
          %s467 = smul.u32 32, %s18
          %s469 = ssub.s32 4096, 4096
          %470 = vsyncadd %s460, %s469
          %s471 = smul.addr %s467, 128
          %s472 = scalar_lea.hbm %s4, %s471
          %s473 = sshll.u32 %s463, 4
          %s474 = int_to_ptr.vmem [resolvable:$true] %s473
          %479 = dma.vmem_to_hbm [thread:$0]  %s474, 4096, %s472, %s460, 128, 128, 8
        $region40: #{bottleneck_forward.7} parent=35 // pred_fallthru
          _
      $region36: #{bottleneck_forward.7} parent=5 // pred_fallthru
        _
      %p480 = scmp.le.s32.totalorder 2, %s13
      // Predicated region
      $region41: #{bottleneck_forward.7} parent=5 // pred_check
        %p481 = pneg %p480
      $region42: #{bottleneck_forward.7} parent=5 // pred_check_branch
        %483 = sbr.rel (%p481) target = $region44
      $region43: #{bottleneck_forward.7} parent=5 // pred_region
        %s484 = ssub.s32 %s13, 2
        // Predicated region
        $region45: #{bottleneck_forward.7} parent=43 // pred_check
          %p485 = pneg %p136
        $region46: #{bottleneck_forward.7} parent=43 // pred_check_branch
          %487 = sbr.rel (%p485) target = $region48
        $region47: #{bottleneck_forward.7} parent=43 // pred_region
          %s488 = sand.u32 %s121, 1
          %s489 = scalar_lea.sflag [#allocation3], %s488
          %s490 = sand.u32 %s121, 1
          %s491 = smul.addr %s490, 256
          %s492 = scalar_lea.vmem [#allocation2], %s491
          %493 = dma.done %s489, 4096
        $region48: #{bottleneck_forward.7} parent=43 // pred_fallthru
          _
      $region44: #{bottleneck_forward.7} parent=5 // pred_fallthru
        _
    $region6: #{bottleneck_forward.7} parent=1 // loop_footer
      %s17 = sadd.s32 1, %s13
    $region7: #{bottleneck_forward.7} parent=1 // loop_footer_branch
      %12 = sbr.rel target = $region3
    $region8: #{bottleneck_forward.7} parent=1 // loop_exit
      _
    %494 = vsyncpa [#allocation3], 1
    %s495 = scalar_lea.sflag [#allocation3], 1
    %496 = vsyncpa %s495, 1

</llo_original>
